<compile_context>
chip_gen: v5e
topology: v5e:2x2
jax: 0.10.0
libtpu: 0.0.40
codegen_flags: <defaults>
</compile_context>

<pallas_src>
import functools

import jax
import jax.numpy as jnp
from jax import lax
from jax.experimental import pallas as pl
from jax.experimental.pallas import tpu as pltpu

# Set to jnp.bfloat16 on v6e/v7x for ~2-4x MXU throughput (accumulation stays f32).
_MXU_DTYPE = jnp.float32


def _mm(a, b):
    """MXU GEMM with f32 accumulation; operand dtype is a one-line switch."""
    return jnp.dot(a.astype(_MXU_DTYPE), b.astype(_MXU_DTYPE),
                   preferred_element_type=jnp.float32)


# ----------------------------------------------------------------------------
# Host-side weight re-encoding (tiny; depends only on the parameters)
# ----------------------------------------------------------------------------
def _conv_row_mats(w_oihw, b, w_in):
    """Encode a KxK 'valid' conv on width/channel-packed rows as K row-tap GEMMs.

    Activations are packed as X[h, w*Cin + ci].  Then
        conv_out[y, x*Cout + co] = (sum_i X[y+i, :] @ A[i])[x*Cout + co]
    where A[i] is a banded (W_in*Cin, Wo*Cout) matrix holding the tap weights.
    """
    cout, cin, k, _ = w_oihw.shape
    wo = w_in - k + 1
    w_taps = jnp.transpose(w_oihw, (2, 3, 1, 0)).reshape(k, k * cin, cout)
    p = jnp.arange(w_in * cin)[:, None, None]          # packed input column index
    x = jnp.arange(wo)[None, :, None]                  # output x position
    r = p - cin * x                                    # row inside the (k*cin, cout) tap block
    valid = (r >= 0) & (r < k * cin)
    rc = jnp.clip(r, 0, k * cin - 1)
    co = jnp.arange(cout)[None, None, :]
    a = jnp.stack(
        [jnp.where(valid, w_taps[i][rc, co], 0.0).reshape(w_in * cin, wo * cout)
         for i in range(k)],
        axis=0)
    bias_row = jnp.tile(b, wo).reshape(1, wo * cout)
    return a.astype(jnp.float32), bias_row.astype(jnp.float32)


def _col_pool_selectors(w_conv, c):
    """Exact one-hot selectors so the column half of a 2x2/2 max-pool on packed rows
    becomes  max(X @ Q[0], X @ Q[1])  -> one pair of well-shaped GEMMs for the tile."""
    wp = w_conv // 2
    col = jnp.arange(wp * c)
    even = 2 * (col // c) * c + (col % c)
    qe = jax.nn.one_hot(even, w_conv * c, dtype=jnp.float32).T       # (w*c, wp*c)
    qo = jax.nn.one_hot(even + c, w_conv * c, dtype=jnp.float32).T
    return jnp.stack([qe, qo], axis=0)                               # (2, w*c, wp*c)


# ----------------------------------------------------------------------------
# The single fused Pallas kernel (one batch tile of `bt` samples per grid step)
# ----------------------------------------------------------------------------
def _lenet_kernel(x_ref, a1_ref, b1_ref, q1_ref, a2_ref, b2_ref, q2_ref,
                  w1_ref, bf1_ref, w2_ref, bf2_ref, w3_ref, bf3_ref,
                  out_ref, *, bt):
    # x_ref block: (32, bt, 96) -- rows on the leading dim, batch on sublanes,
    # width*channel packed on lanes.  All reshapes below only merge/split leading
    # dims against a sublane dim that is a multiple of 8, so they are layout-trivial.

    # ---- conv1 (+bias, ReLU): 5 row-tap GEMMs, M = 28*bt --------------------
    def c1_tap(i):
        return _mm(x_ref[i:i + 28].reshape(28 * bt, 96), a1_ref[i])

    t01 = c1_tap(0) + c1_tap(1)              # pairwise-independent accumulation
    t23 = c1_tap(2) + c1_tap(3)
    c1 = jnp.maximum(t01 + t23 + c1_tap(4) + b1_ref[...], 0.0)      # (28*bt, 168)

    # ---- 2x2/2 max-pool #1: rows via sublane-half max, cols via selector GEMMs
    c1 = c1.reshape(14, 2 * bt, 168)
    r1 = jnp.maximum(c1[:, :bt, :], c1[:, bt:, :]).reshape(14 * bt, 168)
    s2 = jnp.maximum(_mm(r1, q1_ref[0]), _mm(r1, q1_ref[1]))        # (14*bt, 84)
    s2 = s2.reshape(14, bt, 84)

    # ---- conv2 (+bias, ReLU): 5 row-tap GEMMs, M = 10*bt --------------------
    def c2_tap(i):
        return _mm(s2[i:i + 10].reshape(10 * bt, 84), a2_ref[i])

    u01 = c2_tap(0) + c2_tap(1)
    u23 = c2_tap(2) + c2_tap(3)
    c2 = jnp.maximum(u01 + u23 + c2_tap(4) + b2_ref[...], 0.0)      # (10*bt, 160)

    # ---- 2x2/2 max-pool #2 ---------------------------------------------------
    c2 = c2.reshape(5, 2 * bt, 160)
    r2 = jnp.maximum(c2[:, :bt, :], c2[:, bt:, :]).reshape(5 * bt, 160)
    s4 = jnp.maximum(_mm(r2, q2_ref[0]), _mm(r2, q2_ref[1]))        # (5*bt, 80)
    s4 = s4.reshape(5, bt, 80)

    # ---- fc1 (+ReLU): 5 GEMMs of (bt, 80) @ (80, 120) ------------------------
    z = _mm(s4[0], w1_ref[0])
    for y in range(1, 5):
        z = z + _mm(s4[y], w1_ref[y])
    h = jnp.maximum(z + bf1_ref[...], 0.0)                           # (bt, 120)

    # ---- fc2 (+ReLU) -> fc3 (lane-padded to 128 for a dense output store) ----
    h = jnp.maximum(_mm(h, w2_ref[...]) + bf2_ref[...], 0.0)         # (bt, 84)
    out_ref[...] = _mm(h, w3_ref[...]) + bf3_ref[...]                # (bt, 128)


def _lenet_pallas(x_packed, consts, bt):
    npad = x_packed.shape[1]
    grid = (npad // bt,)

    def const_spec(arr):
        nd = arr.ndim
        return pl.BlockSpec(arr.shape, lambda g, nd=nd: (0,) * nd)

    return pl.pallas_call(
        functools.partial(_lenet_kernel, bt=bt),
        out_shape=jax.ShapeDtypeStruct((npad, 128), jnp.float32),
        grid_spec=pltpu.PrefetchScalarGridSpec(
            num_scalar_prefetch=0,
            grid=grid,
            in_specs=[pl.BlockSpec((32, bt, 96), lambda g: (0, g, 0))]
                     + [const_spec(c) for c in consts],
            out_specs=pl.BlockSpec((bt, 128), lambda g: (g, 0)),
        ),
        compiler_params=pltpu.CompilerParams(
            dimension_semantics=("parallel",),      # batch tiles are independent
            vmem_limit_bytes=32 * 1024 * 1024,      # footprint is a few MiB; fits v7x too
        ),
    )(x_packed, *consts)


# ----------------------------------------------------------------------------
# Forward pass (external interface matches PyTorch: x is NCHW float32)
# ----------------------------------------------------------------------------
def net_forward(x_nchw, params, *, bt=32):
    n, cin, h, w = x_nchw.shape
    assert (cin, h, w) == (3, 32, 32), "Net expects 3x32x32 inputs"

    # Host-side re-encoding of weights (tiny; precomputed once in deployment).
    a1, b1 = _conv_row_mats(params["conv1_w"], params["conv1_b"], w_in=32)
    a2, b2 = _conv_row_mats(params["conv2_w"], params["conv2_b"], w_in=14)
    q1 = _col_pool_selectors(28, 6)
    q2 = _col_pool_selectors(10, 16)
    # Our packed feature index is x*16+co per pooled row y; PyTorch's view(-1, 400)
    # index is co*25 + y*5 + x.  Fold that permutation into fc1's weight rows.
    w1 = jnp.transpose(params["fc1_w"].reshape(16, 5, 5, 120),
                       (1, 2, 0, 3)).reshape(5, 80, 120)
    bf1 = params["fc1_b"].reshape(1, 120)
    w2, bf2 = params["fc2_w"], params["fc2_b"].reshape(1, 84)
    w3 = jnp.pad(params["fc3_w"], ((0, 0), (0, 118)))        # (84, 128) lane-dense
    bf3 = jnp.pad(params["fc3_b"], (0, 118)).reshape(1, 128)
    consts = (a1, b1, q1, a2, b2, q2, w1, bf1, w2, bf2, w3, bf3)

    # Batch tile: multiple of 8 so in-kernel reshapes stay layout-preserving; do not
    # over-pad tiny batches.  bt=32 -> conv GEMM M of 896 / 320, pool M 448 / 160.
    bt = max(8, min(bt, -(-n // 8) * 8))
    bt = (bt // 8) * 8
    npad = -(-n // bt) * bt

    # Pack the input as (H, N, W*C): batch on sublanes, width*channel on lanes.
    xp = jnp.transpose(x_nchw, (2, 0, 3, 1)).reshape(32, n, 96)
    if npad != n:
        xp = jnp.pad(xp, ((0, 0), (0, npad - n), (0, 0)))

    out = _lenet_pallas(xp, consts, bt)
    return out[:n, :10]


# ----------------------------------------------------------------------------
# Pure-JAX reference (standard XLA ops) used as a correctness guard in __main__
# ----------------------------------------------------------------------------
def _reference_forward(x, params):
    y = lax.conv(x, params["conv1_w"], (1, 1), "VALID") \
        + params["conv1_b"][None, :, None, None]
    y = jnp.maximum(y, 0.0)
    y = lax.reduce_window(y, -jnp.inf, lax.max, (1, 1, 2, 2), (1, 1, 2, 2), "VALID")
    y = lax.conv(y, params["conv2_w"], (1, 1), "VALID") \
        + params["conv2_b"][None, :, None, None]
    y = jnp.maximum(y, 0.0)
    y = lax.reduce_window(y, -jnp.inf, lax.max, (1, 1, 2, 2), (1, 1, 2, 2), "VALID")
    y = y.reshape(y.shape[0], -1)
    y = jnp.maximum(y @ params["fc1_w"] + params["fc1_b"], 0.0)
    y = jnp.maximum(y @ params["fc2_w"] + params["fc2_b"], 0.0)
    return y @ params["fc3_w"] + params["fc3_b"]


if __name__ == "__main__":
    key = jax.random.PRNGKey(0)
    ks = jax.random.split(key, 12)

    # PyTorch conv inputs are NCHW; LeNet geometry requires 3x32x32.
    x = jax.random.normal(ks[0], (2, 3, 32, 32), jnp.float32)

    # Deterministic synthetic parameters (shapes from the module's __init__;
    # fc weights stored as (in, out), i.e. already transposed vs nn.Linear).
    params = {
        "conv1_w": jax.random.normal(ks[1], (6, 3, 5, 5), jnp.float32) * 0.1,
        "conv1_b": jax.random.normal(ks[2], (6,), jnp.float32) * 0.1,
        "conv2_w": jax.random.normal(ks[3], (16, 6, 5, 5), jnp.float32) * 0.1,
        "conv2_b": jax.random.normal(ks[4], (16,), jnp.float32) * 0.1,
        "fc1_w": jax.random.normal(ks[5], (16 * 5 * 5, 120), jnp.float32) * 0.05,
        "fc1_b": jax.random.normal(ks[6], (120,), jnp.float32) * 0.05,
        "fc2_w": jax.random.normal(ks[7], (120, 84), jnp.float32) * 0.05,
        "fc2_b": jax.random.normal(ks[8], (84,), jnp.float32) * 0.05,
        "fc3_w": jax.random.normal(ks[9], (84, 10), jnp.float32) * 0.05,
        "fc3_b": jax.random.normal(ks[10], (10,), jnp.float32) * 0.05,
    }

    tol = 1e-4 if _MXU_DTYPE == jnp.float32 else 5e-2

    fwd = jax.jit(net_forward)
    ref_fn = jax.jit(_reference_forward)

    # Small check (batch=2, single grid step with a padded tile).
    out = jax.block_until_ready(fwd(x, params))
    assert out.shape == (2, 10) and out.dtype == jnp.float32
    ref = jax.block_until_ready(ref_fn(x, params))
    assert float(jnp.max(jnp.abs(out - ref))) < tol, "mismatch vs pure-JAX reference"

    # Larger check (batch=40 -> bt=32, 2 grid steps, exercises batch padding).
    x2 = jax.random.normal(ks[11], (40, 3, 32, 32), jnp.float32)
    out2 = jax.block_until_ready(fwd(x2, params))
    ref2 = jax.block_until_ready(ref_fn(x2, params))
    assert out2.shape == (40, 10)
    assert float(jnp.max(jnp.abs(out2 - ref2))) < tol, "mismatch on batched input"

    print("KERNEL_OK")
</pallas_src>

<mosaic_0001>
module attributes {stable_mosaic.version = 11 : i64} {
  func.func @_lenet_kernel(%arg0: i32, %arg1: memref<32x8x96xf32, #tpu.memory_space<vmem>>, %arg2: memref<5x96x168xf32, #tpu.memory_space<vmem>>, %arg3: memref<1x168xf32, #tpu.memory_space<vmem>>, %arg4: memref<2x168x84xf32, #tpu.memory_space<vmem>>, %arg5: memref<5x84x160xf32, #tpu.memory_space<vmem>>, %arg6: memref<1x160xf32, #tpu.memory_space<vmem>>, %arg7: memref<2x160x80xf32, #tpu.memory_space<vmem>>, %arg8: memref<5x80x120xf32, #tpu.memory_space<vmem>>, %arg9: memref<1x120xf32, #tpu.memory_space<vmem>>, %arg10: memref<120x84xf32, #tpu.memory_space<vmem>>, %arg11: memref<1x84xf32, #tpu.memory_space<vmem>>, %arg12: memref<84x128xf32, #tpu.memory_space<vmem>>, %arg13: memref<1x128xf32, #tpu.memory_space<vmem>>, %arg14: memref<8x128xf32, #tpu.memory_space<vmem>>) attributes {dimension_semantics = [#tpu.dimension_semantics<parallel>], iteration_bounds = array<i64: 1>, scalar_prefetch = 0 : i64, scratch_operands = 0 : i64, tpu.core_type = #tpu.core_type<tc>, window_params = [{transform_indices = @transform_0, window_bounds = array<i64: 32, 8, 96>}, {pipeline_mode = #tpu.pipeline_mode<synchronous>, transform_indices = @transform_1, window_bounds = array<i64: 5, 96, 168>}, {pipeline_mode = #tpu.pipeline_mode<synchronous>, transform_indices = @transform_2, window_bounds = array<i64: 1, 168>}, {pipeline_mode = #tpu.pipeline_mode<synchronous>, transform_indices = @transform_3, window_bounds = array<i64: 2, 168, 84>}, {pipeline_mode = #tpu.pipeline_mode<synchronous>, transform_indices = @transform_4, window_bounds = array<i64: 5, 84, 160>}, {pipeline_mode = #tpu.pipeline_mode<synchronous>, transform_indices = @transform_5, window_bounds = array<i64: 1, 160>}, {pipeline_mode = #tpu.pipeline_mode<synchronous>, transform_indices = @transform_6, window_bounds = array<i64: 2, 160, 80>}, {pipeline_mode = #tpu.pipeline_mode<synchronous>, transform_indices = @transform_7, window_bounds = array<i64: 5, 80, 120>}, {pipeline_mode = #tpu.pipeline_mode<synchronous>, transform_indices = @transform_8, window_bounds = array<i64: 1, 120>}, {pipeline_mode = #tpu.pipeline_mode<synchronous>, transform_indices = @transform_9, window_bounds = array<i64: 120, 84>}, {pipeline_mode = #tpu.pipeline_mode<synchronous>, transform_indices = @transform_10, window_bounds = array<i64: 1, 84>}, {pipeline_mode = #tpu.pipeline_mode<synchronous>, transform_indices = @transform_11, window_bounds = array<i64: 84, 128>}, {pipeline_mode = #tpu.pipeline_mode<synchronous>, transform_indices = @transform_12, window_bounds = array<i64: 1, 128>}, {transform_indices = @transform_13, window_bounds = array<i64: 8, 128>}]} {
    %c0 = arith.constant 0 : index
    %c0_0 = arith.constant 0 : index
    %c0_1 = arith.constant 0 : index
    %0 = vector.load %arg1[%c0, %c0_0, %c0_1] : memref<32x8x96xf32, #tpu.memory_space<vmem>>, vector<28x8x96xf32>
    %1 = vector.shape_cast %0 : vector<28x8x96xf32> to vector<224x96xf32>
    %c0_2 = arith.constant 0 : index
    %c0_3 = arith.constant 0 : index
    %c0_4 = arith.constant 0 : index
    %2 = vector.load %arg2[%c0_2, %c0_3, %c0_4] : memref<5x96x168xf32, #tpu.memory_space<vmem>>, vector<1x96x168xf32>
    %3 = vector.shape_cast %2 : vector<1x96x168xf32> to vector<96x168xf32>
    %cst = arith.constant dense<0.000000e+00> : vector<224x168xf32>
    %4 = tpu.matmul %1, %3, %cst {dimension_numbers = #tpu.dot_dimension_numbers<[1], [0], [0], [1], [0, 0, 1, 1], [], []>} : vector<224x96xf32>, vector<96x168xf32>, vector<224x168xf32> -> vector<224x168xf32>
    %c1 = arith.constant 1 : index
    %c0_5 = arith.constant 0 : index
    %c0_6 = arith.constant 0 : index
    %5 = vector.load %arg1[%c1, %c0_5, %c0_6] : memref<32x8x96xf32, #tpu.memory_space<vmem>>, vector<28x8x96xf32>
    %6 = vector.shape_cast %5 : vector<28x8x96xf32> to vector<224x96xf32>
    %c1_7 = arith.constant 1 : index
    %c0_8 = arith.constant 0 : index
    %c0_9 = arith.constant 0 : index
    %7 = vector.load %arg2[%c1_7, %c0_8, %c0_9] : memref<5x96x168xf32, #tpu.memory_space<vmem>>, vector<1x96x168xf32>
    %8 = vector.shape_cast %7 : vector<1x96x168xf32> to vector<96x168xf32>
    %cst_10 = arith.constant dense<0.000000e+00> : vector<224x168xf32>
    %9 = tpu.matmul %6, %8, %cst_10 {dimension_numbers = #tpu.dot_dimension_numbers<[1], [0], [0], [1], [0, 0, 1, 1], [], []>} : vector<224x96xf32>, vector<96x168xf32>, vector<224x168xf32> -> vector<224x168xf32>
    %10 = arith.addf %4, %9 : vector<224x168xf32>
    %c2 = arith.constant 2 : index
    %c0_11 = arith.constant 0 : index
    %c0_12 = arith.constant 0 : index
    %11 = vector.load %arg1[%c2, %c0_11, %c0_12] : memref<32x8x96xf32, #tpu.memory_space<vmem>>, vector<28x8x96xf32>
    %12 = vector.shape_cast %11 : vector<28x8x96xf32> to vector<224x96xf32>
    %c2_13 = arith.constant 2 : index
    %c0_14 = arith.constant 0 : index
    %c0_15 = arith.constant 0 : index
    %13 = vector.load %arg2[%c2_13, %c0_14, %c0_15] : memref<5x96x168xf32, #tpu.memory_space<vmem>>, vector<1x96x168xf32>
    %14 = vector.shape_cast %13 : vector<1x96x168xf32> to vector<96x168xf32>
    %cst_16 = arith.constant dense<0.000000e+00> : vector<224x168xf32>
    %15 = tpu.matmul %12, %14, %cst_16 {dimension_numbers = #tpu.dot_dimension_numbers<[1], [0], [0], [1], [0, 0, 1, 1], [], []>} : vector<224x96xf32>, vector<96x168xf32>, vector<224x168xf32> -> vector<224x168xf32>
    %c3 = arith.constant 3 : index
    %c0_17 = arith.constant 0 : index
    %c0_18 = arith.constant 0 : index
    %16 = vector.load %arg1[%c3, %c0_17, %c0_18] : memref<32x8x96xf32, #tpu.memory_space<vmem>>, vector<28x8x96xf32>
    %17 = vector.shape_cast %16 : vector<28x8x96xf32> to vector<224x96xf32>
    %c3_19 = arith.constant 3 : index
    %c0_20 = arith.constant 0 : index
    %c0_21 = arith.constant 0 : index
    %18 = vector.load %arg2[%c3_19, %c0_20, %c0_21] : memref<5x96x168xf32, #tpu.memory_space<vmem>>, vector<1x96x168xf32>
    %19 = vector.shape_cast %18 : vector<1x96x168xf32> to vector<96x168xf32>
    %cst_22 = arith.constant dense<0.000000e+00> : vector<224x168xf32>
    %20 = tpu.matmul %17, %19, %cst_22 {dimension_numbers = #tpu.dot_dimension_numbers<[1], [0], [0], [1], [0, 0, 1, 1], [], []>} : vector<224x96xf32>, vector<96x168xf32>, vector<224x168xf32> -> vector<224x168xf32>
    %21 = arith.addf %15, %20 : vector<224x168xf32>
    %22 = arith.addf %10, %21 : vector<224x168xf32>
    %c4 = arith.constant 4 : index
    %c0_23 = arith.constant 0 : index
    %c0_24 = arith.constant 0 : index
    %23 = vector.load %arg1[%c4, %c0_23, %c0_24] : memref<32x8x96xf32, #tpu.memory_space<vmem>>, vector<28x8x96xf32>
    %24 = vector.shape_cast %23 : vector<28x8x96xf32> to vector<224x96xf32>
    %c4_25 = arith.constant 4 : index
    %c0_26 = arith.constant 0 : index
    %c0_27 = arith.constant 0 : index
    %25 = vector.load %arg2[%c4_25, %c0_26, %c0_27] : memref<5x96x168xf32, #tpu.memory_space<vmem>>, vector<1x96x168xf32>
    %26 = vector.shape_cast %25 : vector<1x96x168xf32> to vector<96x168xf32>
    %cst_28 = arith.constant dense<0.000000e+00> : vector<224x168xf32>
    %27 = tpu.matmul %24, %26, %cst_28 {dimension_numbers = #tpu.dot_dimension_numbers<[1], [0], [0], [1], [0, 0, 1, 1], [], []>} : vector<224x96xf32>, vector<96x168xf32>, vector<224x168xf32> -> vector<224x168xf32>
    %28 = arith.addf %22, %27 : vector<224x168xf32>
    %c0_29 = arith.constant 0 : index
    %c0_30 = arith.constant 0 : index
    %29 = vector.load %arg3[%c0_29, %c0_30] : memref<1x168xf32, #tpu.memory_space<vmem>>, vector<1x168xf32>
    %30 = vector.broadcast %29 : vector<1x168xf32> to vector<224x168xf32>
    %31 = arith.addf %28, %30 : vector<224x168xf32>
    %cst_31 = arith.constant 0.000000e+00 : f32
    %32 = vector.broadcast %cst_31 : f32 to vector<224x168xf32>
    %33 = arith.maximumf %31, %32 : vector<224x168xf32>
    %34 = vector.shape_cast %33 : vector<224x168xf32> to vector<14x16x168xf32>
    %35 = vector.extract_strided_slice %34 {offsets = [0, 0, 0], sizes = [14, 8, 168], strides = [1, 1, 1]} : vector<14x16x168xf32> to vector<14x8x168xf32>
    %36 = vector.extract_strided_slice %34 {offsets = [0, 8, 0], sizes = [14, 8, 168], strides = [1, 1, 1]} : vector<14x16x168xf32> to vector<14x8x168xf32>
    %37 = arith.maximumf %35, %36 : vector<14x8x168xf32>
    %38 = vector.shape_cast %37 : vector<14x8x168xf32> to vector<112x168xf32>
    %c0_32 = arith.constant 0 : index
    %c0_33 = arith.constant 0 : index
    %c0_34 = arith.constant 0 : index
    %39 = vector.load %arg4[%c0_32, %c0_33, %c0_34] : memref<2x168x84xf32, #tpu.memory_space<vmem>>, vector<1x168x84xf32>
    %40 = vector.shape_cast %39 : vector<1x168x84xf32> to vector<168x84xf32>
    %cst_35 = arith.constant dense<0.000000e+00> : vector<112x84xf32>
    %41 = tpu.matmul %38, %40, %cst_35 {dimension_numbers = #tpu.dot_dimension_numbers<[1], [0], [0], [1], [0, 0, 1, 1], [], []>} : vector<112x168xf32>, vector<168x84xf32>, vector<112x84xf32> -> vector<112x84xf32>
    %c1_36 = arith.constant 1 : index
    %c0_37 = arith.constant 0 : index
    %c0_38 = arith.constant 0 : index
    %42 = vector.load %arg4[%c1_36, %c0_37, %c0_38] : memref<2x168x84xf32, #tpu.memory_space<vmem>>, vector<1x168x84xf32>
    %43 = vector.shape_cast %42 : vector<1x168x84xf32> to vector<168x84xf32>
    %cst_39 = arith.constant dense<0.000000e+00> : vector<112x84xf32>
    %44 = tpu.matmul %38, %43, %cst_39 {dimension_numbers = #tpu.dot_dimension_numbers<[1], [0], [0], [1], [0, 0, 1, 1], [], []>} : vector<112x168xf32>, vector<168x84xf32>, vector<112x84xf32> -> vector<112x84xf32>
    %45 = arith.maximumf %41, %44 : vector<112x84xf32>
    %46 = vector.shape_cast %45 : vector<112x84xf32> to vector<14x8x84xf32>
    %47 = vector.extract_strided_slice %46 {offsets = [0, 0, 0], sizes = [10, 8, 84], strides = [1, 1, 1]} : vector<14x8x84xf32> to vector<10x8x84xf32>
    %48 = vector.shape_cast %47 : vector<10x8x84xf32> to vector<80x84xf32>
    %c0_40 = arith.constant 0 : index
    %c0_41 = arith.constant 0 : index
    %c0_42 = arith.constant 0 : index
    %49 = vector.load %arg5[%c0_40, %c0_41, %c0_42] : memref<5x84x160xf32, #tpu.memory_space<vmem>>, vector<1x84x160xf32>
    %50 = vector.shape_cast %49 : vector<1x84x160xf32> to vector<84x160xf32>
    %cst_43 = arith.constant dense<0.000000e+00> : vector<80x160xf32>
    %51 = tpu.matmul %48, %50, %cst_43 {dimension_numbers = #tpu.dot_dimension_numbers<[1], [0], [0], [1], [0, 0, 1, 1], [], []>} : vector<80x84xf32>, vector<84x160xf32>, vector<80x160xf32> -> vector<80x160xf32>
    %52 = vector.extract_strided_slice %46 {offsets = [1, 0, 0], sizes = [10, 8, 84], strides = [1, 1, 1]} : vector<14x8x84xf32> to vector<10x8x84xf32>
    %53 = vector.shape_cast %52 : vector<10x8x84xf32> to vector<80x84xf32>
    %c1_44 = arith.constant 1 : index
    %c0_45 = arith.constant 0 : index
    %c0_46 = arith.constant 0 : index
    %54 = vector.load %arg5[%c1_44, %c0_45, %c0_46] : memref<5x84x160xf32, #tpu.memory_space<vmem>>, vector<1x84x160xf32>
    %55 = vector.shape_cast %54 : vector<1x84x160xf32> to vector<84x160xf32>
    %cst_47 = arith.constant dense<0.000000e+00> : vector<80x160xf32>
    %56 = tpu.matmul %53, %55, %cst_47 {dimension_numbers = #tpu.dot_dimension_numbers<[1], [0], [0], [1], [0, 0, 1, 1], [], []>} : vector<80x84xf32>, vector<84x160xf32>, vector<80x160xf32> -> vector<80x160xf32>
    %57 = arith.addf %51, %56 : vector<80x160xf32>
    %58 = vector.extract_strided_slice %46 {offsets = [2, 0, 0], sizes = [10, 8, 84], strides = [1, 1, 1]} : vector<14x8x84xf32> to vector<10x8x84xf32>
    %59 = vector.shape_cast %58 : vector<10x8x84xf32> to vector<80x84xf32>
    %c2_48 = arith.constant 2 : index
    %c0_49 = arith.constant 0 : index
    %c0_50 = arith.constant 0 : index
    %60 = vector.load %arg5[%c2_48, %c0_49, %c0_50] : memref<5x84x160xf32, #tpu.memory_space<vmem>>, vector<1x84x160xf32>
    %61 = vector.shape_cast %60 : vector<1x84x160xf32> to vector<84x160xf32>
    %cst_51 = arith.constant dense<0.000000e+00> : vector<80x160xf32>
    %62 = tpu.matmul %59, %61, %cst_51 {dimension_numbers = #tpu.dot_dimension_numbers<[1], [0], [0], [1], [0, 0, 1, 1], [], []>} : vector<80x84xf32>, vector<84x160xf32>, vector<80x160xf32> -> vector<80x160xf32>
    %63 = vector.extract_strided_slice %46 {offsets = [3, 0, 0], sizes = [10, 8, 84], strides = [1, 1, 1]} : vector<14x8x84xf32> to vector<10x8x84xf32>
    %64 = vector.shape_cast %63 : vector<10x8x84xf32> to vector<80x84xf32>
    %c3_52 = arith.constant 3 : index
    %c0_53 = arith.constant 0 : index
    %c0_54 = arith.constant 0 : index
    %65 = vector.load %arg5[%c3_52, %c0_53, %c0_54] : memref<5x84x160xf32, #tpu.memory_space<vmem>>, vector<1x84x160xf32>
    %66 = vector.shape_cast %65 : vector<1x84x160xf32> to vector<84x160xf32>
    %cst_55 = arith.constant dense<0.000000e+00> : vector<80x160xf32>
    %67 = tpu.matmul %64, %66, %cst_55 {dimension_numbers = #tpu.dot_dimension_numbers<[1], [0], [0], [1], [0, 0, 1, 1], [], []>} : vector<80x84xf32>, vector<84x160xf32>, vector<80x160xf32> -> vector<80x160xf32>
    %68 = arith.addf %62, %67 : vector<80x160xf32>
    %69 = arith.addf %57, %68 : vector<80x160xf32>
    %70 = vector.extract_strided_slice %46 {offsets = [4, 0, 0], sizes = [10, 8, 84], strides = [1, 1, 1]} : vector<14x8x84xf32> to vector<10x8x84xf32>
    %71 = vector.shape_cast %70 : vector<10x8x84xf32> to vector<80x84xf32>
    %c4_56 = arith.constant 4 : index
    %c0_57 = arith.constant 0 : index
    %c0_58 = arith.constant 0 : index
    %72 = vector.load %arg5[%c4_56, %c0_57, %c0_58] : memref<5x84x160xf32, #tpu.memory_space<vmem>>, vector<1x84x160xf32>
    %73 = vector.shape_cast %72 : vector<1x84x160xf32> to vector<84x160xf32>
    %cst_59 = arith.constant dense<0.000000e+00> : vector<80x160xf32>
    %74 = tpu.matmul %71, %73, %cst_59 {dimension_numbers = #tpu.dot_dimension_numbers<[1], [0], [0], [1], [0, 0, 1, 1], [], []>} : vector<80x84xf32>, vector<84x160xf32>, vector<80x160xf32> -> vector<80x160xf32>
    %75 = arith.addf %69, %74 : vector<80x160xf32>
    %c0_60 = arith.constant 0 : index
    %c0_61 = arith.constant 0 : index
    %76 = vector.load %arg6[%c0_60, %c0_61] : memref<1x160xf32, #tpu.memory_space<vmem>>, vector<1x160xf32>
    %77 = vector.broadcast %76 : vector<1x160xf32> to vector<80x160xf32>
    %78 = arith.addf %75, %77 : vector<80x160xf32>
    %cst_62 = arith.constant 0.000000e+00 : f32
    %79 = vector.broadcast %cst_62 : f32 to vector<80x160xf32>
    %80 = arith.maximumf %78, %79 : vector<80x160xf32>
    %81 = vector.shape_cast %80 : vector<80x160xf32> to vector<5x16x160xf32>
    %82 = vector.extract_strided_slice %81 {offsets = [0, 0, 0], sizes = [5, 8, 160], strides = [1, 1, 1]} : vector<5x16x160xf32> to vector<5x8x160xf32>
    %83 = vector.extract_strided_slice %81 {offsets = [0, 8, 0], sizes = [5, 8, 160], strides = [1, 1, 1]} : vector<5x16x160xf32> to vector<5x8x160xf32>
    %84 = arith.maximumf %82, %83 : vector<5x8x160xf32>
    %85 = vector.shape_cast %84 : vector<5x8x160xf32> to vector<40x160xf32>
    %c0_63 = arith.constant 0 : index
    %c0_64 = arith.constant 0 : index
    %c0_65 = arith.constant 0 : index
    %86 = vector.load %arg7[%c0_63, %c0_64, %c0_65] : memref<2x160x80xf32, #tpu.memory_space<vmem>>, vector<1x160x80xf32>
    %87 = vector.shape_cast %86 : vector<1x160x80xf32> to vector<160x80xf32>
    %cst_66 = arith.constant dense<0.000000e+00> : vector<40x80xf32>
    %88 = tpu.matmul %85, %87, %cst_66 {dimension_numbers = #tpu.dot_dimension_numbers<[1], [0], [0], [1], [0, 0, 1, 1], [], []>} : vector<40x160xf32>, vector<160x80xf32>, vector<40x80xf32> -> vector<40x80xf32>
    %c1_67 = arith.constant 1 : index
    %c0_68 = arith.constant 0 : index
    %c0_69 = arith.constant 0 : index
    %89 = vector.load %arg7[%c1_67, %c0_68, %c0_69] : memref<2x160x80xf32, #tpu.memory_space<vmem>>, vector<1x160x80xf32>
    %90 = vector.shape_cast %89 : vector<1x160x80xf32> to vector<160x80xf32>
    %cst_70 = arith.constant dense<0.000000e+00> : vector<40x80xf32>
    %91 = tpu.matmul %85, %90, %cst_70 {dimension_numbers = #tpu.dot_dimension_numbers<[1], [0], [0], [1], [0, 0, 1, 1], [], []>} : vector<40x160xf32>, vector<160x80xf32>, vector<40x80xf32> -> vector<40x80xf32>
    %92 = arith.maximumf %88, %91 : vector<40x80xf32>
    %93 = vector.shape_cast %92 : vector<40x80xf32> to vector<5x8x80xf32>
    %94 = vector.extract_strided_slice %93 {offsets = [0, 0, 0], sizes = [1, 8, 80], strides = [1, 1, 1]} : vector<5x8x80xf32> to vector<1x8x80xf32>
    %95 = vector.shape_cast %94 : vector<1x8x80xf32> to vector<8x80xf32>
    %c0_71 = arith.constant 0 : index
    %c0_72 = arith.constant 0 : index
    %c0_73 = arith.constant 0 : index
    %96 = vector.load %arg8[%c0_71, %c0_72, %c0_73] : memref<5x80x120xf32, #tpu.memory_space<vmem>>, vector<1x80x120xf32>
    %97 = vector.shape_cast %96 : vector<1x80x120xf32> to vector<80x120xf32>
    %cst_74 = arith.constant dense<0.000000e+00> : vector<8x120xf32>
    %98 = tpu.matmul %95, %97, %cst_74 {dimension_numbers = #tpu.dot_dimension_numbers<[1], [0], [0], [1], [0, 0, 1, 1], [], []>} : vector<8x80xf32>, vector<80x120xf32>, vector<8x120xf32> -> vector<8x120xf32>
    %99 = vector.extract_strided_slice %93 {offsets = [1, 0, 0], sizes = [1, 8, 80], strides = [1, 1, 1]} : vector<5x8x80xf32> to vector<1x8x80xf32>
    %100 = vector.shape_cast %99 : vector<1x8x80xf32> to vector<8x80xf32>
    %c1_75 = arith.constant 1 : index
    %c0_76 = arith.constant 0 : index
    %c0_77 = arith.constant 0 : index
    %101 = vector.load %arg8[%c1_75, %c0_76, %c0_77] : memref<5x80x120xf32, #tpu.memory_space<vmem>>, vector<1x80x120xf32>
    %102 = vector.shape_cast %101 : vector<1x80x120xf32> to vector<80x120xf32>
    %cst_78 = arith.constant dense<0.000000e+00> : vector<8x120xf32>
    %103 = tpu.matmul %100, %102, %cst_78 {dimension_numbers = #tpu.dot_dimension_numbers<[1], [0], [0], [1], [0, 0, 1, 1], [], []>} : vector<8x80xf32>, vector<80x120xf32>, vector<8x120xf32> -> vector<8x120xf32>
    %104 = arith.addf %98, %103 : vector<8x120xf32>
    %105 = vector.extract_strided_slice %93 {offsets = [2, 0, 0], sizes = [1, 8, 80], strides = [1, 1, 1]} : vector<5x8x80xf32> to vector<1x8x80xf32>
    %106 = vector.shape_cast %105 : vector<1x8x80xf32> to vector<8x80xf32>
    %c2_79 = arith.constant 2 : index
    %c0_80 = arith.constant 0 : index
    %c0_81 = arith.constant 0 : index
    %107 = vector.load %arg8[%c2_79, %c0_80, %c0_81] : memref<5x80x120xf32, #tpu.memory_space<vmem>>, vector<1x80x120xf32>
    %108 = vector.shape_cast %107 : vector<1x80x120xf32> to vector<80x120xf32>
    %cst_82 = arith.constant dense<0.000000e+00> : vector<8x120xf32>
    %109 = tpu.matmul %106, %108, %cst_82 {dimension_numbers = #tpu.dot_dimension_numbers<[1], [0], [0], [1], [0, 0, 1, 1], [], []>} : vector<8x80xf32>, vector<80x120xf32>, vector<8x120xf32> -> vector<8x120xf32>
    %110 = arith.addf %104, %109 : vector<8x120xf32>
    %111 = vector.extract_strided_slice %93 {offsets = [3, 0, 0], sizes = [1, 8, 80], strides = [1, 1, 1]} : vector<5x8x80xf32> to vector<1x8x80xf32>
    %112 = vector.shape_cast %111 : vector<1x8x80xf32> to vector<8x80xf32>
    %c3_83 = arith.constant 3 : index
    %c0_84 = arith.constant 0 : index
    %c0_85 = arith.constant 0 : index
    %113 = vector.load %arg8[%c3_83, %c0_84, %c0_85] : memref<5x80x120xf32, #tpu.memory_space<vmem>>, vector<1x80x120xf32>
    %114 = vector.shape_cast %113 : vector<1x80x120xf32> to vector<80x120xf32>
    %cst_86 = arith.constant dense<0.000000e+00> : vector<8x120xf32>
    %115 = tpu.matmul %112, %114, %cst_86 {dimension_numbers = #tpu.dot_dimension_numbers<[1], [0], [0], [1], [0, 0, 1, 1], [], []>} : vector<8x80xf32>, vector<80x120xf32>, vector<8x120xf32> -> vector<8x120xf32>
    %116 = arith.addf %110, %115 : vector<8x120xf32>
    %117 = vector.extract_strided_slice %93 {offsets = [4, 0, 0], sizes = [1, 8, 80], strides = [1, 1, 1]} : vector<5x8x80xf32> to vector<1x8x80xf32>
    %118 = vector.shape_cast %117 : vector<1x8x80xf32> to vector<8x80xf32>
    %c4_87 = arith.constant 4 : index
    %c0_88 = arith.constant 0 : index
    %c0_89 = arith.constant 0 : index
    %119 = vector.load %arg8[%c4_87, %c0_88, %c0_89] : memref<5x80x120xf32, #tpu.memory_space<vmem>>, vector<1x80x120xf32>
    %120 = vector.shape_cast %119 : vector<1x80x120xf32> to vector<80x120xf32>
    %cst_90 = arith.constant dense<0.000000e+00> : vector<8x120xf32>
    %121 = tpu.matmul %118, %120, %cst_90 {dimension_numbers = #tpu.dot_dimension_numbers<[1], [0], [0], [1], [0, 0, 1, 1], [], []>} : vector<8x80xf32>, vector<80x120xf32>, vector<8x120xf32> -> vector<8x120xf32>
    %122 = arith.addf %116, %121 : vector<8x120xf32>
    %c0_91 = arith.constant 0 : index
    %c0_92 = arith.constant 0 : index
    %123 = vector.load %arg9[%c0_91, %c0_92] : memref<1x120xf32, #tpu.memory_space<vmem>>, vector<1x120xf32>
    %124 = vector.broadcast %123 : vector<1x120xf32> to vector<8x120xf32>
    %125 = arith.addf %122, %124 : vector<8x120xf32>
    %cst_93 = arith.constant 0.000000e+00 : f32
    %126 = vector.broadcast %cst_93 : f32 to vector<8x120xf32>
    %127 = arith.maximumf %125, %126 : vector<8x120xf32>
    %c0_94 = arith.constant 0 : index
    %c0_95 = arith.constant 0 : index
    %128 = vector.load %arg10[%c0_94, %c0_95] : memref<120x84xf32, #tpu.memory_space<vmem>>, vector<120x84xf32>
    %cst_96 = arith.constant dense<0.000000e+00> : vector<8x84xf32>
    %129 = tpu.matmul %127, %128, %cst_96 {dimension_numbers = #tpu.dot_dimension_numbers<[1], [0], [0], [1], [0, 0, 1, 1], [], []>} : vector<8x120xf32>, vector<120x84xf32>, vector<8x84xf32> -> vector<8x84xf32>
    %c0_97 = arith.constant 0 : index
    %c0_98 = arith.constant 0 : index
    %130 = vector.load %arg11[%c0_97, %c0_98] : memref<1x84xf32, #tpu.memory_space<vmem>>, vector<1x84xf32>
    %131 = vector.broadcast %130 : vector<1x84xf32> to vector<8x84xf32>
    %132 = arith.addf %129, %131 : vector<8x84xf32>
    %cst_99 = arith.constant 0.000000e+00 : f32
    %133 = vector.broadcast %cst_99 : f32 to vector<8x84xf32>
    %134 = arith.maximumf %132, %133 : vector<8x84xf32>
    %c0_100 = arith.constant 0 : index
    %c0_101 = arith.constant 0 : index
    %135 = vector.load %arg12[%c0_100, %c0_101] : memref<84x128xf32, #tpu.memory_space<vmem>>, vector<84x128xf32>
    %cst_102 = arith.constant dense<0.000000e+00> : vector<8x128xf32>
    %136 = tpu.matmul %134, %135, %cst_102 {dimension_numbers = #tpu.dot_dimension_numbers<[1], [0], [0], [1], [0, 0, 1, 1], [], []>} : vector<8x84xf32>, vector<84x128xf32>, vector<8x128xf32> -> vector<8x128xf32>
    %c0_103 = arith.constant 0 : index
    %c0_104 = arith.constant 0 : index
    %137 = vector.load %arg13[%c0_103, %c0_104] : memref<1x128xf32, #tpu.memory_space<vmem>>, vector<1x128xf32>
    %138 = vector.broadcast %137 : vector<1x128xf32> to vector<8x128xf32>
    %139 = arith.addf %136, %138 : vector<8x128xf32>
    %c0_105 = arith.constant 0 : index
    %c0_106 = arith.constant 0 : index
    %140 = vector.load %arg14[%c0_105, %c0_106] : memref<8x128xf32, #tpu.memory_space<vmem>>, vector<8x128xf32>
    tpu.vector_store %arg14[%c0_105, %c0_106], %139 {strides = array<i32>} : memref<8x128xf32, #tpu.memory_space<vmem>>, vector<8x128xf32>,
    return
  }
  func.func @transform_0(%arg0: i32) -> (i32, i32, i32) {
    %c0_i32 = arith.constant 0 : i32
    %c0_i32_0 = arith.constant 0 : i32
    %c0_i32_1 = arith.constant 0 : i32
    return %c0_i32, %arg0, %c0_i32_0 : i32, i32, i32
  }
  func.func @transform_1(%arg0: i32) -> (i32, i32, i32) {
    %c0_i32 = arith.constant 0 : i32
    %c0_i32_0 = arith.constant 0 : i32
    %c0_i32_1 = arith.constant 0 : i32
    %c0_i32_2 = arith.constant 0 : i32
    return %c0_i32, %c0_i32_0, %c0_i32_1 : i32, i32, i32
  }
  func.func @transform_2(%arg0: i32) -> (i32, i32) {
    %c0_i32 = arith.constant 0 : i32
    %c0_i32_0 = arith.constant 0 : i32
    %c0_i32_1 = arith.constant 0 : i32
    return %c0_i32, %c0_i32_0 : i32, i32
  }
  func.func @transform_3(%arg0: i32) -> (i32, i32, i32) {
    %c0_i32 = arith.constant 0 : i32
    %c0_i32_0 = arith.constant 0 : i32
    %c0_i32_1 = arith.constant 0 : i32
    %c0_i32_2 = arith.constant 0 : i32
    return %c0_i32, %c0_i32_0, %c0_i32_1 : i32, i32, i32
  }
  func.func @transform_4(%arg0: i32) -> (i32, i32, i32) {
    %c0_i32 = arith.constant 0 : i32
    %c0_i32_0 = arith.constant 0 : i32
    %c0_i32_1 = arith.constant 0 : i32
    %c0_i32_2 = arith.constant 0 : i32
    return %c0_i32, %c0_i32_0, %c0_i32_1 : i32, i32, i32
  }
  func.func @transform_5(%arg0: i32) -> (i32, i32) {
    %c0_i32 = arith.constant 0 : i32
    %c0_i32_0 = arith.constant 0 : i32
    %c0_i32_1 = arith.constant 0 : i32
    return %c0_i32, %c0_i32_0 : i32, i32
  }
  func.func @transform_6(%arg0: i32) -> (i32, i32, i32) {
    %c0_i32 = arith.constant 0 : i32
    %c0_i32_0 = arith.constant 0 : i32
    %c0_i32_1 = arith.constant 0 : i32
    %c0_i32_2 = arith.constant 0 : i32
    return %c0_i32, %c0_i32_0, %c0_i32_1 : i32, i32, i32
  }
  func.func @transform_7(%arg0: i32) -> (i32, i32, i32) {
    %c0_i32 = arith.constant 0 : i32
    %c0_i32_0 = arith.constant 0 : i32
    %c0_i32_1 = arith.constant 0 : i32
    %c0_i32_2 = arith.constant 0 : i32
    return %c0_i32, %c0_i32_0, %c0_i32_1 : i32, i32, i32
  }
  func.func @transform_8(%arg0: i32) -> (i32, i32) {
    %c0_i32 = arith.constant 0 : i32
    %c0_i32_0 = arith.constant 0 : i32
    %c0_i32_1 = arith.constant 0 : i32
    return %c0_i32, %c0_i32_0 : i32, i32
  }
  func.func @transform_9(%arg0: i32) -> (i32, i32) {
    %c0_i32 = arith.constant 0 : i32
    %c0_i32_0 = arith.constant 0 : i32
    %c0_i32_1 = arith.constant 0 : i32
    return %c0_i32, %c0_i32_0 : i32, i32
  }
  func.func @transform_10(%arg0: i32) -> (i32, i32) {
    %c0_i32 = arith.constant 0 : i32
    %c0_i32_0 = arith.constant 0 : i32
    %c0_i32_1 = arith.constant 0 : i32
    return %c0_i32, %c0_i32_0 : i32, i32
  }
  func.func @transform_11(%arg0: i32) -> (i32, i32) {
    %c0_i32 = arith.constant 0 : i32
    %c0_i32_0 = arith.constant 0 : i32
    %c0_i32_1 = arith.constant 0 : i32
    return %c0_i32, %c0_i32_0 : i32, i32
  }
  func.func @transform_12(%arg0: i32) -> (i32, i32) {
    %c0_i32 = arith.constant 0 : i32
    %c0_i32_0 = arith.constant 0 : i32
    %c0_i32_1 = arith.constant 0 : i32
    return %c0_i32, %c0_i32_0 : i32, i32
  }
  func.func @transform_13(%arg0: i32) -> (i32, i32) {
    %c0_i32 = arith.constant 0 : i32
    %c0_i32_0 = arith.constant 0 : i32
    return %arg0, %c0_i32 : i32, i32
  }
}

</mosaic_0001>

<llo_original>
// kernel: squeeze.10
$region0: #{squeeze.10}
  %s0 = inlined_call_operand.vmem [shape: f32[1,5,3,6], index: 0, kind: input, shape index: {}]
  %s1 = inlined_call_operand.vmem [shape: f32[15,6], index: 1, kind: output, shape index: {}]
  $region1: #{squeeze.10} parent=0
    #allocation0 [shape = 'u8[20480]{0}', space=vmem, size = 0x5000, scoped, tag = 'scoped mem for input reshape']
    %s3 = ssub.s32 16, 1
    %s4 = scalar_lea.vmem %s0, 16
    %v5 = vld [vmem:[%s4] sm:%s3]
    %s6 = scalar_lea.vmem [#allocation0], 32
    %7 = vst [vmem:[%s6] sm:%s3] %v5
    %s8 = scalar_lea.vmem %s0, 12
    %v9 = vld [vmem:[%s8] sm:%s3]
    %s10 = scalar_lea.vmem [#allocation0], 24
    %11 = vst [vmem:[%s10] sm:%s3] %v9
    %s12 = scalar_lea.vmem %s0, 8
    %v13 = vld [vmem:[%s12] sm:%s3]
    %s14 = scalar_lea.vmem [#allocation0], 16
    %15 = vst [vmem:[%s14] sm:%s3] %v13
    %s16 = scalar_lea.vmem %s0, 4
    %v17 = vld [vmem:[%s16] sm:%s3]
    %s18 = scalar_lea.vmem [#allocation0], 8
    %19 = vst [vmem:[%s18] sm:%s3] %v17
    %v20 = vld [vmem:[%s0] sm:%s3]
    %21 = vst [vmem:[#allocation0] sm:%s3] %v20
    %v22 = vld [vmem:[#allocation0] sm:$0x7]
    %vm23 = vcmask 48128
    %24 = vst.msk [vmem:[%s1] sm:$0x7] %vm23, %v22
    %s25 = scalar_lea.vmem [#allocation0], 8
    %v26 = vld [vmem:[%s25] sm:$0x7]
    %vm27 = vcmask 48128
    %s28 = scalar_lea.vmem %s1, 3
    %29 = vst.msk [vmem:[%s28] sm:$0x7] %vm27, %v26
    %s30 = scalar_lea.vmem [#allocation0], 16
    %v31 = vld [vmem:[%s30] sm:$0x7]
    %vm32 = vcmask 48128
    %s33 = scalar_lea.vmem %s1, 6
    %34 = vst.msk [vmem:[%s33] sm:$0x7] %vm32, %v31
    %s35 = scalar_lea.vmem [#allocation0], 24
    %v36 = vld [vmem:[%s35] sm:$0x7]
    %vm37 = vcmask 48128
    %s38 = scalar_lea.vmem %s1, 9
    %39 = vst.msk [vmem:[%s38] sm:$0x7] %vm37, %v36
    %s40 = scalar_lea.vmem [#allocation0], 32
    %v41 = vld [vmem:[%s40] sm:$0x7]
    %vm42 = vcmask 48128
    %s43 = scalar_lea.vmem %s1, 12
    %44 = vst.msk [vmem:[%s43] sm:$0x7] %vm42, %v41

// kernel: tile.13
$region0: #{tile.13}
  #allocation0 [shape = 's32[1]{0}', space=sflag, size = 0x4, scoped, tag = 'scoped memory for tile.13']
  %s0 = inlined_call_operand.vmem [shape: f32[6], index: 0, kind: input, shape index: {}]
  %s1 = inlined_call_operand.vmem [shape: f32[28,6], index: 1, kind: output, shape index: {}]
  // Predicated region
  $region2: #{tile.13} parent=0 // pred_check
    _
  $region3: #{tile.13} parent=0 // pred_check_branch
    %3 = sbr.rel (0) target = $region5
  $region4: #{tile.13} parent=0 // pred_region
    _
  $region5: #{tile.13} parent=0 // pred_fallthru
    _
  %v4 = vld [vmem:[%s0] ss:$0 sm:$0xff]
  %5 = vst [vmem:[%s1] sm:$0xff] %v4
  %s6 = scalar_lea.vmem %s1, 8
  %7 = vst [vmem:[%s6] sm:$0xff] %v4
  %s8 = scalar_lea.vmem %s1, 16
  %9 = vst [vmem:[%s8] sm:$0xff] %v4
  %s10 = scalar_lea.vmem %s1, 24
  %11 = vst [vmem:[%s10] sm:$0xff] %v4

// kernel: tile.14
$region0: #{tile.14}
  %s0 = inlined_call_operand.vmem [shape: f32[28,6], index: 0, kind: input, shape index: {}]
  %s1 = inlined_call_operand.hbm [shape: f32[1,168], index: 1, kind: output, shape index: {}]
  $region1: #{tile.14} parent=0
    #allocation0 [shape = 'u8[1024]{0}', space=vmem, size = 0x400, scoped, tag = 'operand span for operand 1']
    #allocation1 [shape = 's32[1]{0}', space=sflag, size = 0x4, scoped, tag = 'scoped memory for tile.14']
    #allocation2 [shape = 'u8[8192]{0}', space=vmem, size = 0x2000, scoped, tag = 'scoped mem for output reshape']
    %2 = vsyncpa [#allocation1], 0
    %v3 = vld [vmem:[%s0] sm:$0x1]
    %vm4 = vcmask 48128
    %5 = vst.msk [vmem:[#allocation2] sm:$0x1] %vm4, %v3
    %s6 = scalar_lea.vmem %s0, 21
    %v7 = vld [vmem:[%s6] sm:$0x1]
    %s8 = scalar_lea.vmem %s0, 21
    %v9 = vld [vmem:[%s8] sm:$0x1]
    %vm10 = vcmask 15360
    %v11 = vsel %vm10, %v9, %v7
    %12 = vrot.lane.b32.xlu0 %v11, 126
    %v13 = vpop.permute.xlu0 %12
    %vm14 = vcmask 31744
    %s15 = scalar_lea.vmem [#allocation2], 8
    %16 = vst.msk [vmem:[%s15] sm:$0x1] %vm14, %v13
    %vm17 = vcmask 1048560
    %18 = vst.msk [vmem:[#allocation2] sm:$0x1] %vm17, %v13
    %s19 = scalar_lea.vmem %s0, 20
    %v20 = vld [vmem:[%s19] sm:$0x1]
    %21 = vrot.lane.b32.xlu0 %v20, 120
    %v22 = vpop.permute.xlu0 %21
    %vm23 = vcmask 1032128
    %24 = vst.msk [vmem:[#allocation2] sm:$0x1] %vm23, %v22
    %s25 = scalar_lea.vmem %s0, 19
    %v26 = vld [vmem:[%s25] sm:$0x1]
    %27 = vrot.lane.b32.xlu0 %v26, 114
    %v28 = vpop.permute.xlu0 %27
    %vm29 = vcmask 982928
    %30 = vst.msk [vmem:[#allocation2] sm:$0x1] %vm29, %v28
    %s31 = scalar_lea.vmem %s0, 18
    %v32 = vld [vmem:[%s31] sm:$0x1]
    %33 = vrot.lane.b32.xlu0 %v32, 108
    %v34 = vpop.permute.xlu0 %33
    %vm35 = vcmask 933728
    %36 = vst.msk [vmem:[#allocation2] sm:$0x1] %vm35, %v34
    %s37 = scalar_lea.vmem %s0, 17
    %v38 = vld [vmem:[%s37] sm:$0x1]
    %39 = vrot.lane.b32.xlu0 %v38, 102
    %v40 = vpop.permute.xlu0 %39
    %vm41 = vcmask 884528
    %42 = vst.msk [vmem:[#allocation2] sm:$0x1] %vm41, %v40
    %s43 = scalar_lea.vmem %s0, 16
    %v44 = vld [vmem:[%s43] sm:$0x1]
    %45 = vrot.lane.b32.xlu0 %v44, 96
    %v46 = vpop.permute.xlu0 %45
    %vm47 = vcmask 835328
    %48 = vst.msk [vmem:[#allocation2] sm:$0x1] %vm47, %v46
    %s49 = scalar_lea.vmem %s0, 15
    %v50 = vld [vmem:[%s49] sm:$0x1]
    %51 = vrot.lane.b32.xlu0 %v50, 90
    %v52 = vpop.permute.xlu0 %51
    %vm53 = vcmask 786128
    %54 = vst.msk [vmem:[#allocation2] sm:$0x1] %vm53, %v52
    %s55 = scalar_lea.vmem %s0, 14
    %v56 = vld [vmem:[%s55] sm:$0x1]
    %57 = vrot.lane.b32.xlu0 %v56, 84
    %v58 = vpop.permute.xlu0 %57
    %vm59 = vcmask 736928
    %60 = vst.msk [vmem:[#allocation2] sm:$0x1] %vm59, %v58
    %s61 = scalar_lea.vmem %s0, 13
    %v62 = vld [vmem:[%s61] sm:$0x1]
    %63 = vrot.lane.b32.xlu0 %v62, 78
    %v64 = vpop.permute.xlu0 %63
    %vm65 = vcmask 687728
    %66 = vst.msk [vmem:[#allocation2] sm:$0x1] %vm65, %v64
    %s67 = scalar_lea.vmem %s0, 12
    %v68 = vld [vmem:[%s67] sm:$0x1]
    %69 = vrot.lane.b32.xlu0 %v68, 72
    %v70 = vpop.permute.xlu0 %69
    %vm71 = vcmask 638528
    %72 = vst.msk [vmem:[#allocation2] sm:$0x1] %vm71, %v70
    %s73 = scalar_lea.vmem %s0, 11
    %v74 = vld [vmem:[%s73] sm:$0x1]
    %75 = vrot.lane.b32.xlu0 %v74, 66
    %v76 = vpop.permute.xlu0 %75
    %vm77 = vcmask 589328
    %78 = vst.msk [vmem:[#allocation2] sm:$0x1] %vm77, %v76
    %s79 = scalar_lea.vmem %s0, 10
    %v80 = vld [vmem:[%s79] sm:$0x1]
    %81 = vrot.lane.b32.xlu0 %v80, 60
    %v82 = vpop.permute.xlu0 %81
    %vm83 = vcmask 540128
    %84 = vst.msk [vmem:[#allocation2] sm:$0x1] %vm83, %v82
    %s85 = scalar_lea.vmem %s0, 9
    %v86 = vld [vmem:[%s85] sm:$0x1]
    %87 = vrot.lane.b32.xlu0 %v86, 54
    %v88 = vpop.permute.xlu0 %87
    %vm89 = vcmask 490928
    %90 = vst.msk [vmem:[#allocation2] sm:$0x1] %vm89, %v88
    %s91 = scalar_lea.vmem %s0, 8
    %v92 = vld [vmem:[%s91] sm:$0x1]
    %93 = vrot.lane.b32.xlu0 %v92, 48
    %v94 = vpop.permute.xlu0 %93
    %vm95 = vcmask 441728
    %96 = vst.msk [vmem:[#allocation2] sm:$0x1] %vm95, %v94
    %s97 = scalar_lea.vmem %s0, 7
    %v98 = vld [vmem:[%s97] sm:$0x1]
    %99 = vrot.lane.b32.xlu0 %v98, 42
    %v100 = vpop.permute.xlu0 %99
    %vm101 = vcmask 392528
    %102 = vst.msk [vmem:[#allocation2] sm:$0x1] %vm101, %v100
    %s103 = scalar_lea.vmem %s0, 6
    %v104 = vld [vmem:[%s103] sm:$0x1]
    %105 = vrot.lane.b32.xlu0 %v104, 36
    %v106 = vpop.permute.xlu0 %105
    %vm107 = vcmask 343328
    %108 = vst.msk [vmem:[#allocation2] sm:$0x1] %vm107, %v106
    %s109 = scalar_lea.vmem %s0, 27
    %v110 = vld [vmem:[%s109] sm:$0x1]
    %111 = vrot.lane.b32.xlu0 %v110, 34
    %v112 = vpop.permute.xlu0 %111
    %vm113 = vcmask 326928
    %s114 = scalar_lea.vmem [#allocation2], 8
    %115 = vst.msk [vmem:[%s114] sm:$0x1] %vm113, %v112
    %s116 = scalar_lea.vmem %s0, 5
    %v117 = vld [vmem:[%s116] sm:$0x1]
    %118 = vrot.lane.b32.xlu0 %v117, 30
    %v119 = vpop.permute.xlu0 %118
    %vm120 = vcmask 294128
    %121 = vst.msk [vmem:[#allocation2] sm:$0x1] %vm120, %v119
    %s122 = scalar_lea.vmem %s0, 26
    %v123 = vld [vmem:[%s122] sm:$0x1]
    %124 = vrot.lane.b32.xlu0 %v123, 28
    %v125 = vpop.permute.xlu0 %124
    %vm126 = vcmask 277728
    %s127 = scalar_lea.vmem [#allocation2], 8
    %128 = vst.msk [vmem:[%s127] sm:$0x1] %vm126, %v125
    %s129 = scalar_lea.vmem %s0, 4
    %v130 = vld [vmem:[%s129] sm:$0x1]
    %131 = vrot.lane.b32.xlu0 %v130, 24
    %v132 = vpop.permute.xlu0 %131
    %vm133 = vcmask 244928
    %134 = vst.msk [vmem:[#allocation2] sm:$0x1] %vm133, %v132
    %s135 = scalar_lea.vmem %s0, 25
    %v136 = vld [vmem:[%s135] sm:$0x1]
    %137 = vrot.lane.b32.xlu0 %v136, 22
    %v138 = vpop.permute.xlu0 %137
    %vm139 = vcmask 228528
    %s140 = scalar_lea.vmem [#allocation2], 8
    %141 = vst.msk [vmem:[%s140] sm:$0x1] %vm139, %v138
    %s142 = scalar_lea.vmem %s0, 3
    %v143 = vld [vmem:[%s142] sm:$0x1]
    %144 = vrot.lane.b32.xlu0 %v143, 18
    %v145 = vpop.permute.xlu0 %144
    %vm146 = vcmask 195728
    %147 = vst.msk [vmem:[#allocation2] sm:$0x1] %vm146, %v145
    %s148 = scalar_lea.vmem %s0, 24
    %v149 = vld [vmem:[%s148] sm:$0x1]
    %150 = vrot.lane.b32.xlu0 %v149, 16
    %v151 = vpop.permute.xlu0 %150
    %vm152 = vcmask 179328
    %s153 = scalar_lea.vmem [#allocation2], 8
    %154 = vst.msk [vmem:[%s153] sm:$0x1] %vm152, %v151
    %s155 = scalar_lea.vmem %s0, 2
    %v156 = vld [vmem:[%s155] sm:$0x1]
    %157 = vrot.lane.b32.xlu0 %v156, 12
    %v158 = vpop.permute.xlu0 %157
    %vm159 = vcmask 146528
    %160 = vst.msk [vmem:[#allocation2] sm:$0x1] %vm159, %v158
    %s161 = scalar_lea.vmem %s0, 23
    %v162 = vld [vmem:[%s161] sm:$0x1]
    %163 = vrot.lane.b32.xlu0 %v162, 10
    %v164 = vpop.permute.xlu0 %163
    %vm165 = vcmask 130128
    %s166 = scalar_lea.vmem [#allocation2], 8
    %167 = vst.msk [vmem:[%s166] sm:$0x1] %vm165, %v164
    %s168 = scalar_lea.vmem %s0, 1
    %v169 = vld [vmem:[%s168] sm:$0x1]
    %170 = vrot.lane.b32.xlu0 %v169, 6
    %v171 = vpop.permute.xlu0 %170
    %vm172 = vcmask 97328
    %173 = vst.msk [vmem:[#allocation2] sm:$0x1] %vm172, %v171
    %s174 = scalar_lea.vmem %s0, 22
    %v175 = vld [vmem:[%s174] sm:$0x1]
    %176 = vrot.lane.b32.xlu0 %v175, 4
    %v177 = vpop.permute.xlu0 %176
    %vm178 = vcmask 80928
    %s179 = scalar_lea.vmem [#allocation2], 8
    %180 = vst.msk [vmem:[%s179] sm:$0x1] %vm178, %v177
    %s182 = ssub.s32 2, 1
    %v183 = vld [vmem:[#allocation2] sm:%s182]
    %s185 = ssub.s32 2, 1
    %186 = vst [vmem:[#allocation0] sm:%s185] %v183
    %s187 = scalar_lea.vmem [#allocation2], 8
    %v188 = vld [vmem:[%s187] sm:%s182]
    %s190 = ssub.s32 2, 1
    %s191 = scalar_lea.vmem [#allocation0], 1
    %192 = vst [vmem:[%s191] sm:%s190] %v188
    %194 = vsyncadd [#allocation1], 0
    %s196 = sshll.u32 [#allocation0], 4
    %s197 = int_to_ptr.vmem [resolvable:$true] %s196
    %s198 = sshll.u32 %s1, 4
    %s199 = int_to_ptr.hbm [resolvable:$true] %s198
    %201 = dma.vmem_to_hbm [thread:$0]  %s197, 32, %s199, [#allocation1]
    %203 = dma.done [#allocation1], 32
    %204 = vsyncpa [#allocation1], 1

// kernel: squeeze.15
$region0: #{squeeze.15}
  %s0 = inlined_call_operand.vmem [shape: f32[1,5,6,16], index: 0, kind: input, shape index: {}]
  %s1 = inlined_call_operand.vmem [shape: f32[30,16], index: 1, kind: output, shape index: {}]
  %v2 = vld [vmem:[%s0] sm:$0x3f]
  %vm3 = vcmask 130048
  %4 = vst.msk [vmem:[%s1] sm:$0x3f] %vm3, %v2
  %s5 = scalar_lea.vmem %s0, 8
  %v6 = vld [vmem:[%s5] sm:$0x3f]
  %vm7 = vcmask 130048
  %s8 = scalar_lea.vmem %s1, 6
  %9 = vst.msk [vmem:[%s8] sm:$0x3f] %vm7, %v6
  %s10 = scalar_lea.vmem %s0, 16
  %v11 = vld [vmem:[%s10] sm:$0x3f]
  %vm12 = vcmask 130048
  %s13 = scalar_lea.vmem %s1, 12
  %14 = vst.msk [vmem:[%s13] sm:$0x3f] %vm12, %v11
  %s15 = scalar_lea.vmem %s0, 24
  %v16 = vld [vmem:[%s15] sm:$0x3f]
  %vm17 = vcmask 130048
  %s18 = scalar_lea.vmem %s1, 18
  %19 = vst.msk [vmem:[%s18] sm:$0x3f] %vm17, %v16
  %s20 = scalar_lea.vmem %s0, 32
  %v21 = vld [vmem:[%s20] sm:$0x3f]
  %vm22 = vcmask 130048
  %s23 = scalar_lea.vmem %s1, 24
  %24 = vst.msk [vmem:[%s23] sm:$0x3f] %vm22, %v21

// kernel: tile.18
$region0: #{tile.18}
  #allocation0 [shape = 's32[1]{0}', space=sflag, size = 0x4, scoped, tag = 'scoped memory for tile.18']
  %s0 = inlined_call_operand.vmem [shape: f32[16], index: 0, kind: input, shape index: {}]
  %s1 = inlined_call_operand.vmem [shape: f32[10,16], index: 1, kind: output, shape index: {}]
  // Predicated region
  $region2: #{tile.18} parent=0 // pred_check
    _
  $region3: #{tile.18} parent=0 // pred_check_branch
    %3 = sbr.rel (0) target = $region5
  $region4: #{tile.18} parent=0 // pred_region
    _
  $region5: #{tile.18} parent=0 // pred_fallthru
    _
  %v4 = vld [vmem:[%s0] ss:$0 sm:$0xff]
  %5 = vst [vmem:[%s1] sm:$0xff] %v4
  %s6 = scalar_lea.vmem %s1, 8
  %7 = vst [vmem:[%s6] sm:$0xff] %v4

// kernel: tile.19
$region0: #{tile.19}
  %s0 = inlined_call_operand.vmem [shape: f32[10,16], index: 0, kind: input, shape index: {}]
  %s1 = inlined_call_operand.vmem [shape: f32[1,160], index: 1, kind: output, shape index: {}]
  $region1: #{tile.19} parent=0
    #allocation0 [shape = 'u8[8192]{0}', space=vmem, size = 0x2000, scoped, tag = 'scoped mem for output reshape']
    %s2 = smov 3
    %v3 = vld [vmem:[%s0] ss:$8 sm:%s2]
    %vm4 = vcmask 130048
    %5 = vst.msk [vmem:[#allocation0] ss:$8 sm:$0x3] %vm4, %v3
    %s6 = scalar_lea.vmem %s0, 7
    %v7 = vld [vmem:[%s6] sm:$0x1]
    %8 = vrot.lane.b32.xlu0 %v7, 112
    %v9 = vpop.permute.xlu0 %8
    %vm10 = vcmask 1048448
    %11 = vst.msk [vmem:[#allocation0] sm:$0x1] %vm10, %v9
    %s12 = scalar_lea.vmem %s0, 6
    %v13 = vld [vmem:[%s12] sm:$0x1]
    %14 = vrot.lane.b32.xlu0 %v13, 96
    %v15 = vpop.permute.xlu0 %14
    %vm16 = vcmask 917248
    %17 = vst.msk [vmem:[#allocation0] sm:$0x1] %vm16, %v15
    %s18 = scalar_lea.vmem %s0, 5
    %v19 = vld [vmem:[%s18] sm:$0x1]
    %20 = vrot.lane.b32.xlu0 %v19, 80
    %v21 = vpop.permute.xlu0 %20
    %vm22 = vcmask 786048
    %23 = vst.msk [vmem:[#allocation0] sm:$0x1] %vm22, %v21
    %s24 = scalar_lea.vmem %s0, 4
    %v25 = vld [vmem:[%s24] sm:$0x1]
    %26 = vrot.lane.b32.xlu0 %v25, 64
    %v27 = vpop.permute.xlu0 %26
    %vm28 = vcmask 654848
    %29 = vst.msk [vmem:[#allocation0] sm:$0x1] %vm28, %v27
    %s30 = scalar_lea.vmem %s0, 3
    %v31 = vld [vmem:[%s30] sm:$0x1]
    %32 = vrot.lane.b32.xlu0 %v31, 48
    %v33 = vpop.permute.xlu0 %32
    %vm34 = vcmask 523648
    %35 = vst.msk [vmem:[#allocation0] sm:$0x1] %vm34, %v33
    %s36 = scalar_lea.vmem %s0, 2
    %v37 = vld [vmem:[%s36] sm:$0x1]
    %38 = vrot.lane.b32.xlu0 %v37, 32
    %v39 = vpop.permute.xlu0 %38
    %vm40 = vcmask 392448
    %41 = vst.msk [vmem:[#allocation0] sm:$0x1] %vm40, %v39
    %s42 = scalar_lea.vmem %s0, 1
    %s43 = smov 3
    %v44 = vld [vmem:[%s42] ss:$8 sm:%s43]
    %45 = vrot.lane.b32.xlu0 %v44, 16
    %v46 = vpop.permute.xlu0 %45
    %vm47 = vcmask 261248
    %48 = vst.msk [vmem:[#allocation0] ss:$8 sm:$0x3] %vm47, %v46
    %s50 = ssub.s32 2, 1
    %v51 = vld [vmem:[#allocation0] sm:%s50]
    %s53 = ssub.s32 2, 1
    %54 = vst [vmem:[%s1] sm:%s53] %v51
    %s55 = scalar_lea.vmem [#allocation0], 8
    %v56 = vld [vmem:[%s55] sm:%s50]
    %s58 = ssub.s32 2, 1
    %s59 = scalar_lea.vmem %s1, 1
    %60 = vst [vmem:[%s59] sm:%s58] %v56

// kernel: net_forward.1
$region0: #{net_forward.1}
  #allocation0 [shape = 'u32[]', space=smem, size = 0x4, offset = 0x4, fixed_abs, tag = 'smem constant byte address 0x4 - core index']
  #allocation1 [shape = 'u32[72,128]{1,0:T(1,128)}', space=vmem, size = 0x9000, scoped, tag = 'internal scratch']
  %s0 = inlined_call_operand.vmem [shape: f32[32,8,96], index: 0, kind: input, shape index: {}]
  %s1 = inlined_call_operand.vmem [shape: f32[5,96,168], index: 1, kind: input, shape index: {}]
  %s2 = inlined_call_operand.vmem [shape: f32[1,168], index: 2, kind: input, shape index: {}]
  %s3 = inlined_call_operand.vmem [shape: f32[2,168,84], index: 3, kind: input, shape index: {}]
  %s4 = inlined_call_operand.vmem [shape: f32[5,84,160], index: 4, kind: input, shape index: {}]
  %s5 = inlined_call_operand.vmem [shape: f32[1,160], index: 5, kind: input, shape index: {}]
  %s6 = inlined_call_operand.vmem [shape: f32[2,160,80], index: 6, kind: input, shape index: {}]
  %s7 = inlined_call_operand.vmem [shape: f32[5,80,120], index: 7, kind: input, shape index: {}]
  %s8 = inlined_call_operand.vmem [shape: f32[1,120], index: 8, kind: input, shape index: {}]
  %s9 = inlined_call_operand.vmem [shape: f32[120,84], index: 9, kind: input, shape index: {}]
  %s10 = inlined_call_operand.vmem [shape: f32[1,84], index: 10, kind: input, shape index: {}]
  %s11 = inlined_call_operand.vmem [shape: f32[84,128], index: 11, kind: input, shape index: {}]
  %s12 = inlined_call_operand.vmem [shape: f32[1,128], index: 12, kind: input, shape index: {}]
  %s13 = inlined_call_operand.vmem [shape: f32[8,128], index: 13, kind: output, shape index: {}]
  %s14 = sld [smem:[#allocation0]]
  $region62: #{net_forward.1} parent=0
    _
  %s16 = ssub.s32 1, %s14
  %s17 = scalar_select 0, %s16, %s14
  // Predicated region
  $region2: #{net_forward.1} parent=0 // pred_check
    _
  $region3: #{net_forward.1} parent=0 // pred_check_branch
    %19 = sbr.rel (0) target = $region5
  $region4: #{net_forward.1} parent=0 // pred_region
    _
  $region5: #{net_forward.1} parent=0 // pred_fallthru
    _
  // Predicated region
  $region6: #{net_forward.1} parent=0 // pred_check
    _
  $region7: #{net_forward.1} parent=0 // pred_check_branch
    %21 = sbr.rel (0) target = $region9
  $region8: #{net_forward.1} parent=0 // pred_region
    _
  $region9: #{net_forward.1} parent=0 // pred_fallthru
    _
  // Predicated region
  $region10: #{net_forward.1} parent=0 // pred_check
    _
  $region11: #{net_forward.1} parent=0 // pred_check_branch
    %23 = sbr.rel (0) target = $region13
  $region12: #{net_forward.1} parent=0 // pred_region
    _
  $region13: #{net_forward.1} parent=0 // pred_fallthru
    _
  // Predicated region
  $region14: #{net_forward.1} parent=0 // pred_check
    _
  $region15: #{net_forward.1} parent=0 // pred_check_branch
    %25 = sbr.rel (0) target = $region17
  $region16: #{net_forward.1} parent=0 // pred_region
    _
  $region17: #{net_forward.1} parent=0 // pred_fallthru
    _
  // Predicated region
  $region18: #{net_forward.1} parent=0 // pred_check
    _
  $region19: #{net_forward.1} parent=0 // pred_check_branch
    %27 = sbr.rel (0) target = $region21
  $region20: #{net_forward.1} parent=0 // pred_region
    _
  $region21: #{net_forward.1} parent=0 // pred_fallthru
    _
  // Predicated region
  $region22: #{net_forward.1} parent=0 // pred_check
    _
  $region23: #{net_forward.1} parent=0 // pred_check_branch
    %29 = sbr.rel (0) target = $region25
  $region24: #{net_forward.1} parent=0 // pred_region
    _
  $region25: #{net_forward.1} parent=0 // pred_fallthru
    _
  // Predicated region
  $region26: #{net_forward.1} parent=0 // pred_check
    _
  $region27: #{net_forward.1} parent=0 // pred_check_branch
    %31 = sbr.rel (0) target = $region29
  $region28: #{net_forward.1} parent=0 // pred_region
    _
  $region29: #{net_forward.1} parent=0 // pred_fallthru
    _
  // Predicated region
  $region30: #{net_forward.1} parent=0 // pred_check
    _
  $region31: #{net_forward.1} parent=0 // pred_check_branch
    %33 = sbr.rel (0) target = $region33
  $region32: #{net_forward.1} parent=0 // pred_region
    _
  $region33: #{net_forward.1} parent=0 // pred_fallthru
    _
  // Predicated region
  $region34: #{net_forward.1} parent=0 // pred_check
    _
  $region35: #{net_forward.1} parent=0 // pred_check_branch
    %35 = sbr.rel (0) target = $region37
  $region36: #{net_forward.1} parent=0 // pred_region
    _
  $region37: #{net_forward.1} parent=0 // pred_fallthru
    _
  // Predicated region
  $region38: #{net_forward.1} parent=0 // pred_check
    _
  $region39: #{net_forward.1} parent=0 // pred_check_branch
    %37 = sbr.rel (0) target = $region41
  $region40: #{net_forward.1} parent=0 // pred_region
    _
  $region41: #{net_forward.1} parent=0 // pred_fallthru
    _
  // Predicated region
  $region42: #{net_forward.1} parent=0 // pred_check
    _
  $region43: #{net_forward.1} parent=0 // pred_check_branch
    %39 = sbr.rel (0) target = $region45
  $region44: #{net_forward.1} parent=0 // pred_region
    _
  $region45: #{net_forward.1} parent=0 // pred_fallthru
    _
  // Predicated region
  $region46: #{net_forward.1} parent=0 // pred_check
    _
  $region47: #{net_forward.1} parent=0 // pred_check_branch
    %41 = sbr.rel (0) target = $region49
  $region48: #{net_forward.1} parent=0 // pred_region
    _
  $region49: #{net_forward.1} parent=0 // pred_fallthru
    _
  // Predicated region
  $region50: #{net_forward.1} parent=0 // pred_check
    _
  $region51: #{net_forward.1} parent=0 // pred_check_branch
    %43 = sbr.rel (0) target = $region53
  $region52: #{net_forward.1} parent=0 // pred_region
    _
  $region53: #{net_forward.1} parent=0 // pred_fallthru
    _
  %v44 = vld [vmem:[%s0] sm:$0xff]
  %v45 = vld [vmem:[%s0 + $0x8] sm:$0xff]
  %v46 = vld [vmem:[%s0 + $0x10] sm:$0xff]
  %v47 = vld [vmem:[%s0 + $0x18] sm:$0xff]
  %v48 = vld [vmem:[%s0 + $0x20] sm:$0xff]
  %v49 = vld [vmem:[%s0 + $0x28] sm:$0xff]
  %v50 = vld [vmem:[%s0 + $0x30] sm:$0xff]
  %v51 = vld [vmem:[%s0 + $0x38] sm:$0xff]
  %v52 = vld [vmem:[%s0 + $0x40] sm:$0xff]
  %v53 = vld [vmem:[%s0 + $0x48] sm:$0xff]
  %v54 = vld [vmem:[%s0 + $0x50] sm:$0xff]
  %v55 = vld [vmem:[%s0 + $0x58] sm:$0xff]
  %v56 = vld [vmem:[%s0 + $0x60] sm:$0xff]
  %v57 = vld [vmem:[%s0 + $0x68] sm:$0xff]
  %v58 = vld [vmem:[%s0 + $0x70] sm:$0xff]
  %v59 = vld [vmem:[%s0 + $0x78] sm:$0xff]
  %v60 = vld [vmem:[%s0 + $0x80] sm:$0xff]
  %v61 = vld [vmem:[%s0 + $0x88] sm:$0xff]
  %v62 = vld [vmem:[%s0 + $0x90] sm:$0xff]
  %v63 = vld [vmem:[%s0 + $0x98] sm:$0xff]
  %v64 = vld [vmem:[%s0 + $0xa0] sm:$0xff]
  %v65 = vld [vmem:[%s0 + $0xa8] sm:$0xff]
  %v66 = vld [vmem:[%s0 + $0xb0] sm:$0xff]
  %v67 = vld [vmem:[%s0 + $0xb8] sm:$0xff]
  %v68 = vld [vmem:[%s0 + $0xc0] sm:$0xff]
  %v69 = vld [vmem:[%s0 + $0xc8] sm:$0xff]
  %v70 = vld [vmem:[%s0 + $0xd0] sm:$0xff]
  %v71 = vld [vmem:[%s0 + $0xd8] sm:$0xff]
  %v72 = vld [vmem:[%s1] sm:$0xff]
  %v73 = vld [vmem:[%s1 + $0x8] sm:$0xff]
  %v74 = vld [vmem:[%s1 + $0x10] sm:$0xff]
  %v75 = vld [vmem:[%s1 + $0x18] sm:$0xff]
  %v76 = vld [vmem:[%s1 + $0x20] sm:$0xff]
  %v77 = vld [vmem:[%s1 + $0x28] sm:$0xff]
  %v78 = vld [vmem:[%s1 + $0x30] sm:$0xff]
  %v79 = vld [vmem:[%s1 + $0x38] sm:$0xff]
  %v80 = vld [vmem:[%s1 + $0x40] sm:$0xff]
  %v81 = vld [vmem:[%s1 + $0x48] sm:$0xff]
  %v82 = vld [vmem:[%s1 + $0x50] sm:$0xff]
  %v83 = vld [vmem:[%s1 + $0x58] sm:$0xff]
  %v84 = vld [vmem:[%s1 + $0x60] sm:$0xff]
  %v85 = vld [vmem:[%s1 + $0x68] sm:$0xff]
  %v86 = vld [vmem:[%s1 + $0x70] sm:$0xff]
  %v87 = vld [vmem:[%s1 + $0x78] sm:$0xff]
  %v88 = vld [vmem:[%s1 + $0x80] sm:$0xff]
  %v89 = vld [vmem:[%s1 + $0x88] sm:$0xff]
  %v90 = vld [vmem:[%s1 + $0x90] sm:$0xff]
  %v91 = vld [vmem:[%s1 + $0x98] sm:$0xff]
  %v92 = vld [vmem:[%s1 + $0xa0] sm:$0xff]
  %v93 = vld [vmem:[%s1 + $0xa8] sm:$0xff]
  %v94 = vld [vmem:[%s1 + $0xb0] sm:$0xff]
  %v95 = vld [vmem:[%s1 + $0xb8] sm:$0xff]
  %s96 = scalar_lea.vmem %s0, 8
  %v97 = vld [vmem:[%s96] sm:$0xff]
  %v98 = vld [vmem:[%s96 + $0x8] sm:$0xff]
  %v99 = vld [vmem:[%s96 + $0x10] sm:$0xff]
  %v100 = vld [vmem:[%s96 + $0x18] sm:$0xff]
  %v101 = vld [vmem:[%s96 + $0x20] sm:$0xff]
  %v102 = vld [vmem:[%s96 + $0x28] sm:$0xff]
  %v103 = vld [vmem:[%s96 + $0x30] sm:$0xff]
  %v104 = vld [vmem:[%s96 + $0x38] sm:$0xff]
  %v105 = vld [vmem:[%s96 + $0x40] sm:$0xff]
  %v106 = vld [vmem:[%s96 + $0x48] sm:$0xff]
  %v107 = vld [vmem:[%s96 + $0x50] sm:$0xff]
  %v108 = vld [vmem:[%s96 + $0x58] sm:$0xff]
  %v109 = vld [vmem:[%s96 + $0x60] sm:$0xff]
  %v110 = vld [vmem:[%s96 + $0x68] sm:$0xff]
  %v111 = vld [vmem:[%s96 + $0x70] sm:$0xff]
  %v112 = vld [vmem:[%s96 + $0x78] sm:$0xff]
  %v113 = vld [vmem:[%s96 + $0x80] sm:$0xff]
  %v114 = vld [vmem:[%s96 + $0x88] sm:$0xff]
  %v115 = vld [vmem:[%s96 + $0x90] sm:$0xff]
  %v116 = vld [vmem:[%s96 + $0x98] sm:$0xff]
  %v117 = vld [vmem:[%s96 + $0xa0] sm:$0xff]
  %v118 = vld [vmem:[%s96 + $0xa8] sm:$0xff]
  %v119 = vld [vmem:[%s96 + $0xb0] sm:$0xff]
  %v120 = vld [vmem:[%s96 + $0xb8] sm:$0xff]
  %v121 = vld [vmem:[%s96 + $0xc0] sm:$0xff]
  %v122 = vld [vmem:[%s96 + $0xc8] sm:$0xff]
  %v123 = vld [vmem:[%s96 + $0xd0] sm:$0xff]
  %v124 = vld [vmem:[%s96 + $0xd8] sm:$0xff]
  %s125 = scalar_lea.vmem %s1, 192
  %v126 = vld [vmem:[%s125] sm:$0xff]
  %v127 = vld [vmem:[%s125 + $0x8] sm:$0xff]
  %v128 = vld [vmem:[%s125 + $0x10] sm:$0xff]
  %v129 = vld [vmem:[%s125 + $0x18] sm:$0xff]
  %v130 = vld [vmem:[%s125 + $0x20] sm:$0xff]
  %v131 = vld [vmem:[%s125 + $0x28] sm:$0xff]
  %v132 = vld [vmem:[%s125 + $0x30] sm:$0xff]
  %v133 = vld [vmem:[%s125 + $0x38] sm:$0xff]
  %v134 = vld [vmem:[%s125 + $0x40] sm:$0xff]
  %v135 = vld [vmem:[%s125 + $0x48] sm:$0xff]
  %v136 = vld [vmem:[%s125 + $0x50] sm:$0xff]
  %v137 = vld [vmem:[%s125 + $0x58] sm:$0xff]
  %v138 = vld [vmem:[%s125 + $0x60] sm:$0xff]
  %v139 = vld [vmem:[%s125 + $0x68] sm:$0xff]
  %v140 = vld [vmem:[%s125 + $0x70] sm:$0xff]
  %v141 = vld [vmem:[%s125 + $0x78] sm:$0xff]
  %v142 = vld [vmem:[%s125 + $0x80] sm:$0xff]
  %v143 = vld [vmem:[%s125 + $0x88] sm:$0xff]
  %v144 = vld [vmem:[%s125 + $0x90] sm:$0xff]
  %v145 = vld [vmem:[%s125 + $0x98] sm:$0xff]
  %v146 = vld [vmem:[%s125 + $0xa0] sm:$0xff]
  %v147 = vld [vmem:[%s125 + $0xa8] sm:$0xff]
  %v148 = vld [vmem:[%s125 + $0xb0] sm:$0xff]
  %v149 = vld [vmem:[%s125 + $0xb8] sm:$0xff]
  %vm150 = vcmask 785408
  %v152 = vsel %vm150, %v97, 0
  %v155 = vsel %vm150, %v98, 0
  %v158 = vsel %vm150, %v99, 0
  %v161 = vsel %vm150, %v100, 0
  %v164 = vsel %vm150, %v101, 0
  %v167 = vsel %vm150, %v102, 0
  %v170 = vsel %vm150, %v103, 0
  %v173 = vsel %vm150, %v104, 0
  %v176 = vsel %vm150, %v105, 0
  %v179 = vsel %vm150, %v106, 0
  %v182 = vsel %vm150, %v107, 0
  %v185 = vsel %vm150, %v108, 0
  %v188 = vsel %vm150, %v109, 0
  %v191 = vsel %vm150, %v110, 0
  %v194 = vsel %vm150, %v111, 0
  %v197 = vsel %vm150, %v112, 0
  %v200 = vsel %vm150, %v113, 0
  %v203 = vsel %vm150, %v114, 0
  %v206 = vsel %vm150, %v115, 0
  %v209 = vsel %vm150, %v116, 0
  %v212 = vsel %vm150, %v117, 0
  %v215 = vsel %vm150, %v118, 0
  %v218 = vsel %vm150, %v119, 0
  %v221 = vsel %vm150, %v120, 0
  %v224 = vsel %vm150, %v121, 0
  %v227 = vsel %vm150, %v122, 0
  %v230 = vsel %vm150, %v123, 0
  %v233 = vsel %vm150, %v124, 0
  %235 = vmatpush.msra.mxu0 0.0
  %236 = vmatpush.msra.mxu0 0.0
  %237 = vmatpush.msra.mxu0 0.0
  %238 = vmatpush.msra.mxu0 0.0
  %239 = vmatpush.msra.mxu0 %v148
  %240 = vmatpush.msra.mxu0 %v146
  %241 = vmatpush.msra.mxu0 %v144
  %242 = vmatpush.msra.mxu0 %v142
  %243 = vmatpush.msra.mxu0 %v140
  %244 = vmatpush.msra.mxu0 %v138
  %245 = vmatpush.msra.mxu0 %v136
  %246 = vmatpush.msra.mxu0 %v134
  %247 = vmatpush.msra.mxu0 %v132
  %248 = vmatpush.msra.mxu0 %v130
  %249 = vmatpush.msra.mxu0 %v128
  %250 = vmatpush.msra.mxu0 %v126
  %251 = vmatmul.f32.gmra.mxu0 %v152
  %v252 = vpop.f32.mrf.mxu0
  %v253 = vadd.f32 0.0, %v252
  %254 = vmatmul.f32.gmra.mxu0 %v155
  %v255 = vpop.f32.mrf.mxu0
  %v256 = vadd.f32 0.0, %v255
  %257 = vmatmul.f32.gmra.mxu0 %v158
  %v258 = vpop.f32.mrf.mxu0
  %v259 = vadd.f32 0.0, %v258
  %260 = vmatmul.f32.gmra.mxu0 %v161
  %v261 = vpop.f32.mrf.mxu0
  %v262 = vadd.f32 0.0, %v261
  %263 = vmatmul.f32.gmra.mxu0 %v164
  %v264 = vpop.f32.mrf.mxu0
  %v265 = vadd.f32 0.0, %v264
  %266 = vmatmul.f32.gmra.mxu0 %v167
  %v267 = vpop.f32.mrf.mxu0
  %v268 = vadd.f32 0.0, %v267
  %269 = vmatmul.f32.gmra.mxu0 %v170
  %v270 = vpop.f32.mrf.mxu0
  %v271 = vadd.f32 0.0, %v270
  %272 = vmatmul.f32.gmra.mxu0 %v173
  %v273 = vpop.f32.mrf.mxu0
  %v274 = vadd.f32 0.0, %v273
  %275 = vmatmul.f32.gmra.mxu0 %v176
  %v276 = vpop.f32.mrf.mxu0
  %v277 = vadd.f32 0.0, %v276
  %278 = vmatmul.f32.gmra.mxu0 %v179
  %v279 = vpop.f32.mrf.mxu0
  %v280 = vadd.f32 0.0, %v279
  %281 = vmatmul.f32.gmra.mxu0 %v182
  %v282 = vpop.f32.mrf.mxu0
  %v283 = vadd.f32 0.0, %v282
  %284 = vmatmul.f32.gmra.mxu0 %v185
  %v285 = vpop.f32.mrf.mxu0
  %v286 = vadd.f32 0.0, %v285
  %287 = vmatmul.f32.gmra.mxu0 %v188
  %v288 = vpop.f32.mrf.mxu0
  %v289 = vadd.f32 0.0, %v288
  %290 = vmatmul.f32.gmra.mxu0 %v191
  %v291 = vpop.f32.mrf.mxu0
  %v292 = vadd.f32 0.0, %v291
  %293 = vmatmul.f32.gmra.mxu0 %v194
  %v294 = vpop.f32.mrf.mxu0
  %v295 = vadd.f32 0.0, %v294
  %296 = vmatmul.f32.gmra.mxu0 %v197
  %v297 = vpop.f32.mrf.mxu0
  %v298 = vadd.f32 0.0, %v297
  %299 = vmatmul.f32.gmra.mxu0 %v200
  %v300 = vpop.f32.mrf.mxu0
  %v301 = vadd.f32 0.0, %v300
  %302 = vmatmul.f32.gmra.mxu0 %v203
  %v303 = vpop.f32.mrf.mxu0
  %v304 = vadd.f32 0.0, %v303
  %305 = vmatmul.f32.gmra.mxu0 %v206
  %v306 = vpop.f32.mrf.mxu0
  %v307 = vadd.f32 0.0, %v306
  %308 = vmatmul.f32.gmra.mxu0 %v209
  %v309 = vpop.f32.mrf.mxu0
  %v310 = vadd.f32 0.0, %v309
  %311 = vmatmul.f32.gmra.mxu0 %v212
  %v312 = vpop.f32.mrf.mxu0
  %v313 = vadd.f32 0.0, %v312
  %314 = vmatmul.f32.gmra.mxu0 %v215
  %v315 = vpop.f32.mrf.mxu0
  %v316 = vadd.f32 0.0, %v315
  %317 = vmatmul.f32.gmra.mxu0 %v218
  %v318 = vpop.f32.mrf.mxu0
  %v319 = vadd.f32 0.0, %v318
  %320 = vmatmul.f32.gmra.mxu0 %v221
  %v321 = vpop.f32.mrf.mxu0
  %v322 = vadd.f32 0.0, %v321
  %323 = vmatmul.f32.gmra.mxu0 %v224
  %v324 = vpop.f32.mrf.mxu0
  %v325 = vadd.f32 0.0, %v324
  %326 = vmatmul.f32.gmra.mxu0 %v227
  %v327 = vpop.f32.mrf.mxu0
  %v328 = vadd.f32 0.0, %v327
  %329 = vmatmul.f32.gmra.mxu0 %v230
  %v330 = vpop.f32.mrf.mxu0
  %v331 = vadd.f32 0.0, %v330
  %332 = vmatmul.f32.gmra.mxu0 %v233
  %v333 = vpop.f32.mrf.mxu0
  %v334 = vadd.f32 0.0, %v333
  %335 = vdwg.mxu0
  %336 = vmatpush.msra.mxu0 0.0
  %337 = vmatpush.msra.mxu0 0.0
  %338 = vmatpush.msra.mxu0 0.0
  %339 = vmatpush.msra.mxu0 0.0
  %340 = vmatpush.msra.mxu0 %v149
  %341 = vmatpush.msra.mxu0 %v147
  %342 = vmatpush.msra.mxu0 %v145
  %343 = vmatpush.msra.mxu0 %v143
  %344 = vmatpush.msra.mxu0 %v141
  %345 = vmatpush.msra.mxu0 %v139
  %346 = vmatpush.msra.mxu0 %v137
  %347 = vmatpush.msra.mxu0 %v135
  %348 = vmatpush.msra.mxu0 %v133
  %349 = vmatpush.msra.mxu0 %v131
  %350 = vmatpush.msra.mxu0 %v129
  %351 = vmatpush.msra.mxu0 %v127
  %352 = vmatmul.f32.gmra.mxu0 %v152
  %v353 = vpop.f32.mrf.mxu0
  %v354 = vadd.f32 0.0, %v353
  %355 = vmatmul.f32.gmra.mxu0 %v155
  %v356 = vpop.f32.mrf.mxu0
  %v357 = vadd.f32 0.0, %v356
  %358 = vmatmul.f32.gmra.mxu0 %v158
  %v359 = vpop.f32.mrf.mxu0
  %v360 = vadd.f32 0.0, %v359
  %361 = vmatmul.f32.gmra.mxu0 %v161
  %v362 = vpop.f32.mrf.mxu0
  %v363 = vadd.f32 0.0, %v362
  %364 = vmatmul.f32.gmra.mxu0 %v164
  %v365 = vpop.f32.mrf.mxu0
  %v366 = vadd.f32 0.0, %v365
  %367 = vmatmul.f32.gmra.mxu0 %v167
  %v368 = vpop.f32.mrf.mxu0
  %v369 = vadd.f32 0.0, %v368
  %370 = vmatmul.f32.gmra.mxu0 %v170
  %v371 = vpop.f32.mrf.mxu0
  %v372 = vadd.f32 0.0, %v371
  %373 = vmatmul.f32.gmra.mxu0 %v173
  %v374 = vpop.f32.mrf.mxu0
  %v375 = vadd.f32 0.0, %v374
  %376 = vmatmul.f32.gmra.mxu0 %v176
  %v377 = vpop.f32.mrf.mxu0
  %v378 = vadd.f32 0.0, %v377
  %379 = vmatmul.f32.gmra.mxu0 %v179
  %v380 = vpop.f32.mrf.mxu0
  %v381 = vadd.f32 0.0, %v380
  %382 = vmatmul.f32.gmra.mxu0 %v182
  %v383 = vpop.f32.mrf.mxu0
  %v384 = vadd.f32 0.0, %v383
  %385 = vmatmul.f32.gmra.mxu0 %v185
  %v386 = vpop.f32.mrf.mxu0
  %v387 = vadd.f32 0.0, %v386
  %388 = vmatmul.f32.gmra.mxu0 %v188
  %v389 = vpop.f32.mrf.mxu0
  %v390 = vadd.f32 0.0, %v389
  %391 = vmatmul.f32.gmra.mxu0 %v191
  %v392 = vpop.f32.mrf.mxu0
  %v393 = vadd.f32 0.0, %v392
  %394 = vmatmul.f32.gmra.mxu0 %v194
  %v395 = vpop.f32.mrf.mxu0
  %v396 = vadd.f32 0.0, %v395
  %397 = vmatmul.f32.gmra.mxu0 %v197
  %v398 = vpop.f32.mrf.mxu0
  %v399 = vadd.f32 0.0, %v398
  %400 = vmatmul.f32.gmra.mxu0 %v200
  %v401 = vpop.f32.mrf.mxu0
  %v402 = vadd.f32 0.0, %v401
  %403 = vmatmul.f32.gmra.mxu0 %v203
  %v404 = vpop.f32.mrf.mxu0
  %v405 = vadd.f32 0.0, %v404
  %406 = vmatmul.f32.gmra.mxu0 %v206
  %v407 = vpop.f32.mrf.mxu0
  %v408 = vadd.f32 0.0, %v407
  %409 = vmatmul.f32.gmra.mxu0 %v209
  %v410 = vpop.f32.mrf.mxu0
  %v411 = vadd.f32 0.0, %v410
  %412 = vmatmul.f32.gmra.mxu0 %v212
  %v413 = vpop.f32.mrf.mxu0
  %v414 = vadd.f32 0.0, %v413
  %415 = vmatmul.f32.gmra.mxu0 %v215
  %v416 = vpop.f32.mrf.mxu0
  %v417 = vadd.f32 0.0, %v416
  %418 = vmatmul.f32.gmra.mxu0 %v218
  %v419 = vpop.f32.mrf.mxu0
  %v420 = vadd.f32 0.0, %v419
  %421 = vmatmul.f32.gmra.mxu0 %v221
  %v422 = vpop.f32.mrf.mxu0
  %v423 = vadd.f32 0.0, %v422
  %424 = vmatmul.f32.gmra.mxu0 %v224
  %v425 = vpop.f32.mrf.mxu0
  %v426 = vadd.f32 0.0, %v425
  %427 = vmatmul.f32.gmra.mxu0 %v227
  %v428 = vpop.f32.mrf.mxu0
  %v429 = vadd.f32 0.0, %v428
  %430 = vmatmul.f32.gmra.mxu0 %v230
  %v431 = vpop.f32.mrf.mxu0
  %v432 = vadd.f32 0.0, %v431
  %433 = vmatmul.f32.gmra.mxu0 %v233
  %v434 = vpop.f32.mrf.mxu0
  %v435 = vadd.f32 0.0, %v434
  %436 = vdwg.mxu0
  %v438 = vsel %vm150, %v44, 0
  %v441 = vsel %vm150, %v45, 0
  %v444 = vsel %vm150, %v46, 0
  %v447 = vsel %vm150, %v47, 0
  %v450 = vsel %vm150, %v48, 0
  %v453 = vsel %vm150, %v49, 0
  %v456 = vsel %vm150, %v50, 0
  %v459 = vsel %vm150, %v51, 0
  %v462 = vsel %vm150, %v52, 0
  %v465 = vsel %vm150, %v53, 0
  %v468 = vsel %vm150, %v54, 0
  %v471 = vsel %vm150, %v55, 0
  %v474 = vsel %vm150, %v56, 0
  %v477 = vsel %vm150, %v57, 0
  %v480 = vsel %vm150, %v58, 0
  %v483 = vsel %vm150, %v59, 0
  %v486 = vsel %vm150, %v60, 0
  %v489 = vsel %vm150, %v61, 0
  %v492 = vsel %vm150, %v62, 0
  %v495 = vsel %vm150, %v63, 0
  %v498 = vsel %vm150, %v64, 0
  %v501 = vsel %vm150, %v65, 0
  %v504 = vsel %vm150, %v66, 0
  %v507 = vsel %vm150, %v67, 0
  %v510 = vsel %vm150, %v68, 0
  %v513 = vsel %vm150, %v69, 0
  %v516 = vsel %vm150, %v70, 0
  %v519 = vsel %vm150, %v71, 0
  %521 = vmatpush.msra.mxu0 0.0
  %522 = vmatpush.msra.mxu0 0.0
  %523 = vmatpush.msra.mxu0 0.0
  %524 = vmatpush.msra.mxu0 0.0
  %525 = vmatpush.msra.mxu0 %v94
  %526 = vmatpush.msra.mxu0 %v92
  %527 = vmatpush.msra.mxu0 %v90
  %528 = vmatpush.msra.mxu0 %v88
  %529 = vmatpush.msra.mxu0 %v86
  %530 = vmatpush.msra.mxu0 %v84
  %531 = vmatpush.msra.mxu0 %v82
  %532 = vmatpush.msra.mxu0 %v80
  %533 = vmatpush.msra.mxu0 %v78
  %534 = vmatpush.msra.mxu0 %v76
  %535 = vmatpush.msra.mxu0 %v74
  %536 = vmatpush.msra.mxu0 %v72
  %537 = vmatmul.f32.gmra.mxu0 %v438
  %v538 = vpop.f32.mrf.mxu0
  %v539 = vadd.f32 %v253, %v538
  %540 = vmatmul.f32.gmra.mxu0 %v441
  %v541 = vpop.f32.mrf.mxu0
  %v542 = vadd.f32 %v256, %v541
  %543 = vmatmul.f32.gmra.mxu0 %v444
  %v544 = vpop.f32.mrf.mxu0
  %v545 = vadd.f32 %v259, %v544
  %546 = vmatmul.f32.gmra.mxu0 %v447
  %v547 = vpop.f32.mrf.mxu0
  %v548 = vadd.f32 %v262, %v547
  %549 = vmatmul.f32.gmra.mxu0 %v450
  %v550 = vpop.f32.mrf.mxu0
  %v551 = vadd.f32 %v265, %v550
  %552 = vmatmul.f32.gmra.mxu0 %v453
  %v553 = vpop.f32.mrf.mxu0
  %v554 = vadd.f32 %v268, %v553
  %555 = vmatmul.f32.gmra.mxu0 %v456
  %v556 = vpop.f32.mrf.mxu0
  %v557 = vadd.f32 %v271, %v556
  %558 = vmatmul.f32.gmra.mxu0 %v459
  %v559 = vpop.f32.mrf.mxu0
  %v560 = vadd.f32 %v274, %v559
  %561 = vmatmul.f32.gmra.mxu0 %v462
  %v562 = vpop.f32.mrf.mxu0
  %v563 = vadd.f32 %v277, %v562
  %564 = vmatmul.f32.gmra.mxu0 %v465
  %v565 = vpop.f32.mrf.mxu0
  %v566 = vadd.f32 %v280, %v565
  %567 = vmatmul.f32.gmra.mxu0 %v468
  %v568 = vpop.f32.mrf.mxu0
  %v569 = vadd.f32 %v283, %v568
  %570 = vmatmul.f32.gmra.mxu0 %v471
  %v571 = vpop.f32.mrf.mxu0
  %v572 = vadd.f32 %v286, %v571
  %573 = vmatmul.f32.gmra.mxu0 %v474
  %v574 = vpop.f32.mrf.mxu0
  %v575 = vadd.f32 %v289, %v574
  %576 = vmatmul.f32.gmra.mxu0 %v477
  %v577 = vpop.f32.mrf.mxu0
  %v578 = vadd.f32 %v292, %v577
  %579 = vmatmul.f32.gmra.mxu0 %v480
  %v580 = vpop.f32.mrf.mxu0
  %v581 = vadd.f32 %v295, %v580
  %582 = vmatmul.f32.gmra.mxu0 %v483
  %v583 = vpop.f32.mrf.mxu0
  %v584 = vadd.f32 %v298, %v583
  %585 = vmatmul.f32.gmra.mxu0 %v486
  %v586 = vpop.f32.mrf.mxu0
  %v587 = vadd.f32 %v301, %v586
  %588 = vmatmul.f32.gmra.mxu0 %v489
  %v589 = vpop.f32.mrf.mxu0
  %v590 = vadd.f32 %v304, %v589
  %591 = vmatmul.f32.gmra.mxu0 %v492
  %v592 = vpop.f32.mrf.mxu0
  %v593 = vadd.f32 %v307, %v592
  %594 = vmatmul.f32.gmra.mxu0 %v495
  %v595 = vpop.f32.mrf.mxu0
  %v596 = vadd.f32 %v310, %v595
  %597 = vmatmul.f32.gmra.mxu0 %v498
  %v598 = vpop.f32.mrf.mxu0
  %v599 = vadd.f32 %v313, %v598
  %600 = vmatmul.f32.gmra.mxu0 %v501
  %v601 = vpop.f32.mrf.mxu0
  %v602 = vadd.f32 %v316, %v601
  %603 = vmatmul.f32.gmra.mxu0 %v504
  %v604 = vpop.f32.mrf.mxu0
  %v605 = vadd.f32 %v319, %v604
  %606 = vmatmul.f32.gmra.mxu0 %v507
  %v607 = vpop.f32.mrf.mxu0
  %v608 = vadd.f32 %v322, %v607
  %609 = vmatmul.f32.gmra.mxu0 %v510
  %v610 = vpop.f32.mrf.mxu0
  %v611 = vadd.f32 %v325, %v610
  %612 = vmatmul.f32.gmra.mxu0 %v513
  %v613 = vpop.f32.mrf.mxu0
  %v614 = vadd.f32 %v328, %v613
  %615 = vmatmul.f32.gmra.mxu0 %v516
  %v616 = vpop.f32.mrf.mxu0
  %v617 = vadd.f32 %v331, %v616
  %618 = vmatmul.f32.gmra.mxu0 %v519
  %v619 = vpop.f32.mrf.mxu0
  %v620 = vadd.f32 %v334, %v619
  %621 = vdwg.mxu0
  %622 = vmatpush.msra.mxu0 0.0
  %623 = vmatpush.msra.mxu0 0.0
  %624 = vmatpush.msra.mxu0 0.0
  %625 = vmatpush.msra.mxu0 0.0
  %626 = vmatpush.msra.mxu0 %v95
  %627 = vmatpush.msra.mxu0 %v93
  %628 = vmatpush.msra.mxu0 %v91
  %629 = vmatpush.msra.mxu0 %v89
  %630 = vmatpush.msra.mxu0 %v87
  %631 = vmatpush.msra.mxu0 %v85
  %632 = vmatpush.msra.mxu0 %v83
  %633 = vmatpush.msra.mxu0 %v81
  %634 = vmatpush.msra.mxu0 %v79
  %635 = vmatpush.msra.mxu0 %v77
  %636 = vmatpush.msra.mxu0 %v75
  %637 = vmatpush.msra.mxu0 %v73
  %638 = vmatmul.f32.gmra.mxu0 %v438
  %v639 = vpop.f32.mrf.mxu0
  %v640 = vadd.f32 %v354, %v639
  %641 = vmatmul.f32.gmra.mxu0 %v441
  %v642 = vpop.f32.mrf.mxu0
  %v643 = vadd.f32 %v357, %v642
  %644 = vmatmul.f32.gmra.mxu0 %v444
  %v645 = vpop.f32.mrf.mxu0
  %v646 = vadd.f32 %v360, %v645
  %647 = vmatmul.f32.gmra.mxu0 %v447
  %v648 = vpop.f32.mrf.mxu0
  %v649 = vadd.f32 %v363, %v648
  %650 = vmatmul.f32.gmra.mxu0 %v450
  %v651 = vpop.f32.mrf.mxu0
  %v652 = vadd.f32 %v366, %v651
  %653 = vmatmul.f32.gmra.mxu0 %v453
  %v654 = vpop.f32.mrf.mxu0
  %v655 = vadd.f32 %v369, %v654
  %656 = vmatmul.f32.gmra.mxu0 %v456
  %v657 = vpop.f32.mrf.mxu0
  %v658 = vadd.f32 %v372, %v657
  %659 = vmatmul.f32.gmra.mxu0 %v459
  %v660 = vpop.f32.mrf.mxu0
  %v661 = vadd.f32 %v375, %v660
  %662 = vmatmul.f32.gmra.mxu0 %v462
  %v663 = vpop.f32.mrf.mxu0
  %v664 = vadd.f32 %v378, %v663
  %665 = vmatmul.f32.gmra.mxu0 %v465
  %v666 = vpop.f32.mrf.mxu0
  %v667 = vadd.f32 %v381, %v666
  %668 = vmatmul.f32.gmra.mxu0 %v468
  %v669 = vpop.f32.mrf.mxu0
  %v670 = vadd.f32 %v384, %v669
  %671 = vmatmul.f32.gmra.mxu0 %v471
  %v672 = vpop.f32.mrf.mxu0
  %v673 = vadd.f32 %v387, %v672
  %674 = vmatmul.f32.gmra.mxu0 %v474
  %v675 = vpop.f32.mrf.mxu0
  %v676 = vadd.f32 %v390, %v675
  %677 = vmatmul.f32.gmra.mxu0 %v477
  %v678 = vpop.f32.mrf.mxu0
  %v679 = vadd.f32 %v393, %v678
  %680 = vmatmul.f32.gmra.mxu0 %v480
  %v681 = vpop.f32.mrf.mxu0
  %v682 = vadd.f32 %v396, %v681
  %683 = vmatmul.f32.gmra.mxu0 %v483
  %v684 = vpop.f32.mrf.mxu0
  %v685 = vadd.f32 %v399, %v684
  %686 = vmatmul.f32.gmra.mxu0 %v486
  %v687 = vpop.f32.mrf.mxu0
  %v688 = vadd.f32 %v402, %v687
  %689 = vmatmul.f32.gmra.mxu0 %v489
  %v690 = vpop.f32.mrf.mxu0
  %v691 = vadd.f32 %v405, %v690
  %692 = vmatmul.f32.gmra.mxu0 %v492
  %v693 = vpop.f32.mrf.mxu0
  %v694 = vadd.f32 %v408, %v693
  %695 = vmatmul.f32.gmra.mxu0 %v495
  %v696 = vpop.f32.mrf.mxu0
  %v697 = vadd.f32 %v411, %v696
  %698 = vmatmul.f32.gmra.mxu0 %v498
  %v699 = vpop.f32.mrf.mxu0
  %v700 = vadd.f32 %v414, %v699
  %701 = vmatmul.f32.gmra.mxu0 %v501
  %v702 = vpop.f32.mrf.mxu0
  %v703 = vadd.f32 %v417, %v702
  %704 = vmatmul.f32.gmra.mxu0 %v504
  %v705 = vpop.f32.mrf.mxu0
  %v706 = vadd.f32 %v420, %v705
  %707 = vmatmul.f32.gmra.mxu0 %v507
  %v708 = vpop.f32.mrf.mxu0
  %v709 = vadd.f32 %v423, %v708
  %710 = vmatmul.f32.gmra.mxu0 %v510
  %v711 = vpop.f32.mrf.mxu0
  %v712 = vadd.f32 %v426, %v711
  %713 = vmatmul.f32.gmra.mxu0 %v513
  %v714 = vpop.f32.mrf.mxu0
  %v715 = vadd.f32 %v429, %v714
  %716 = vmatmul.f32.gmra.mxu0 %v516
  %v717 = vpop.f32.mrf.mxu0
  %v718 = vadd.f32 %v432, %v717
  %719 = vmatmul.f32.gmra.mxu0 %v519
  %v720 = vpop.f32.mrf.mxu0
  %v721 = vadd.f32 %v435, %v720
  %722 = vdwg.mxu0
  %s723 = scalar_lea.vmem %s0, 16
  %v724 = vld [vmem:[%s723] sm:$0xff]
  %v725 = vld [vmem:[%s723 + $0x8] sm:$0xff]
  %v726 = vld [vmem:[%s723 + $0x10] sm:$0xff]
  %v727 = vld [vmem:[%s723 + $0x18] sm:$0xff]
  %v728 = vld [vmem:[%s723 + $0x20] sm:$0xff]
  %v729 = vld [vmem:[%s723 + $0x28] sm:$0xff]
  %v730 = vld [vmem:[%s723 + $0x30] sm:$0xff]
  %v731 = vld [vmem:[%s723 + $0x38] sm:$0xff]
  %v732 = vld [vmem:[%s723 + $0x40] sm:$0xff]
  %v733 = vld [vmem:[%s723 + $0x48] sm:$0xff]
  %v734 = vld [vmem:[%s723 + $0x50] sm:$0xff]
  %v735 = vld [vmem:[%s723 + $0x58] sm:$0xff]
  %v736 = vld [vmem:[%s723 + $0x60] sm:$0xff]
  %v737 = vld [vmem:[%s723 + $0x68] sm:$0xff]
  %v738 = vld [vmem:[%s723 + $0x70] sm:$0xff]
  %v739 = vld [vmem:[%s723 + $0x78] sm:$0xff]
  %v740 = vld [vmem:[%s723 + $0x80] sm:$0xff]
  %v741 = vld [vmem:[%s723 + $0x88] sm:$0xff]
  %v742 = vld [vmem:[%s723 + $0x90] sm:$0xff]
  %v743 = vld [vmem:[%s723 + $0x98] sm:$0xff]
  %v744 = vld [vmem:[%s723 + $0xa0] sm:$0xff]
  %v745 = vld [vmem:[%s723 + $0xa8] sm:$0xff]
  %v746 = vld [vmem:[%s723 + $0xb0] sm:$0xff]
  %v747 = vld [vmem:[%s723 + $0xb8] sm:$0xff]
  %v748 = vld [vmem:[%s723 + $0xc0] sm:$0xff]
  %v749 = vld [vmem:[%s723 + $0xc8] sm:$0xff]
  %v750 = vld [vmem:[%s723 + $0xd0] sm:$0xff]
  %v751 = vld [vmem:[%s723 + $0xd8] sm:$0xff]
  %s752 = scalar_lea.vmem %s1, 384
  %v753 = vld [vmem:[%s752] sm:$0xff]
  %v754 = vld [vmem:[%s752 + $0x8] sm:$0xff]
  %v755 = vld [vmem:[%s752 + $0x10] sm:$0xff]
  %v756 = vld [vmem:[%s752 + $0x18] sm:$0xff]
  %v757 = vld [vmem:[%s752 + $0x20] sm:$0xff]
  %v758 = vld [vmem:[%s752 + $0x28] sm:$0xff]
  %v759 = vld [vmem:[%s752 + $0x30] sm:$0xff]
  %v760 = vld [vmem:[%s752 + $0x38] sm:$0xff]
  %v761 = vld [vmem:[%s752 + $0x40] sm:$0xff]
  %v762 = vld [vmem:[%s752 + $0x48] sm:$0xff]
  %v763 = vld [vmem:[%s752 + $0x50] sm:$0xff]
  %v764 = vld [vmem:[%s752 + $0x58] sm:$0xff]
  %v765 = vld [vmem:[%s752 + $0x60] sm:$0xff]
  %v766 = vld [vmem:[%s752 + $0x68] sm:$0xff]
  %v767 = vld [vmem:[%s752 + $0x70] sm:$0xff]
  %v768 = vld [vmem:[%s752 + $0x78] sm:$0xff]
  %v769 = vld [vmem:[%s752 + $0x80] sm:$0xff]
  %v770 = vld [vmem:[%s752 + $0x88] sm:$0xff]
  %v771 = vld [vmem:[%s752 + $0x90] sm:$0xff]
  %v772 = vld [vmem:[%s752 + $0x98] sm:$0xff]
  %v773 = vld [vmem:[%s752 + $0xa0] sm:$0xff]
  %v774 = vld [vmem:[%s752 + $0xa8] sm:$0xff]
  %v775 = vld [vmem:[%s752 + $0xb0] sm:$0xff]
  %v776 = vld [vmem:[%s752 + $0xb8] sm:$0xff]
  %s777 = scalar_lea.vmem %s0, 24
  %v778 = vld [vmem:[%s777] sm:$0xff]
  %v779 = vld [vmem:[%s777 + $0x8] sm:$0xff]
  %v780 = vld [vmem:[%s777 + $0x10] sm:$0xff]
  %v781 = vld [vmem:[%s777 + $0x18] sm:$0xff]
  %v782 = vld [vmem:[%s777 + $0x20] sm:$0xff]
  %v783 = vld [vmem:[%s777 + $0x28] sm:$0xff]
  %v784 = vld [vmem:[%s777 + $0x30] sm:$0xff]
  %v785 = vld [vmem:[%s777 + $0x38] sm:$0xff]
  %v786 = vld [vmem:[%s777 + $0x40] sm:$0xff]
  %v787 = vld [vmem:[%s777 + $0x48] sm:$0xff]
  %v788 = vld [vmem:[%s777 + $0x50] sm:$0xff]
  %v789 = vld [vmem:[%s777 + $0x58] sm:$0xff]
  %v790 = vld [vmem:[%s777 + $0x60] sm:$0xff]
  %v791 = vld [vmem:[%s777 + $0x68] sm:$0xff]
  %v792 = vld [vmem:[%s777 + $0x70] sm:$0xff]
  %v793 = vld [vmem:[%s777 + $0x78] sm:$0xff]
  %v794 = vld [vmem:[%s777 + $0x80] sm:$0xff]
  %v795 = vld [vmem:[%s777 + $0x88] sm:$0xff]
  %v796 = vld [vmem:[%s777 + $0x90] sm:$0xff]
  %v797 = vld [vmem:[%s777 + $0x98] sm:$0xff]
  %v798 = vld [vmem:[%s777 + $0xa0] sm:$0xff]
  %v799 = vld [vmem:[%s777 + $0xa8] sm:$0xff]
  %v800 = vld [vmem:[%s777 + $0xb0] sm:$0xff]
  %v801 = vld [vmem:[%s777 + $0xb8] sm:$0xff]
  %v802 = vld [vmem:[%s777 + $0xc0] sm:$0xff]
  %v803 = vld [vmem:[%s777 + $0xc8] sm:$0xff]
  %v804 = vld [vmem:[%s777 + $0xd0] sm:$0xff]
  %v805 = vld [vmem:[%s777 + $0xd8] sm:$0xff]
  %s806 = scalar_lea.vmem %s1, 576
  %v807 = vld [vmem:[%s806] sm:$0xff]
  %v808 = vld [vmem:[%s806 + $0x8] sm:$0xff]
  %v809 = vld [vmem:[%s806 + $0x10] sm:$0xff]
  %v810 = vld [vmem:[%s806 + $0x18] sm:$0xff]
  %v811 = vld [vmem:[%s806 + $0x20] sm:$0xff]
  %v812 = vld [vmem:[%s806 + $0x28] sm:$0xff]
  %v813 = vld [vmem:[%s806 + $0x30] sm:$0xff]
  %v814 = vld [vmem:[%s806 + $0x38] sm:$0xff]
  %v815 = vld [vmem:[%s806 + $0x40] sm:$0xff]
  %v816 = vld [vmem:[%s806 + $0x48] sm:$0xff]
  %v817 = vld [vmem:[%s806 + $0x50] sm:$0xff]
  %v818 = vld [vmem:[%s806 + $0x58] sm:$0xff]
  %v819 = vld [vmem:[%s806 + $0x60] sm:$0xff]
  %v820 = vld [vmem:[%s806 + $0x68] sm:$0xff]
  %v821 = vld [vmem:[%s806 + $0x70] sm:$0xff]
  %v822 = vld [vmem:[%s806 + $0x78] sm:$0xff]
  %v823 = vld [vmem:[%s806 + $0x80] sm:$0xff]
  %v824 = vld [vmem:[%s806 + $0x88] sm:$0xff]
  %v825 = vld [vmem:[%s806 + $0x90] sm:$0xff]
  %v826 = vld [vmem:[%s806 + $0x98] sm:$0xff]
  %v827 = vld [vmem:[%s806 + $0xa0] sm:$0xff]
  %v828 = vld [vmem:[%s806 + $0xa8] sm:$0xff]
  %v829 = vld [vmem:[%s806 + $0xb0] sm:$0xff]
  %v830 = vld [vmem:[%s806 + $0xb8] sm:$0xff]
  %v832 = vsel %vm150, %v778, 0
  %v835 = vsel %vm150, %v779, 0
  %v838 = vsel %vm150, %v780, 0
  %v841 = vsel %vm150, %v781, 0
  %v844 = vsel %vm150, %v782, 0
  %v847 = vsel %vm150, %v783, 0
  %v850 = vsel %vm150, %v784, 0
  %v853 = vsel %vm150, %v785, 0
  %v856 = vsel %vm150, %v786, 0
  %v859 = vsel %vm150, %v787, 0
  %v862 = vsel %vm150, %v788, 0
  %v865 = vsel %vm150, %v789, 0
  %v868 = vsel %vm150, %v790, 0
  %v871 = vsel %vm150, %v791, 0
  %v874 = vsel %vm150, %v792, 0
  %v877 = vsel %vm150, %v793, 0
  %v880 = vsel %vm150, %v794, 0
  %v883 = vsel %vm150, %v795, 0
  %v886 = vsel %vm150, %v796, 0
  %v889 = vsel %vm150, %v797, 0
  %v892 = vsel %vm150, %v798, 0
  %v895 = vsel %vm150, %v799, 0
  %v898 = vsel %vm150, %v800, 0
  %v901 = vsel %vm150, %v801, 0
  %v904 = vsel %vm150, %v802, 0
  %v907 = vsel %vm150, %v803, 0
  %v910 = vsel %vm150, %v804, 0
  %v913 = vsel %vm150, %v805, 0
  %915 = vmatpush.msra.mxu0 0.0
  %916 = vmatpush.msra.mxu0 0.0
  %917 = vmatpush.msra.mxu0 0.0
  %918 = vmatpush.msra.mxu0 0.0
  %919 = vmatpush.msra.mxu0 %v829
  %920 = vmatpush.msra.mxu0 %v827
  %921 = vmatpush.msra.mxu0 %v825
  %922 = vmatpush.msra.mxu0 %v823
  %923 = vmatpush.msra.mxu0 %v821
  %924 = vmatpush.msra.mxu0 %v819
  %925 = vmatpush.msra.mxu0 %v817
  %926 = vmatpush.msra.mxu0 %v815
  %927 = vmatpush.msra.mxu0 %v813
  %928 = vmatpush.msra.mxu0 %v811
  %929 = vmatpush.msra.mxu0 %v809
  %930 = vmatpush.msra.mxu0 %v807
  %931 = vmatmul.f32.gmra.mxu0 %v832
  %v932 = vpop.f32.mrf.mxu0
  %v933 = vadd.f32 0.0, %v932
  %934 = vmatmul.f32.gmra.mxu0 %v835
  %v935 = vpop.f32.mrf.mxu0
  %v936 = vadd.f32 0.0, %v935
  %937 = vmatmul.f32.gmra.mxu0 %v838
  %v938 = vpop.f32.mrf.mxu0
  %v939 = vadd.f32 0.0, %v938
  %940 = vmatmul.f32.gmra.mxu0 %v841
  %v941 = vpop.f32.mrf.mxu0
  %v942 = vadd.f32 0.0, %v941
  %943 = vmatmul.f32.gmra.mxu0 %v844
  %v944 = vpop.f32.mrf.mxu0
  %v945 = vadd.f32 0.0, %v944
  %946 = vmatmul.f32.gmra.mxu0 %v847
  %v947 = vpop.f32.mrf.mxu0
  %v948 = vadd.f32 0.0, %v947
  %949 = vmatmul.f32.gmra.mxu0 %v850
  %v950 = vpop.f32.mrf.mxu0
  %v951 = vadd.f32 0.0, %v950
  %952 = vmatmul.f32.gmra.mxu0 %v853
  %v953 = vpop.f32.mrf.mxu0
  %v954 = vadd.f32 0.0, %v953
  %955 = vmatmul.f32.gmra.mxu0 %v856
  %v956 = vpop.f32.mrf.mxu0
  %v957 = vadd.f32 0.0, %v956
  %958 = vmatmul.f32.gmra.mxu0 %v859
  %v959 = vpop.f32.mrf.mxu0
  %v960 = vadd.f32 0.0, %v959
  %961 = vmatmul.f32.gmra.mxu0 %v862
  %v962 = vpop.f32.mrf.mxu0
  %v963 = vadd.f32 0.0, %v962
  %964 = vmatmul.f32.gmra.mxu0 %v865
  %v965 = vpop.f32.mrf.mxu0
  %v966 = vadd.f32 0.0, %v965
  %967 = vmatmul.f32.gmra.mxu0 %v868
  %v968 = vpop.f32.mrf.mxu0
  %v969 = vadd.f32 0.0, %v968
  %970 = vmatmul.f32.gmra.mxu0 %v871
  %v971 = vpop.f32.mrf.mxu0
  %v972 = vadd.f32 0.0, %v971
  %973 = vmatmul.f32.gmra.mxu0 %v874
  %v974 = vpop.f32.mrf.mxu0
  %v975 = vadd.f32 0.0, %v974
  %976 = vmatmul.f32.gmra.mxu0 %v877
  %v977 = vpop.f32.mrf.mxu0
  %v978 = vadd.f32 0.0, %v977
  %979 = vmatmul.f32.gmra.mxu0 %v880
  %v980 = vpop.f32.mrf.mxu0
  %v981 = vadd.f32 0.0, %v980
  %982 = vmatmul.f32.gmra.mxu0 %v883
  %v983 = vpop.f32.mrf.mxu0
  %v984 = vadd.f32 0.0, %v983
  %985 = vmatmul.f32.gmra.mxu0 %v886
  %v986 = vpop.f32.mrf.mxu0
  %v987 = vadd.f32 0.0, %v986
  %988 = vmatmul.f32.gmra.mxu0 %v889
  %v989 = vpop.f32.mrf.mxu0
  %v990 = vadd.f32 0.0, %v989
  %991 = vmatmul.f32.gmra.mxu0 %v892
  %v992 = vpop.f32.mrf.mxu0
  %v993 = vadd.f32 0.0, %v992
  %994 = vmatmul.f32.gmra.mxu0 %v895
  %v995 = vpop.f32.mrf.mxu0
  %v996 = vadd.f32 0.0, %v995
  %997 = vmatmul.f32.gmra.mxu0 %v898
  %v998 = vpop.f32.mrf.mxu0
  %v999 = vadd.f32 0.0, %v998
  %1000 = vmatmul.f32.gmra.mxu0 %v901
  %v1001 = vpop.f32.mrf.mxu0
  %v1002 = vadd.f32 0.0, %v1001
  %1003 = vmatmul.f32.gmra.mxu0 %v904
  %v1004 = vpop.f32.mrf.mxu0
  %v1005 = vadd.f32 0.0, %v1004
  %1006 = vmatmul.f32.gmra.mxu0 %v907
  %v1007 = vpop.f32.mrf.mxu0
  %v1008 = vadd.f32 0.0, %v1007
  %1009 = vmatmul.f32.gmra.mxu0 %v910
  %v1010 = vpop.f32.mrf.mxu0
  %v1011 = vadd.f32 0.0, %v1010
  %1012 = vmatmul.f32.gmra.mxu0 %v913
  %v1013 = vpop.f32.mrf.mxu0
  %v1014 = vadd.f32 0.0, %v1013
  %1015 = vdwg.mxu0
  %1016 = vmatpush.msra.mxu0 0.0
  %1017 = vmatpush.msra.mxu0 0.0
  %1018 = vmatpush.msra.mxu0 0.0
  %1019 = vmatpush.msra.mxu0 0.0
  %1020 = vmatpush.msra.mxu0 %v830
  %1021 = vmatpush.msra.mxu0 %v828
  %1022 = vmatpush.msra.mxu0 %v826
  %1023 = vmatpush.msra.mxu0 %v824
  %1024 = vmatpush.msra.mxu0 %v822
  %1025 = vmatpush.msra.mxu0 %v820
  %1026 = vmatpush.msra.mxu0 %v818
  %1027 = vmatpush.msra.mxu0 %v816
  %1028 = vmatpush.msra.mxu0 %v814
  %1029 = vmatpush.msra.mxu0 %v812
  %1030 = vmatpush.msra.mxu0 %v810
  %1031 = vmatpush.msra.mxu0 %v808
  %1032 = vmatmul.f32.gmra.mxu0 %v832
  %v1033 = vpop.f32.mrf.mxu0
  %v1034 = vadd.f32 0.0, %v1033
  %1035 = vmatmul.f32.gmra.mxu0 %v835
  %v1036 = vpop.f32.mrf.mxu0
  %v1037 = vadd.f32 0.0, %v1036
  %1038 = vmatmul.f32.gmra.mxu0 %v838
  %v1039 = vpop.f32.mrf.mxu0
  %v1040 = vadd.f32 0.0, %v1039
  %1041 = vmatmul.f32.gmra.mxu0 %v841
  %v1042 = vpop.f32.mrf.mxu0
  %v1043 = vadd.f32 0.0, %v1042
  %1044 = vmatmul.f32.gmra.mxu0 %v844
  %v1045 = vpop.f32.mrf.mxu0
  %v1046 = vadd.f32 0.0, %v1045
  %1047 = vmatmul.f32.gmra.mxu0 %v847
  %v1048 = vpop.f32.mrf.mxu0
  %v1049 = vadd.f32 0.0, %v1048
  %1050 = vmatmul.f32.gmra.mxu0 %v850
  %v1051 = vpop.f32.mrf.mxu0
  %v1052 = vadd.f32 0.0, %v1051
  %1053 = vmatmul.f32.gmra.mxu0 %v853
  %v1054 = vpop.f32.mrf.mxu0
  %v1055 = vadd.f32 0.0, %v1054
  %1056 = vmatmul.f32.gmra.mxu0 %v856
  %v1057 = vpop.f32.mrf.mxu0
  %v1058 = vadd.f32 0.0, %v1057
  %1059 = vmatmul.f32.gmra.mxu0 %v859
  %v1060 = vpop.f32.mrf.mxu0
  %v1061 = vadd.f32 0.0, %v1060
  %1062 = vmatmul.f32.gmra.mxu0 %v862
  %v1063 = vpop.f32.mrf.mxu0
  %v1064 = vadd.f32 0.0, %v1063
  %1065 = vmatmul.f32.gmra.mxu0 %v865
  %v1066 = vpop.f32.mrf.mxu0
  %v1067 = vadd.f32 0.0, %v1066
  %1068 = vmatmul.f32.gmra.mxu0 %v868
  %v1069 = vpop.f32.mrf.mxu0
  %v1070 = vadd.f32 0.0, %v1069
  %1071 = vmatmul.f32.gmra.mxu0 %v871
  %v1072 = vpop.f32.mrf.mxu0
  %v1073 = vadd.f32 0.0, %v1072
  %1074 = vmatmul.f32.gmra.mxu0 %v874
  %v1075 = vpop.f32.mrf.mxu0
  %v1076 = vadd.f32 0.0, %v1075
  %1077 = vmatmul.f32.gmra.mxu0 %v877
  %v1078 = vpop.f32.mrf.mxu0
  %v1079 = vadd.f32 0.0, %v1078
  %1080 = vmatmul.f32.gmra.mxu0 %v880
  %v1081 = vpop.f32.mrf.mxu0
  %v1082 = vadd.f32 0.0, %v1081
  %1083 = vmatmul.f32.gmra.mxu0 %v883
  %v1084 = vpop.f32.mrf.mxu0
  %v1085 = vadd.f32 0.0, %v1084
  %1086 = vmatmul.f32.gmra.mxu0 %v886
  %v1087 = vpop.f32.mrf.mxu0
  %v1088 = vadd.f32 0.0, %v1087
  %1089 = vmatmul.f32.gmra.mxu0 %v889
  %v1090 = vpop.f32.mrf.mxu0
  %v1091 = vadd.f32 0.0, %v1090
  %1092 = vmatmul.f32.gmra.mxu0 %v892
  %v1093 = vpop.f32.mrf.mxu0
  %v1094 = vadd.f32 0.0, %v1093
  %1095 = vmatmul.f32.gmra.mxu0 %v895
  %v1096 = vpop.f32.mrf.mxu0
  %v1097 = vadd.f32 0.0, %v1096
  %1098 = vmatmul.f32.gmra.mxu0 %v898
  %v1099 = vpop.f32.mrf.mxu0
  %v1100 = vadd.f32 0.0, %v1099
  %1101 = vmatmul.f32.gmra.mxu0 %v901
  %v1102 = vpop.f32.mrf.mxu0
  %v1103 = vadd.f32 0.0, %v1102
  %1104 = vmatmul.f32.gmra.mxu0 %v904
  %v1105 = vpop.f32.mrf.mxu0
  %v1106 = vadd.f32 0.0, %v1105
  %1107 = vmatmul.f32.gmra.mxu0 %v907
  %v1108 = vpop.f32.mrf.mxu0
  %v1109 = vadd.f32 0.0, %v1108
  %1110 = vmatmul.f32.gmra.mxu0 %v910
  %v1111 = vpop.f32.mrf.mxu0
  %v1112 = vadd.f32 0.0, %v1111
  %1113 = vmatmul.f32.gmra.mxu0 %v913
  %v1114 = vpop.f32.mrf.mxu0
  %v1115 = vadd.f32 0.0, %v1114
  %1116 = vdwg.mxu0
  %v1118 = vsel %vm150, %v724, 0
  %v1121 = vsel %vm150, %v725, 0
  %v1124 = vsel %vm150, %v726, 0
  %v1127 = vsel %vm150, %v727, 0
  %v1130 = vsel %vm150, %v728, 0
  %v1133 = vsel %vm150, %v729, 0
  %v1136 = vsel %vm150, %v730, 0
  %v1139 = vsel %vm150, %v731, 0
  %v1142 = vsel %vm150, %v732, 0
  %v1145 = vsel %vm150, %v733, 0
  %v1148 = vsel %vm150, %v734, 0
  %v1151 = vsel %vm150, %v735, 0
  %v1154 = vsel %vm150, %v736, 0
  %v1157 = vsel %vm150, %v737, 0
  %v1160 = vsel %vm150, %v738, 0
  %v1163 = vsel %vm150, %v739, 0
  %v1166 = vsel %vm150, %v740, 0
  %v1169 = vsel %vm150, %v741, 0
  %v1172 = vsel %vm150, %v742, 0
  %v1175 = vsel %vm150, %v743, 0
  %v1178 = vsel %vm150, %v744, 0
  %v1181 = vsel %vm150, %v745, 0
  %v1184 = vsel %vm150, %v746, 0
  %v1187 = vsel %vm150, %v747, 0
  %v1190 = vsel %vm150, %v748, 0
  %v1193 = vsel %vm150, %v749, 0
  %v1196 = vsel %vm150, %v750, 0
  %v1199 = vsel %vm150, %v751, 0
  %1201 = vmatpush.msra.mxu0 0.0
  %1202 = vmatpush.msra.mxu0 0.0
  %1203 = vmatpush.msra.mxu0 0.0
  %1204 = vmatpush.msra.mxu0 0.0
  %1205 = vmatpush.msra.mxu0 %v775
  %1206 = vmatpush.msra.mxu0 %v773
  %1207 = vmatpush.msra.mxu0 %v771
  %1208 = vmatpush.msra.mxu0 %v769
  %1209 = vmatpush.msra.mxu0 %v767
  %1210 = vmatpush.msra.mxu0 %v765
  %1211 = vmatpush.msra.mxu0 %v763
  %1212 = vmatpush.msra.mxu0 %v761
  %1213 = vmatpush.msra.mxu0 %v759
  %1214 = vmatpush.msra.mxu0 %v757
  %1215 = vmatpush.msra.mxu0 %v755
  %1216 = vmatpush.msra.mxu0 %v753
  %1217 = vmatmul.f32.gmra.mxu0 %v1118
  %v1218 = vpop.f32.mrf.mxu0
  %v1219 = vadd.f32 %v933, %v1218
  %1220 = vmatmul.f32.gmra.mxu0 %v1121
  %v1221 = vpop.f32.mrf.mxu0
  %v1222 = vadd.f32 %v936, %v1221
  %1223 = vmatmul.f32.gmra.mxu0 %v1124
  %v1224 = vpop.f32.mrf.mxu0
  %v1225 = vadd.f32 %v939, %v1224
  %1226 = vmatmul.f32.gmra.mxu0 %v1127
  %v1227 = vpop.f32.mrf.mxu0
  %v1228 = vadd.f32 %v942, %v1227
  %1229 = vmatmul.f32.gmra.mxu0 %v1130
  %v1230 = vpop.f32.mrf.mxu0
  %v1231 = vadd.f32 %v945, %v1230
  %1232 = vmatmul.f32.gmra.mxu0 %v1133
  %v1233 = vpop.f32.mrf.mxu0
  %v1234 = vadd.f32 %v948, %v1233
  %1235 = vmatmul.f32.gmra.mxu0 %v1136
  %v1236 = vpop.f32.mrf.mxu0
  %v1237 = vadd.f32 %v951, %v1236
  %1238 = vmatmul.f32.gmra.mxu0 %v1139
  %v1239 = vpop.f32.mrf.mxu0
  %v1240 = vadd.f32 %v954, %v1239
  %1241 = vmatmul.f32.gmra.mxu0 %v1142
  %v1242 = vpop.f32.mrf.mxu0
  %v1243 = vadd.f32 %v957, %v1242
  %1244 = vmatmul.f32.gmra.mxu0 %v1145
  %v1245 = vpop.f32.mrf.mxu0
  %v1246 = vadd.f32 %v960, %v1245
  %1247 = vmatmul.f32.gmra.mxu0 %v1148
  %v1248 = vpop.f32.mrf.mxu0
  %v1249 = vadd.f32 %v963, %v1248
  %1250 = vmatmul.f32.gmra.mxu0 %v1151
  %v1251 = vpop.f32.mrf.mxu0
  %v1252 = vadd.f32 %v966, %v1251
  %1253 = vmatmul.f32.gmra.mxu0 %v1154
  %v1254 = vpop.f32.mrf.mxu0
  %v1255 = vadd.f32 %v969, %v1254
  %1256 = vmatmul.f32.gmra.mxu0 %v1157
  %v1257 = vpop.f32.mrf.mxu0
  %v1258 = vadd.f32 %v972, %v1257
  %1259 = vmatmul.f32.gmra.mxu0 %v1160
  %v1260 = vpop.f32.mrf.mxu0
  %v1261 = vadd.f32 %v975, %v1260
  %1262 = vmatmul.f32.gmra.mxu0 %v1163
  %v1263 = vpop.f32.mrf.mxu0
  %v1264 = vadd.f32 %v978, %v1263
  %1265 = vmatmul.f32.gmra.mxu0 %v1166
  %v1266 = vpop.f32.mrf.mxu0
  %v1267 = vadd.f32 %v981, %v1266
  %1268 = vmatmul.f32.gmra.mxu0 %v1169
  %v1269 = vpop.f32.mrf.mxu0
  %v1270 = vadd.f32 %v984, %v1269
  %1271 = vmatmul.f32.gmra.mxu0 %v1172
  %v1272 = vpop.f32.mrf.mxu0
  %v1273 = vadd.f32 %v987, %v1272
  %1274 = vmatmul.f32.gmra.mxu0 %v1175
  %v1275 = vpop.f32.mrf.mxu0
  %v1276 = vadd.f32 %v990, %v1275
  %1277 = vmatmul.f32.gmra.mxu0 %v1178
  %v1278 = vpop.f32.mrf.mxu0
  %v1279 = vadd.f32 %v993, %v1278
  %1280 = vmatmul.f32.gmra.mxu0 %v1181
  %v1281 = vpop.f32.mrf.mxu0
  %v1282 = vadd.f32 %v996, %v1281
  %1283 = vmatmul.f32.gmra.mxu0 %v1184
  %v1284 = vpop.f32.mrf.mxu0
  %v1285 = vadd.f32 %v999, %v1284
  %1286 = vmatmul.f32.gmra.mxu0 %v1187
  %v1287 = vpop.f32.mrf.mxu0
  %v1288 = vadd.f32 %v1002, %v1287
  %1289 = vmatmul.f32.gmra.mxu0 %v1190
  %v1290 = vpop.f32.mrf.mxu0
  %v1291 = vadd.f32 %v1005, %v1290
  %1292 = vmatmul.f32.gmra.mxu0 %v1193
  %v1293 = vpop.f32.mrf.mxu0
  %v1294 = vadd.f32 %v1008, %v1293
  %1295 = vmatmul.f32.gmra.mxu0 %v1196
  %v1296 = vpop.f32.mrf.mxu0
  %v1297 = vadd.f32 %v1011, %v1296
  %1298 = vmatmul.f32.gmra.mxu0 %v1199
  %v1299 = vpop.f32.mrf.mxu0
  %v1300 = vadd.f32 %v1014, %v1299
  %1301 = vdwg.mxu0
  %1302 = vmatpush.msra.mxu0 0.0
  %1303 = vmatpush.msra.mxu0 0.0
  %1304 = vmatpush.msra.mxu0 0.0
  %1305 = vmatpush.msra.mxu0 0.0
  %1306 = vmatpush.msra.mxu0 %v776
  %1307 = vmatpush.msra.mxu0 %v774
  %1308 = vmatpush.msra.mxu0 %v772
  %1309 = vmatpush.msra.mxu0 %v770
  %1310 = vmatpush.msra.mxu0 %v768
  %1311 = vmatpush.msra.mxu0 %v766
  %1312 = vmatpush.msra.mxu0 %v764
  %1313 = vmatpush.msra.mxu0 %v762
  %1314 = vmatpush.msra.mxu0 %v760
  %1315 = vmatpush.msra.mxu0 %v758
  %1316 = vmatpush.msra.mxu0 %v756
  %1317 = vmatpush.msra.mxu0 %v754
  %1318 = vmatmul.f32.gmra.mxu0 %v1118
  %v1319 = vpop.f32.mrf.mxu0
  %v1320 = vadd.f32 %v1034, %v1319
  %1321 = vmatmul.f32.gmra.mxu0 %v1121
  %v1322 = vpop.f32.mrf.mxu0
  %v1323 = vadd.f32 %v1037, %v1322
  %1324 = vmatmul.f32.gmra.mxu0 %v1124
  %v1325 = vpop.f32.mrf.mxu0
  %v1326 = vadd.f32 %v1040, %v1325
  %1327 = vmatmul.f32.gmra.mxu0 %v1127
  %v1328 = vpop.f32.mrf.mxu0
  %v1329 = vadd.f32 %v1043, %v1328
  %1330 = vmatmul.f32.gmra.mxu0 %v1130
  %v1331 = vpop.f32.mrf.mxu0
  %v1332 = vadd.f32 %v1046, %v1331
  %1333 = vmatmul.f32.gmra.mxu0 %v1133
  %v1334 = vpop.f32.mrf.mxu0
  %v1335 = vadd.f32 %v1049, %v1334
  %1336 = vmatmul.f32.gmra.mxu0 %v1136
  %v1337 = vpop.f32.mrf.mxu0
  %v1338 = vadd.f32 %v1052, %v1337
  %1339 = vmatmul.f32.gmra.mxu0 %v1139
  %v1340 = vpop.f32.mrf.mxu0
  %v1341 = vadd.f32 %v1055, %v1340
  %1342 = vmatmul.f32.gmra.mxu0 %v1142
  %v1343 = vpop.f32.mrf.mxu0
  %v1344 = vadd.f32 %v1058, %v1343
  %1345 = vmatmul.f32.gmra.mxu0 %v1145
  %v1346 = vpop.f32.mrf.mxu0
  %v1347 = vadd.f32 %v1061, %v1346
  %1348 = vmatmul.f32.gmra.mxu0 %v1148
  %v1349 = vpop.f32.mrf.mxu0
  %v1350 = vadd.f32 %v1064, %v1349
  %1351 = vmatmul.f32.gmra.mxu0 %v1151
  %v1352 = vpop.f32.mrf.mxu0
  %v1353 = vadd.f32 %v1067, %v1352
  %1354 = vmatmul.f32.gmra.mxu0 %v1154
  %v1355 = vpop.f32.mrf.mxu0
  %v1356 = vadd.f32 %v1070, %v1355
  %1357 = vmatmul.f32.gmra.mxu0 %v1157
  %v1358 = vpop.f32.mrf.mxu0
  %v1359 = vadd.f32 %v1073, %v1358
  %1360 = vmatmul.f32.gmra.mxu0 %v1160
  %v1361 = vpop.f32.mrf.mxu0
  %v1362 = vadd.f32 %v1076, %v1361
  %1363 = vmatmul.f32.gmra.mxu0 %v1163
  %v1364 = vpop.f32.mrf.mxu0
  %v1365 = vadd.f32 %v1079, %v1364
  %1366 = vmatmul.f32.gmra.mxu0 %v1166
  %v1367 = vpop.f32.mrf.mxu0
  %v1368 = vadd.f32 %v1082, %v1367
  %1369 = vmatmul.f32.gmra.mxu0 %v1169
  %v1370 = vpop.f32.mrf.mxu0
  %v1371 = vadd.f32 %v1085, %v1370
  %1372 = vmatmul.f32.gmra.mxu0 %v1172
  %v1373 = vpop.f32.mrf.mxu0
  %v1374 = vadd.f32 %v1088, %v1373
  %1375 = vmatmul.f32.gmra.mxu0 %v1175
  %v1376 = vpop.f32.mrf.mxu0
  %v1377 = vadd.f32 %v1091, %v1376
  %1378 = vmatmul.f32.gmra.mxu0 %v1178
  %v1379 = vpop.f32.mrf.mxu0
  %v1380 = vadd.f32 %v1094, %v1379
  %1381 = vmatmul.f32.gmra.mxu0 %v1181
  %v1382 = vpop.f32.mrf.mxu0
  %v1383 = vadd.f32 %v1097, %v1382
  %1384 = vmatmul.f32.gmra.mxu0 %v1184
  %v1385 = vpop.f32.mrf.mxu0
  %v1386 = vadd.f32 %v1100, %v1385
  %1387 = vmatmul.f32.gmra.mxu0 %v1187
  %v1388 = vpop.f32.mrf.mxu0
  %v1389 = vadd.f32 %v1103, %v1388
  %1390 = vmatmul.f32.gmra.mxu0 %v1190
  %v1391 = vpop.f32.mrf.mxu0
  %v1392 = vadd.f32 %v1106, %v1391
  %1393 = vmatmul.f32.gmra.mxu0 %v1193
  %v1394 = vpop.f32.mrf.mxu0
  %v1395 = vadd.f32 %v1109, %v1394
  %1396 = vmatmul.f32.gmra.mxu0 %v1196
  %v1397 = vpop.f32.mrf.mxu0
  %v1398 = vadd.f32 %v1112, %v1397
  %1399 = vmatmul.f32.gmra.mxu0 %v1199
  %v1400 = vpop.f32.mrf.mxu0
  %v1401 = vadd.f32 %v1115, %v1400
  %1402 = vdwg.mxu0
  %v1403 = vadd.f32 %v539, %v1219
  %v1404 = vadd.f32 %v640, %v1320
  %v1405 = vadd.f32 %v542, %v1222
  %v1406 = vadd.f32 %v643, %v1323
  %v1407 = vadd.f32 %v545, %v1225
  %v1408 = vadd.f32 %v646, %v1326
  %v1409 = vadd.f32 %v548, %v1228
  %v1410 = vadd.f32 %v649, %v1329
  %v1411 = vadd.f32 %v551, %v1231
  %v1412 = vadd.f32 %v652, %v1332
  %v1413 = vadd.f32 %v554, %v1234
  %v1414 = vadd.f32 %v655, %v1335
  %v1415 = vadd.f32 %v557, %v1237
  %v1416 = vadd.f32 %v658, %v1338
  %v1417 = vadd.f32 %v560, %v1240
  %v1418 = vadd.f32 %v661, %v1341
  %v1419 = vadd.f32 %v563, %v1243
  %v1420 = vadd.f32 %v664, %v1344
  %v1421 = vadd.f32 %v566, %v1246
  %v1422 = vadd.f32 %v667, %v1347
  %v1423 = vadd.f32 %v569, %v1249
  %v1424 = vadd.f32 %v670, %v1350
  %v1425 = vadd.f32 %v572, %v1252
  %v1426 = vadd.f32 %v673, %v1353
  %v1427 = vadd.f32 %v575, %v1255
  %v1428 = vadd.f32 %v676, %v1356
  %v1429 = vadd.f32 %v578, %v1258
  %v1430 = vadd.f32 %v679, %v1359
  %v1431 = vadd.f32 %v581, %v1261
  %v1432 = vadd.f32 %v682, %v1362
  %v1433 = vadd.f32 %v584, %v1264
  %v1434 = vadd.f32 %v685, %v1365
  %v1435 = vadd.f32 %v587, %v1267
  %v1436 = vadd.f32 %v688, %v1368
  %v1437 = vadd.f32 %v590, %v1270
  %v1438 = vadd.f32 %v691, %v1371
  %v1439 = vadd.f32 %v593, %v1273
  %v1440 = vadd.f32 %v694, %v1374
  %v1441 = vadd.f32 %v596, %v1276
  %v1442 = vadd.f32 %v697, %v1377
  %v1443 = vadd.f32 %v599, %v1279
  %v1444 = vadd.f32 %v700, %v1380
  %v1445 = vadd.f32 %v602, %v1282
  %v1446 = vadd.f32 %v703, %v1383
  %v1447 = vadd.f32 %v605, %v1285
  %v1448 = vadd.f32 %v706, %v1386
  %v1449 = vadd.f32 %v608, %v1288
  %v1450 = vadd.f32 %v709, %v1389
  %v1451 = vadd.f32 %v611, %v1291
  %v1452 = vadd.f32 %v712, %v1392
  %v1453 = vadd.f32 %v614, %v1294
  %v1454 = vadd.f32 %v715, %v1395
  %v1455 = vadd.f32 %v617, %v1297
  %v1456 = vadd.f32 %v718, %v1398
  %v1457 = vadd.f32 %v620, %v1300
  %v1458 = vadd.f32 %v721, %v1401
  %s1459 = scalar_lea.vmem %s0, 32
  %v1460 = vld [vmem:[%s1459] sm:$0xff]
  %v1461 = vld [vmem:[%s1459 + $0x8] sm:$0xff]
  %v1462 = vld [vmem:[%s1459 + $0x10] sm:$0xff]
  %v1463 = vld [vmem:[%s1459 + $0x18] sm:$0xff]
  %v1464 = vld [vmem:[%s1459 + $0x20] sm:$0xff]
  %v1465 = vld [vmem:[%s1459 + $0x28] sm:$0xff]
  %v1466 = vld [vmem:[%s1459 + $0x30] sm:$0xff]
  %v1467 = vld [vmem:[%s1459 + $0x38] sm:$0xff]
  %v1468 = vld [vmem:[%s1459 + $0x40] sm:$0xff]
  %v1469 = vld [vmem:[%s1459 + $0x48] sm:$0xff]
  %v1470 = vld [vmem:[%s1459 + $0x50] sm:$0xff]
  %v1471 = vld [vmem:[%s1459 + $0x58] sm:$0xff]
  %v1472 = vld [vmem:[%s1459 + $0x60] sm:$0xff]
  %v1473 = vld [vmem:[%s1459 + $0x68] sm:$0xff]
  %v1474 = vld [vmem:[%s1459 + $0x70] sm:$0xff]
  %v1475 = vld [vmem:[%s1459 + $0x78] sm:$0xff]
  %v1476 = vld [vmem:[%s1459 + $0x80] sm:$0xff]
  %v1477 = vld [vmem:[%s1459 + $0x88] sm:$0xff]
  %v1478 = vld [vmem:[%s1459 + $0x90] sm:$0xff]
  %v1479 = vld [vmem:[%s1459 + $0x98] sm:$0xff]
  %v1480 = vld [vmem:[%s1459 + $0xa0] sm:$0xff]
  %v1481 = vld [vmem:[%s1459 + $0xa8] sm:$0xff]
  %v1482 = vld [vmem:[%s1459 + $0xb0] sm:$0xff]
  %v1483 = vld [vmem:[%s1459 + $0xb8] sm:$0xff]
  %v1484 = vld [vmem:[%s1459 + $0xc0] sm:$0xff]
  %v1485 = vld [vmem:[%s1459 + $0xc8] sm:$0xff]
  %v1486 = vld [vmem:[%s1459 + $0xd0] sm:$0xff]
  %v1487 = vld [vmem:[%s1459 + $0xd8] sm:$0xff]
  %s1488 = scalar_lea.vmem %s1, 768
  %v1489 = vld [vmem:[%s1488] sm:$0xff]
  %v1490 = vld [vmem:[%s1488 + $0x8] sm:$0xff]
  %v1491 = vld [vmem:[%s1488 + $0x10] sm:$0xff]
  %v1492 = vld [vmem:[%s1488 + $0x18] sm:$0xff]
  %v1493 = vld [vmem:[%s1488 + $0x20] sm:$0xff]
  %v1494 = vld [vmem:[%s1488 + $0x28] sm:$0xff]
  %v1495 = vld [vmem:[%s1488 + $0x30] sm:$0xff]
  %v1496 = vld [vmem:[%s1488 + $0x38] sm:$0xff]
  %v1497 = vld [vmem:[%s1488 + $0x40] sm:$0xff]
  %v1498 = vld [vmem:[%s1488 + $0x48] sm:$0xff]
  %v1499 = vld [vmem:[%s1488 + $0x50] sm:$0xff]
  %v1500 = vld [vmem:[%s1488 + $0x58] sm:$0xff]
  %v1501 = vld [vmem:[%s1488 + $0x60] sm:$0xff]
  %v1502 = vld [vmem:[%s1488 + $0x68] sm:$0xff]
  %v1503 = vld [vmem:[%s1488 + $0x70] sm:$0xff]
  %v1504 = vld [vmem:[%s1488 + $0x78] sm:$0xff]
  %v1505 = vld [vmem:[%s1488 + $0x80] sm:$0xff]
  %v1506 = vld [vmem:[%s1488 + $0x88] sm:$0xff]
  %v1507 = vld [vmem:[%s1488 + $0x90] sm:$0xff]
  %v1508 = vld [vmem:[%s1488 + $0x98] sm:$0xff]
  %v1509 = vld [vmem:[%s1488 + $0xa0] sm:$0xff]
  %v1510 = vld [vmem:[%s1488 + $0xa8] sm:$0xff]
  %v1511 = vld [vmem:[%s1488 + $0xb0] sm:$0xff]
  %v1512 = vld [vmem:[%s1488 + $0xb8] sm:$0xff]
  %v1514 = vsel %vm150, %v1460, 0
  %v1517 = vsel %vm150, %v1461, 0
  %v1520 = vsel %vm150, %v1462, 0
  %v1523 = vsel %vm150, %v1463, 0
  %v1526 = vsel %vm150, %v1464, 0
  %v1529 = vsel %vm150, %v1465, 0
  %v1532 = vsel %vm150, %v1466, 0
  %v1535 = vsel %vm150, %v1467, 0
  %v1538 = vsel %vm150, %v1468, 0
  %v1541 = vsel %vm150, %v1469, 0
  %v1544 = vsel %vm150, %v1470, 0
  %v1547 = vsel %vm150, %v1471, 0
  %v1550 = vsel %vm150, %v1472, 0
  %v1553 = vsel %vm150, %v1473, 0
  %v1556 = vsel %vm150, %v1474, 0
  %v1559 = vsel %vm150, %v1475, 0
  %v1562 = vsel %vm150, %v1476, 0
  %v1565 = vsel %vm150, %v1477, 0
  %v1568 = vsel %vm150, %v1478, 0
  %v1571 = vsel %vm150, %v1479, 0
  %v1574 = vsel %vm150, %v1480, 0
  %v1577 = vsel %vm150, %v1481, 0
  %v1580 = vsel %vm150, %v1482, 0
  %v1583 = vsel %vm150, %v1483, 0
  %v1586 = vsel %vm150, %v1484, 0
  %v1589 = vsel %vm150, %v1485, 0
  %v1592 = vsel %vm150, %v1486, 0
  %v1595 = vsel %vm150, %v1487, 0
  %1597 = vmatpush.msra.mxu0 0.0
  %1598 = vmatpush.msra.mxu0 0.0
  %1599 = vmatpush.msra.mxu0 0.0
  %1600 = vmatpush.msra.mxu0 0.0
  %1601 = vmatpush.msra.mxu0 %v1511
  %1602 = vmatpush.msra.mxu0 %v1509
  %1603 = vmatpush.msra.mxu0 %v1507
  %1604 = vmatpush.msra.mxu0 %v1505
  %1605 = vmatpush.msra.mxu0 %v1503
  %1606 = vmatpush.msra.mxu0 %v1501
  %1607 = vmatpush.msra.mxu0 %v1499
  %1608 = vmatpush.msra.mxu0 %v1497
  %1609 = vmatpush.msra.mxu0 %v1495
  %1610 = vmatpush.msra.mxu0 %v1493
  %1611 = vmatpush.msra.mxu0 %v1491
  %1612 = vmatpush.msra.mxu0 %v1489
  %1613 = vmatmul.f32.gmra.mxu0 %v1514
  %v1614 = vpop.f32.mrf.mxu0
  %v1615 = vadd.f32 0.0, %v1614
  %1616 = vmatmul.f32.gmra.mxu0 %v1517
  %v1617 = vpop.f32.mrf.mxu0
  %v1618 = vadd.f32 0.0, %v1617
  %1619 = vmatmul.f32.gmra.mxu0 %v1520
  %v1620 = vpop.f32.mrf.mxu0
  %v1621 = vadd.f32 0.0, %v1620
  %1622 = vmatmul.f32.gmra.mxu0 %v1523
  %v1623 = vpop.f32.mrf.mxu0
  %v1624 = vadd.f32 0.0, %v1623
  %1625 = vmatmul.f32.gmra.mxu0 %v1526
  %v1626 = vpop.f32.mrf.mxu0
  %v1627 = vadd.f32 0.0, %v1626
  %1628 = vmatmul.f32.gmra.mxu0 %v1529
  %v1629 = vpop.f32.mrf.mxu0
  %v1630 = vadd.f32 0.0, %v1629
  %1631 = vmatmul.f32.gmra.mxu0 %v1532
  %v1632 = vpop.f32.mrf.mxu0
  %v1633 = vadd.f32 0.0, %v1632
  %1634 = vmatmul.f32.gmra.mxu0 %v1535
  %v1635 = vpop.f32.mrf.mxu0
  %v1636 = vadd.f32 0.0, %v1635
  %1637 = vmatmul.f32.gmra.mxu0 %v1538
  %v1638 = vpop.f32.mrf.mxu0
  %v1639 = vadd.f32 0.0, %v1638
  %1640 = vmatmul.f32.gmra.mxu0 %v1541
  %v1641 = vpop.f32.mrf.mxu0
  %v1642 = vadd.f32 0.0, %v1641
  %1643 = vmatmul.f32.gmra.mxu0 %v1544
  %v1644 = vpop.f32.mrf.mxu0
  %v1645 = vadd.f32 0.0, %v1644
  %1646 = vmatmul.f32.gmra.mxu0 %v1547
  %v1647 = vpop.f32.mrf.mxu0
  %v1648 = vadd.f32 0.0, %v1647
  %1649 = vmatmul.f32.gmra.mxu0 %v1550
  %v1650 = vpop.f32.mrf.mxu0
  %v1651 = vadd.f32 0.0, %v1650
  %1652 = vmatmul.f32.gmra.mxu0 %v1553
  %v1653 = vpop.f32.mrf.mxu0
  %v1654 = vadd.f32 0.0, %v1653
  %1655 = vmatmul.f32.gmra.mxu0 %v1556
  %v1656 = vpop.f32.mrf.mxu0
  %v1657 = vadd.f32 0.0, %v1656
  %1658 = vmatmul.f32.gmra.mxu0 %v1559
  %v1659 = vpop.f32.mrf.mxu0
  %v1660 = vadd.f32 0.0, %v1659
  %1661 = vmatmul.f32.gmra.mxu0 %v1562
  %v1662 = vpop.f32.mrf.mxu0
  %v1663 = vadd.f32 0.0, %v1662
  %1664 = vmatmul.f32.gmra.mxu0 %v1565
  %v1665 = vpop.f32.mrf.mxu0
  %v1666 = vadd.f32 0.0, %v1665
  %1667 = vmatmul.f32.gmra.mxu0 %v1568
  %v1668 = vpop.f32.mrf.mxu0
  %v1669 = vadd.f32 0.0, %v1668
  %1670 = vmatmul.f32.gmra.mxu0 %v1571
  %v1671 = vpop.f32.mrf.mxu0
  %v1672 = vadd.f32 0.0, %v1671
  %1673 = vmatmul.f32.gmra.mxu0 %v1574
  %v1674 = vpop.f32.mrf.mxu0
  %v1675 = vadd.f32 0.0, %v1674
  %1676 = vmatmul.f32.gmra.mxu0 %v1577
  %v1677 = vpop.f32.mrf.mxu0
  %v1678 = vadd.f32 0.0, %v1677
  %1679 = vmatmul.f32.gmra.mxu0 %v1580
  %v1680 = vpop.f32.mrf.mxu0
  %v1681 = vadd.f32 0.0, %v1680
  %1682 = vmatmul.f32.gmra.mxu0 %v1583
  %v1683 = vpop.f32.mrf.mxu0
  %v1684 = vadd.f32 0.0, %v1683
  %1685 = vmatmul.f32.gmra.mxu0 %v1586
  %v1686 = vpop.f32.mrf.mxu0
  %v1687 = vadd.f32 0.0, %v1686
  %1688 = vmatmul.f32.gmra.mxu0 %v1589
  %v1689 = vpop.f32.mrf.mxu0
  %v1690 = vadd.f32 0.0, %v1689
  %1691 = vmatmul.f32.gmra.mxu0 %v1592
  %v1692 = vpop.f32.mrf.mxu0
  %v1693 = vadd.f32 0.0, %v1692
  %1694 = vmatmul.f32.gmra.mxu0 %v1595
  %v1695 = vpop.f32.mrf.mxu0
  %v1696 = vadd.f32 0.0, %v1695
  %1697 = vdwg.mxu0
  %1698 = vmatpush.msra.mxu0 0.0
  %1699 = vmatpush.msra.mxu0 0.0
  %1700 = vmatpush.msra.mxu0 0.0
  %1701 = vmatpush.msra.mxu0 0.0
  %1702 = vmatpush.msra.mxu0 %v1512
  %1703 = vmatpush.msra.mxu0 %v1510
  %1704 = vmatpush.msra.mxu0 %v1508
  %1705 = vmatpush.msra.mxu0 %v1506
  %1706 = vmatpush.msra.mxu0 %v1504
  %1707 = vmatpush.msra.mxu0 %v1502
  %1708 = vmatpush.msra.mxu0 %v1500
  %1709 = vmatpush.msra.mxu0 %v1498
  %1710 = vmatpush.msra.mxu0 %v1496
  %1711 = vmatpush.msra.mxu0 %v1494
  %1712 = vmatpush.msra.mxu0 %v1492
  %1713 = vmatpush.msra.mxu0 %v1490
  %1714 = vmatmul.f32.gmra.mxu0 %v1514
  %v1715 = vpop.f32.mrf.mxu0
  %v1716 = vadd.f32 0.0, %v1715
  %1717 = vmatmul.f32.gmra.mxu0 %v1517
  %v1718 = vpop.f32.mrf.mxu0
  %v1719 = vadd.f32 0.0, %v1718
  %1720 = vmatmul.f32.gmra.mxu0 %v1520
  %v1721 = vpop.f32.mrf.mxu0
  %v1722 = vadd.f32 0.0, %v1721
  %1723 = vmatmul.f32.gmra.mxu0 %v1523
  %v1724 = vpop.f32.mrf.mxu0
  %v1725 = vadd.f32 0.0, %v1724
  %1726 = vmatmul.f32.gmra.mxu0 %v1526
  %v1727 = vpop.f32.mrf.mxu0
  %v1728 = vadd.f32 0.0, %v1727
  %1729 = vmatmul.f32.gmra.mxu0 %v1529
  %v1730 = vpop.f32.mrf.mxu0
  %v1731 = vadd.f32 0.0, %v1730
  %1732 = vmatmul.f32.gmra.mxu0 %v1532
  %v1733 = vpop.f32.mrf.mxu0
  %v1734 = vadd.f32 0.0, %v1733
  %1735 = vmatmul.f32.gmra.mxu0 %v1535
  %v1736 = vpop.f32.mrf.mxu0
  %v1737 = vadd.f32 0.0, %v1736
  %1738 = vmatmul.f32.gmra.mxu0 %v1538
  %v1739 = vpop.f32.mrf.mxu0
  %v1740 = vadd.f32 0.0, %v1739
  %1741 = vmatmul.f32.gmra.mxu0 %v1541
  %v1742 = vpop.f32.mrf.mxu0
  %v1743 = vadd.f32 0.0, %v1742
  %1744 = vmatmul.f32.gmra.mxu0 %v1544
  %v1745 = vpop.f32.mrf.mxu0
  %v1746 = vadd.f32 0.0, %v1745
  %1747 = vmatmul.f32.gmra.mxu0 %v1547
  %v1748 = vpop.f32.mrf.mxu0
  %v1749 = vadd.f32 0.0, %v1748
  %1750 = vmatmul.f32.gmra.mxu0 %v1550
  %v1751 = vpop.f32.mrf.mxu0
  %v1752 = vadd.f32 0.0, %v1751
  %1753 = vmatmul.f32.gmra.mxu0 %v1553
  %v1754 = vpop.f32.mrf.mxu0
  %v1755 = vadd.f32 0.0, %v1754
  %1756 = vmatmul.f32.gmra.mxu0 %v1556
  %v1757 = vpop.f32.mrf.mxu0
  %v1758 = vadd.f32 0.0, %v1757
  %1759 = vmatmul.f32.gmra.mxu0 %v1559
  %v1760 = vpop.f32.mrf.mxu0
  %v1761 = vadd.f32 0.0, %v1760
  %1762 = vmatmul.f32.gmra.mxu0 %v1562
  %v1763 = vpop.f32.mrf.mxu0
  %v1764 = vadd.f32 0.0, %v1763
  %1765 = vmatmul.f32.gmra.mxu0 %v1565
  %v1766 = vpop.f32.mrf.mxu0
  %v1767 = vadd.f32 0.0, %v1766
  %1768 = vmatmul.f32.gmra.mxu0 %v1568
  %v1769 = vpop.f32.mrf.mxu0
  %v1770 = vadd.f32 0.0, %v1769
  %1771 = vmatmul.f32.gmra.mxu0 %v1571
  %v1772 = vpop.f32.mrf.mxu0
  %v1773 = vadd.f32 0.0, %v1772
  %1774 = vmatmul.f32.gmra.mxu0 %v1574
  %v1775 = vpop.f32.mrf.mxu0
  %v1776 = vadd.f32 0.0, %v1775
  %1777 = vmatmul.f32.gmra.mxu0 %v1577
  %v1778 = vpop.f32.mrf.mxu0
  %v1779 = vadd.f32 0.0, %v1778
  %1780 = vmatmul.f32.gmra.mxu0 %v1580
  %v1781 = vpop.f32.mrf.mxu0
  %v1782 = vadd.f32 0.0, %v1781
  %1783 = vmatmul.f32.gmra.mxu0 %v1583
  %v1784 = vpop.f32.mrf.mxu0
  %v1785 = vadd.f32 0.0, %v1784
  %1786 = vmatmul.f32.gmra.mxu0 %v1586
  %v1787 = vpop.f32.mrf.mxu0
  %v1788 = vadd.f32 0.0, %v1787
  %1789 = vmatmul.f32.gmra.mxu0 %v1589
  %v1790 = vpop.f32.mrf.mxu0
  %v1791 = vadd.f32 0.0, %v1790
  %1792 = vmatmul.f32.gmra.mxu0 %v1592
  %v1793 = vpop.f32.mrf.mxu0
  %v1794 = vadd.f32 0.0, %v1793
  %1795 = vmatmul.f32.gmra.mxu0 %v1595
  %v1796 = vpop.f32.mrf.mxu0
  %v1797 = vadd.f32 0.0, %v1796
  %1798 = vdwg.mxu0
  %v1799 = vadd.f32 %v1403, %v1615
  %v1800 = vadd.f32 %v1404, %v1716
  %v1801 = vadd.f32 %v1405, %v1618
  %v1802 = vadd.f32 %v1406, %v1719
  %v1803 = vadd.f32 %v1407, %v1621
  %v1804 = vadd.f32 %v1408, %v1722
  %v1805 = vadd.f32 %v1409, %v1624
  %v1806 = vadd.f32 %v1410, %v1725
  %v1807 = vadd.f32 %v1411, %v1627
  %v1808 = vadd.f32 %v1412, %v1728
  %v1809 = vadd.f32 %v1413, %v1630
  %v1810 = vadd.f32 %v1414, %v1731
  %v1811 = vadd.f32 %v1415, %v1633
  %v1812 = vadd.f32 %v1416, %v1734
  %v1813 = vadd.f32 %v1417, %v1636
  %v1814 = vadd.f32 %v1418, %v1737
  %v1815 = vadd.f32 %v1419, %v1639
  %v1816 = vadd.f32 %v1420, %v1740
  %v1817 = vadd.f32 %v1421, %v1642
  %v1818 = vadd.f32 %v1422, %v1743
  %v1819 = vadd.f32 %v1423, %v1645
  %v1820 = vadd.f32 %v1424, %v1746
  %v1821 = vadd.f32 %v1425, %v1648
  %v1822 = vadd.f32 %v1426, %v1749
  %v1823 = vadd.f32 %v1427, %v1651
  %v1824 = vadd.f32 %v1428, %v1752
  %v1825 = vadd.f32 %v1429, %v1654
  %v1826 = vadd.f32 %v1430, %v1755
  %v1827 = vadd.f32 %v1431, %v1657
  %v1828 = vadd.f32 %v1432, %v1758
  %v1829 = vadd.f32 %v1433, %v1660
  %v1830 = vadd.f32 %v1434, %v1761
  %v1831 = vadd.f32 %v1435, %v1663
  %v1832 = vadd.f32 %v1436, %v1764
  %v1833 = vadd.f32 %v1437, %v1666
  %v1834 = vadd.f32 %v1438, %v1767
  %v1835 = vadd.f32 %v1439, %v1669
  %v1836 = vadd.f32 %v1440, %v1770
  %v1837 = vadd.f32 %v1441, %v1672
  %v1838 = vadd.f32 %v1442, %v1773
  %v1839 = vadd.f32 %v1443, %v1675
  %v1840 = vadd.f32 %v1444, %v1776
  %v1841 = vadd.f32 %v1445, %v1678
  %v1842 = vadd.f32 %v1446, %v1779
  %v1843 = vadd.f32 %v1447, %v1681
  %v1844 = vadd.f32 %v1448, %v1782
  %v1845 = vadd.f32 %v1449, %v1684
  %v1846 = vadd.f32 %v1450, %v1785
  %v1847 = vadd.f32 %v1451, %v1687
  %v1848 = vadd.f32 %v1452, %v1788
  %v1849 = vadd.f32 %v1453, %v1690
  %v1850 = vadd.f32 %v1454, %v1791
  %v1851 = vadd.f32 %v1455, %v1693
  %v1852 = vadd.f32 %v1456, %v1794
  %v1853 = vadd.f32 %v1457, %v1696
  %v1854 = vadd.f32 %v1458, %v1797
  %v1855 = vld [vmem:[%s2] sm:$0x3]
  %v1857 = vperm.slane %v1855, 0
  %v1858 = vperm.slane %v1855, 1
  %v1861 = vadd.f32 %v1799, %v1857
  %v1862 = vadd.f32 %v1800, %v1858
  %v1863 = vadd.f32 %v1801, %v1857
  %v1864 = vadd.f32 %v1802, %v1858
  %v1865 = vadd.f32 %v1803, %v1857
  %v1866 = vadd.f32 %v1804, %v1858
  %v1867 = vadd.f32 %v1805, %v1857
  %v1868 = vadd.f32 %v1806, %v1858
  %v1869 = vadd.f32 %v1807, %v1857
  %v1870 = vadd.f32 %v1808, %v1858
  %v1871 = vadd.f32 %v1809, %v1857
  %v1872 = vadd.f32 %v1810, %v1858
  %v1873 = vadd.f32 %v1811, %v1857
  %v1874 = vadd.f32 %v1812, %v1858
  %v1875 = vadd.f32 %v1813, %v1857
  %v1876 = vadd.f32 %v1814, %v1858
  %v1877 = vadd.f32 %v1815, %v1857
  %v1878 = vadd.f32 %v1816, %v1858
  %v1879 = vadd.f32 %v1817, %v1857
  %v1880 = vadd.f32 %v1818, %v1858
  %v1881 = vadd.f32 %v1819, %v1857
  %v1882 = vadd.f32 %v1820, %v1858
  %v1883 = vadd.f32 %v1821, %v1857
  %v1884 = vadd.f32 %v1822, %v1858
  %v1885 = vadd.f32 %v1823, %v1857
  %v1886 = vadd.f32 %v1824, %v1858
  %v1887 = vadd.f32 %v1825, %v1857
  %v1888 = vadd.f32 %v1826, %v1858
  %v1889 = vadd.f32 %v1827, %v1857
  %v1890 = vadd.f32 %v1828, %v1858
  %v1891 = vadd.f32 %v1829, %v1857
  %v1892 = vadd.f32 %v1830, %v1858
  %v1893 = vadd.f32 %v1831, %v1857
  %v1894 = vadd.f32 %v1832, %v1858
  %v1895 = vadd.f32 %v1833, %v1857
  %v1896 = vadd.f32 %v1834, %v1858
  %v1897 = vadd.f32 %v1835, %v1857
  %v1898 = vadd.f32 %v1836, %v1858
  %v1899 = vadd.f32 %v1837, %v1857
  %v1900 = vadd.f32 %v1838, %v1858
  %v1901 = vadd.f32 %v1839, %v1857
  %v1902 = vadd.f32 %v1840, %v1858
  %v1903 = vadd.f32 %v1841, %v1857
  %v1904 = vadd.f32 %v1842, %v1858
  %v1905 = vadd.f32 %v1843, %v1857
  %v1906 = vadd.f32 %v1844, %v1858
  %v1907 = vadd.f32 %v1845, %v1857
  %v1908 = vadd.f32 %v1846, %v1858
  %v1909 = vadd.f32 %v1847, %v1857
  %v1910 = vadd.f32 %v1848, %v1858
  %v1911 = vadd.f32 %v1849, %v1857
  %v1912 = vadd.f32 %v1850, %v1858
  %v1913 = vadd.f32 %v1851, %v1857
  %v1914 = vadd.f32 %v1852, %v1858
  %v1915 = vadd.f32 %v1853, %v1857
  %v1916 = vadd.f32 %v1854, %v1858
  %v1917 = vmax.f32 %v1861, 0.0
  %v1918 = vmax.f32 %v1862, 0.0
  %v1919 = vmax.f32 %v1863, 0.0
  %v1920 = vmax.f32 %v1864, 0.0
  %v1921 = vmax.f32 %v1865, 0.0
  %v1922 = vmax.f32 %v1866, 0.0
  %v1923 = vmax.f32 %v1867, 0.0
  %v1924 = vmax.f32 %v1868, 0.0
  %v1925 = vmax.f32 %v1869, 0.0
  %v1926 = vmax.f32 %v1870, 0.0
  %v1927 = vmax.f32 %v1871, 0.0
  %v1928 = vmax.f32 %v1872, 0.0
  %v1929 = vmax.f32 %v1873, 0.0
  %v1930 = vmax.f32 %v1874, 0.0
  %v1931 = vmax.f32 %v1875, 0.0
  %v1932 = vmax.f32 %v1876, 0.0
  %v1933 = vmax.f32 %v1877, 0.0
  %v1934 = vmax.f32 %v1878, 0.0
  %v1935 = vmax.f32 %v1879, 0.0
  %v1936 = vmax.f32 %v1880, 0.0
  %v1937 = vmax.f32 %v1881, 0.0
  %v1938 = vmax.f32 %v1882, 0.0
  %v1939 = vmax.f32 %v1883, 0.0
  %v1940 = vmax.f32 %v1884, 0.0
  %v1941 = vmax.f32 %v1885, 0.0
  %v1942 = vmax.f32 %v1886, 0.0
  %v1943 = vmax.f32 %v1887, 0.0
  %v1944 = vmax.f32 %v1888, 0.0
  %v1945 = vmax.f32 %v1889, 0.0
  %v1946 = vmax.f32 %v1890, 0.0
  %v1947 = vmax.f32 %v1891, 0.0
  %v1948 = vmax.f32 %v1892, 0.0
  %v1949 = vmax.f32 %v1893, 0.0
  %v1950 = vmax.f32 %v1894, 0.0
  %v1951 = vmax.f32 %v1895, 0.0
  %v1952 = vmax.f32 %v1896, 0.0
  %v1953 = vmax.f32 %v1897, 0.0
  %v1954 = vmax.f32 %v1898, 0.0
  %v1955 = vmax.f32 %v1899, 0.0
  %v1956 = vmax.f32 %v1900, 0.0
  %v1957 = vmax.f32 %v1901, 0.0
  %v1958 = vmax.f32 %v1902, 0.0
  %v1959 = vmax.f32 %v1903, 0.0
  %v1960 = vmax.f32 %v1904, 0.0
  %v1961 = vmax.f32 %v1905, 0.0
  %v1962 = vmax.f32 %v1906, 0.0
  %v1963 = vmax.f32 %v1907, 0.0
  %v1964 = vmax.f32 %v1908, 0.0
  %v1965 = vmax.f32 %v1909, 0.0
  %v1966 = vmax.f32 %v1910, 0.0
  %v1967 = vmax.f32 %v1911, 0.0
  %v1968 = vmax.f32 %v1912, 0.0
  %v1969 = vmax.f32 %v1913, 0.0
  %v1970 = vmax.f32 %v1914, 0.0
  %v1971 = vmax.f32 %v1915, 0.0
  %v1972 = vmax.f32 %v1916, 0.0
  %v1973 = vmax.f32 %v1917, %v1919
  %v1974 = vmax.f32 %v1918, %v1920
  %v1975 = vmax.f32 %v1921, %v1923
  %v1976 = vmax.f32 %v1922, %v1924
  %v1977 = vmax.f32 %v1925, %v1927
  %v1978 = vmax.f32 %v1926, %v1928
  %v1979 = vmax.f32 %v1929, %v1931
  %v1980 = vmax.f32 %v1930, %v1932
  %v1981 = vmax.f32 %v1933, %v1935
  %v1982 = vmax.f32 %v1934, %v1936
  %v1983 = vmax.f32 %v1937, %v1939
  %v1984 = vmax.f32 %v1938, %v1940
  %v1985 = vmax.f32 %v1941, %v1943
  %v1986 = vmax.f32 %v1942, %v1944
  %v1987 = vmax.f32 %v1945, %v1947
  %v1988 = vmax.f32 %v1946, %v1948
  %v1989 = vmax.f32 %v1949, %v1951
  %v1990 = vmax.f32 %v1950, %v1952
  %v1991 = vmax.f32 %v1953, %v1955
  %v1992 = vmax.f32 %v1954, %v1956
  %v1993 = vmax.f32 %v1957, %v1959
  %v1994 = vmax.f32 %v1958, %v1960
  %v1995 = vmax.f32 %v1961, %v1963
  %v1996 = vmax.f32 %v1962, %v1964
  %v1997 = vmax.f32 %v1965, %v1967
  %v1998 = vmax.f32 %v1966, %v1968
  %v1999 = vmax.f32 %v1969, %v1971
  %v2000 = vmax.f32 %v1970, %v1972
  %v2001 = vld [vmem:[%s3] sm:$0xff]
  %v2002 = vld [vmem:[%s3 + $0x8] sm:$0xff]
  %v2003 = vld [vmem:[%s3 + $0x10] sm:$0xff]
  %v2004 = vld [vmem:[%s3 + $0x18] sm:$0xff]
  %v2005 = vld [vmem:[%s3 + $0x20] sm:$0xff]
  %v2006 = vld [vmem:[%s3 + $0x28] sm:$0xff]
  %v2007 = vld [vmem:[%s3 + $0x30] sm:$0xff]
  %v2008 = vld [vmem:[%s3 + $0x38] sm:$0xff]
  %v2009 = vld [vmem:[%s3 + $0x40] sm:$0xff]
  %v2010 = vld [vmem:[%s3 + $0x48] sm:$0xff]
  %v2011 = vld [vmem:[%s3 + $0x50] sm:$0xff]
  %v2012 = vld [vmem:[%s3 + $0x58] sm:$0xff]
  %v2013 = vld [vmem:[%s3 + $0x60] sm:$0xff]
  %v2014 = vld [vmem:[%s3 + $0x68] sm:$0xff]
  %v2015 = vld [vmem:[%s3 + $0x70] sm:$0xff]
  %v2016 = vld [vmem:[%s3 + $0x78] sm:$0xff]
  %v2017 = vld [vmem:[%s3 + $0x80] sm:$0xff]
  %v2018 = vld [vmem:[%s3 + $0x88] sm:$0xff]
  %v2019 = vld [vmem:[%s3 + $0x90] sm:$0xff]
  %v2020 = vld [vmem:[%s3 + $0x98] sm:$0xff]
  %v2021 = vld [vmem:[%s3 + $0xa0] sm:$0xff]
  %vm2022 = vcmask 326656
  %v2024 = vsel %vm2022, %v1974, 0
  %v2027 = vsel %vm2022, %v1976, 0
  %v2030 = vsel %vm2022, %v1978, 0
  %v2033 = vsel %vm2022, %v1980, 0
  %v2036 = vsel %vm2022, %v1982, 0
  %v2039 = vsel %vm2022, %v1984, 0
  %v2042 = vsel %vm2022, %v1986, 0
  %v2045 = vsel %vm2022, %v1988, 0
  %v2048 = vsel %vm2022, %v1990, 0
  %v2051 = vsel %vm2022, %v1992, 0
  %v2054 = vsel %vm2022, %v1994, 0
  %v2057 = vsel %vm2022, %v1996, 0
  %v2060 = vsel %vm2022, %v1998, 0
  %v2063 = vsel %vm2022, %v2000, 0
  %2065 = vmatpush.msra.mxu0 %v2016
  %2066 = vmatpush.msra.mxu0 %v2015
  %2067 = vmatpush.msra.mxu0 %v2014
  %2068 = vmatpush.msra.mxu0 %v2013
  %2069 = vmatpush.msra.mxu0 %v2012
  %2070 = vmatpush.msra.mxu0 %v2011
  %2071 = vmatpush.msra.mxu0 %v2010
  %2072 = vmatpush.msra.mxu0 %v2009
  %2073 = vmatpush.msra.mxu0 %v2008
  %2074 = vmatpush.msra.mxu0 %v2007
  %2075 = vmatpush.msra.mxu0 %v2006
  %2076 = vmatpush.msra.mxu0 %v2005
  %2077 = vmatpush.msra.mxu0 %v2004
  %2078 = vmatpush.msra.mxu0 %v2003
  %2079 = vmatpush.msra.mxu0 %v2002
  %2080 = vmatpush.msra.mxu0 %v2001
  %2081 = vmatmul.f32.gmra.mxu0 %v1973
  %v2082 = vpop.f32.mrf.mxu0
  %v2083 = vadd.f32 0.0, %v2082
  %2084 = vmatmul.f32.gmra.mxu0 %v1975
  %v2085 = vpop.f32.mrf.mxu0
  %v2086 = vadd.f32 0.0, %v2085
  %2087 = vmatmul.f32.gmra.mxu0 %v1977
  %v2088 = vpop.f32.mrf.mxu0
  %v2089 = vadd.f32 0.0, %v2088
  %2090 = vmatmul.f32.gmra.mxu0 %v1979
  %v2091 = vpop.f32.mrf.mxu0
  %v2092 = vadd.f32 0.0, %v2091
  %2093 = vmatmul.f32.gmra.mxu0 %v1981
  %v2094 = vpop.f32.mrf.mxu0
  %v2095 = vadd.f32 0.0, %v2094
  %2096 = vmatmul.f32.gmra.mxu0 %v1983
  %v2097 = vpop.f32.mrf.mxu0
  %v2098 = vadd.f32 0.0, %v2097
  %2099 = vmatmul.f32.gmra.mxu0 %v1985
  %v2100 = vpop.f32.mrf.mxu0
  %v2101 = vadd.f32 0.0, %v2100
  %2102 = vmatmul.f32.gmra.mxu0 %v1987
  %v2103 = vpop.f32.mrf.mxu0
  %v2104 = vadd.f32 0.0, %v2103
  %2105 = vmatmul.f32.gmra.mxu0 %v1989
  %v2106 = vpop.f32.mrf.mxu0
  %v2107 = vadd.f32 0.0, %v2106
  %2108 = vmatmul.f32.gmra.mxu0 %v1991
  %v2109 = vpop.f32.mrf.mxu0
  %v2110 = vadd.f32 0.0, %v2109
  %2111 = vmatmul.f32.gmra.mxu0 %v1993
  %v2112 = vpop.f32.mrf.mxu0
  %v2113 = vadd.f32 0.0, %v2112
  %2114 = vmatmul.f32.gmra.mxu0 %v1995
  %v2115 = vpop.f32.mrf.mxu0
  %v2116 = vadd.f32 0.0, %v2115
  %2117 = vmatmul.f32.gmra.mxu0 %v1997
  %v2118 = vpop.f32.mrf.mxu0
  %v2119 = vadd.f32 0.0, %v2118
  %2120 = vmatmul.f32.gmra.mxu0 %v1999
  %v2121 = vpop.f32.mrf.mxu0
  %v2122 = vadd.f32 0.0, %v2121
  %2123 = vdwg.mxu0
  %2124 = vmatpush.msra.mxu0 0.0
  %2125 = vmatpush.msra.mxu0 0.0
  %2126 = vmatpush.msra.mxu0 0.0
  %2127 = vmatpush.msra.mxu0 0.0
  %2128 = vmatpush.msra.mxu0 0.0
  %2129 = vmatpush.msra.mxu0 0.0
  %2130 = vmatpush.msra.mxu0 0.0
  %2131 = vmatpush.msra.mxu0 0.0
  %2132 = vmatpush.msra.mxu0 0.0
  %2133 = vmatpush.msra.mxu0 0.0
  %2134 = vmatpush.msra.mxu0 0.0
  %2135 = vmatpush.msra.mxu0 %v2021
  %2136 = vmatpush.msra.mxu0 %v2020
  %2137 = vmatpush.msra.mxu0 %v2019
  %2138 = vmatpush.msra.mxu0 %v2018
  %2139 = vmatpush.msra.mxu0 %v2017
  %2140 = vmatmul.f32.gmra.mxu0 %v2024
  %v2141 = vpop.f32.mrf.mxu0
  %v2142 = vadd.f32 %v2083, %v2141
  %2143 = vmatmul.f32.gmra.mxu0 %v2027
  %v2144 = vpop.f32.mrf.mxu0
  %v2145 = vadd.f32 %v2086, %v2144
  %2146 = vmatmul.f32.gmra.mxu0 %v2030
  %v2147 = vpop.f32.mrf.mxu0
  %v2148 = vadd.f32 %v2089, %v2147
  %2149 = vmatmul.f32.gmra.mxu0 %v2033
  %v2150 = vpop.f32.mrf.mxu0
  %v2151 = vadd.f32 %v2092, %v2150
  %2152 = vmatmul.f32.gmra.mxu0 %v2036
  %v2153 = vpop.f32.mrf.mxu0
  %v2154 = vadd.f32 %v2095, %v2153
  %2155 = vmatmul.f32.gmra.mxu0 %v2039
  %v2156 = vpop.f32.mrf.mxu0
  %v2157 = vadd.f32 %v2098, %v2156
  %2158 = vmatmul.f32.gmra.mxu0 %v2042
  %v2159 = vpop.f32.mrf.mxu0
  %v2160 = vadd.f32 %v2101, %v2159
  %2161 = vmatmul.f32.gmra.mxu0 %v2045
  %v2162 = vpop.f32.mrf.mxu0
  %v2163 = vadd.f32 %v2104, %v2162
  %2164 = vmatmul.f32.gmra.mxu0 %v2048
  %v2165 = vpop.f32.mrf.mxu0
  %v2166 = vadd.f32 %v2107, %v2165
  %2167 = vmatmul.f32.gmra.mxu0 %v2051
  %v2168 = vpop.f32.mrf.mxu0
  %v2169 = vadd.f32 %v2110, %v2168
  %2170 = vmatmul.f32.gmra.mxu0 %v2054
  %v2171 = vpop.f32.mrf.mxu0
  %v2172 = vadd.f32 %v2113, %v2171
  %2173 = vmatmul.f32.gmra.mxu0 %v2057
  %v2174 = vpop.f32.mrf.mxu0
  %v2175 = vadd.f32 %v2116, %v2174
  %2176 = vmatmul.f32.gmra.mxu0 %v2060
  %v2177 = vpop.f32.mrf.mxu0
  %v2178 = vadd.f32 %v2119, %v2177
  %2179 = vmatmul.f32.gmra.mxu0 %v2063
  %v2180 = vpop.f32.mrf.mxu0
  %v2181 = vadd.f32 %v2122, %v2180
  %2182 = vdwg.mxu0
  %s2183 = scalar_lea.vmem %s3, 168
  %v2184 = vld [vmem:[%s2183] sm:$0xff]
  %v2185 = vld [vmem:[%s2183 + $0x8] sm:$0xff]
  %v2186 = vld [vmem:[%s2183 + $0x10] sm:$0xff]
  %v2187 = vld [vmem:[%s2183 + $0x18] sm:$0xff]
  %v2188 = vld [vmem:[%s2183 + $0x20] sm:$0xff]
  %v2189 = vld [vmem:[%s2183 + $0x28] sm:$0xff]
  %v2190 = vld [vmem:[%s2183 + $0x30] sm:$0xff]
  %v2191 = vld [vmem:[%s2183 + $0x38] sm:$0xff]
  %v2192 = vld [vmem:[%s2183 + $0x40] sm:$0xff]
  %v2193 = vld [vmem:[%s2183 + $0x48] sm:$0xff]
  %v2194 = vld [vmem:[%s2183 + $0x50] sm:$0xff]
  %v2195 = vld [vmem:[%s2183 + $0x58] sm:$0xff]
  %v2196 = vld [vmem:[%s2183 + $0x60] sm:$0xff]
  %v2197 = vld [vmem:[%s2183 + $0x68] sm:$0xff]
  %v2198 = vld [vmem:[%s2183 + $0x70] sm:$0xff]
  %v2199 = vld [vmem:[%s2183 + $0x78] sm:$0xff]
  %v2200 = vld [vmem:[%s2183 + $0x80] sm:$0xff]
  %v2201 = vld [vmem:[%s2183 + $0x88] sm:$0xff]
  %v2202 = vld [vmem:[%s2183 + $0x90] sm:$0xff]
  %v2203 = vld [vmem:[%s2183 + $0x98] sm:$0xff]
  %v2204 = vld [vmem:[%s2183 + $0xa0] sm:$0xff]
  %2205 = vmatpush.msra.mxu0 %v2199
  %2206 = vmatpush.msra.mxu0 %v2198
  %2207 = vmatpush.msra.mxu0 %v2197
  %2208 = vmatpush.msra.mxu0 %v2196
  %2209 = vmatpush.msra.mxu0 %v2195
  %2210 = vmatpush.msra.mxu0 %v2194
  %2211 = vmatpush.msra.mxu0 %v2193
  %2212 = vmatpush.msra.mxu0 %v2192
  %2213 = vmatpush.msra.mxu0 %v2191
  %2214 = vmatpush.msra.mxu0 %v2190
  %2215 = vmatpush.msra.mxu0 %v2189
  %2216 = vmatpush.msra.mxu0 %v2188
  %2217 = vmatpush.msra.mxu0 %v2187
  %2218 = vmatpush.msra.mxu0 %v2186
  %2219 = vmatpush.msra.mxu0 %v2185
  %2220 = vmatpush.msra.mxu0 %v2184
  %2221 = vmatmul.f32.gmra.mxu0 %v1973
  %v2222 = vpop.f32.mrf.mxu0
  %v2223 = vadd.f32 0.0, %v2222
  %2224 = vmatmul.f32.gmra.mxu0 %v1975
  %v2225 = vpop.f32.mrf.mxu0
  %v2226 = vadd.f32 0.0, %v2225
  %2227 = vmatmul.f32.gmra.mxu0 %v1977
  %v2228 = vpop.f32.mrf.mxu0
  %v2229 = vadd.f32 0.0, %v2228
  %2230 = vmatmul.f32.gmra.mxu0 %v1979
  %v2231 = vpop.f32.mrf.mxu0
  %v2232 = vadd.f32 0.0, %v2231
  %2233 = vmatmul.f32.gmra.mxu0 %v1981
  %v2234 = vpop.f32.mrf.mxu0
  %v2235 = vadd.f32 0.0, %v2234
  %2236 = vmatmul.f32.gmra.mxu0 %v1983
  %v2237 = vpop.f32.mrf.mxu0
  %v2238 = vadd.f32 0.0, %v2237
  %2239 = vmatmul.f32.gmra.mxu0 %v1985
  %v2240 = vpop.f32.mrf.mxu0
  %v2241 = vadd.f32 0.0, %v2240
  %2242 = vmatmul.f32.gmra.mxu0 %v1987
  %v2243 = vpop.f32.mrf.mxu0
  %v2244 = vadd.f32 0.0, %v2243
  %2245 = vmatmul.f32.gmra.mxu0 %v1989
  %v2246 = vpop.f32.mrf.mxu0
  %v2247 = vadd.f32 0.0, %v2246
  %2248 = vmatmul.f32.gmra.mxu0 %v1991
  %v2249 = vpop.f32.mrf.mxu0
  %v2250 = vadd.f32 0.0, %v2249
  %2251 = vmatmul.f32.gmra.mxu0 %v1993
  %v2252 = vpop.f32.mrf.mxu0
  %v2253 = vadd.f32 0.0, %v2252
  %2254 = vmatmul.f32.gmra.mxu0 %v1995
  %v2255 = vpop.f32.mrf.mxu0
  %v2256 = vadd.f32 0.0, %v2255
  %2257 = vmatmul.f32.gmra.mxu0 %v1997
  %v2258 = vpop.f32.mrf.mxu0
  %v2259 = vadd.f32 0.0, %v2258
  %2260 = vmatmul.f32.gmra.mxu0 %v1999
  %v2261 = vpop.f32.mrf.mxu0
  %v2262 = vadd.f32 0.0, %v2261
  %2263 = vdwg.mxu0
  %2264 = vmatpush.msra.mxu0 0.0
  %2265 = vmatpush.msra.mxu0 0.0
  %2266 = vmatpush.msra.mxu0 0.0
  %2267 = vmatpush.msra.mxu0 0.0
  %2268 = vmatpush.msra.mxu0 0.0
  %2269 = vmatpush.msra.mxu0 0.0
  %2270 = vmatpush.msra.mxu0 0.0
  %2271 = vmatpush.msra.mxu0 0.0
  %2272 = vmatpush.msra.mxu0 0.0
  %2273 = vmatpush.msra.mxu0 0.0
  %2274 = vmatpush.msra.mxu0 0.0
  %2275 = vmatpush.msra.mxu0 %v2204
  %2276 = vmatpush.msra.mxu0 %v2203
  %2277 = vmatpush.msra.mxu0 %v2202
  %2278 = vmatpush.msra.mxu0 %v2201
  %2279 = vmatpush.msra.mxu0 %v2200
  %2280 = vmatmul.f32.gmra.mxu0 %v2024
  %v2281 = vpop.f32.mrf.mxu0
  %v2282 = vadd.f32 %v2223, %v2281
  %2283 = vmatmul.f32.gmra.mxu0 %v2027
  %v2284 = vpop.f32.mrf.mxu0
  %v2285 = vadd.f32 %v2226, %v2284
  %2286 = vmatmul.f32.gmra.mxu0 %v2030
  %v2287 = vpop.f32.mrf.mxu0
  %v2288 = vadd.f32 %v2229, %v2287
  %2289 = vmatmul.f32.gmra.mxu0 %v2033
  %v2290 = vpop.f32.mrf.mxu0
  %v2291 = vadd.f32 %v2232, %v2290
  %2292 = vmatmul.f32.gmra.mxu0 %v2036
  %v2293 = vpop.f32.mrf.mxu0
  %v2294 = vadd.f32 %v2235, %v2293
  %2295 = vmatmul.f32.gmra.mxu0 %v2039
  %v2296 = vpop.f32.mrf.mxu0
  %v2297 = vadd.f32 %v2238, %v2296
  %2298 = vmatmul.f32.gmra.mxu0 %v2042
  %v2299 = vpop.f32.mrf.mxu0
  %v2300 = vadd.f32 %v2241, %v2299
  %2301 = vmatmul.f32.gmra.mxu0 %v2045
  %v2302 = vpop.f32.mrf.mxu0
  %v2303 = vadd.f32 %v2244, %v2302
  %2304 = vmatmul.f32.gmra.mxu0 %v2048
  %v2305 = vpop.f32.mrf.mxu0
  %v2306 = vadd.f32 %v2247, %v2305
  %2307 = vmatmul.f32.gmra.mxu0 %v2051
  %v2308 = vpop.f32.mrf.mxu0
  %v2309 = vadd.f32 %v2250, %v2308
  %2310 = vmatmul.f32.gmra.mxu0 %v2054
  %v2311 = vpop.f32.mrf.mxu0
  %v2312 = vadd.f32 %v2253, %v2311
  %2313 = vmatmul.f32.gmra.mxu0 %v2057
  %v2314 = vpop.f32.mrf.mxu0
  %v2315 = vadd.f32 %v2256, %v2314
  %2316 = vmatmul.f32.gmra.mxu0 %v2060
  %v2317 = vpop.f32.mrf.mxu0
  %v2318 = vadd.f32 %v2259, %v2317
  %2319 = vmatmul.f32.gmra.mxu0 %v2063
  %v2320 = vpop.f32.mrf.mxu0
  %v2321 = vadd.f32 %v2262, %v2320
  %2322 = vdwg.mxu0
  %v2323 = vmax.f32 %v2142, %v2282
  %v2324 = vmax.f32 %v2145, %v2285
  %v2325 = vmax.f32 %v2148, %v2288
  %v2326 = vmax.f32 %v2151, %v2291
  %v2327 = vmax.f32 %v2154, %v2294
  %v2328 = vmax.f32 %v2157, %v2297
  %v2329 = vmax.f32 %v2160, %v2300
  %v2330 = vmax.f32 %v2163, %v2303
  %v2331 = vmax.f32 %v2166, %v2306
  %v2332 = vmax.f32 %v2169, %v2309
  %v2333 = vmax.f32 %v2172, %v2312
  %v2334 = vmax.f32 %v2175, %v2315
  %v2335 = vmax.f32 %v2178, %v2318
  %v2336 = vmax.f32 %v2181, %v2321
  %v2337 = vld [vmem:[%s4] sm:$0xff]
  %v2338 = vld [vmem:[%s4 + $0x8] sm:$0xff]
  %v2339 = vld [vmem:[%s4 + $0x10] sm:$0xff]
  %v2340 = vld [vmem:[%s4 + $0x18] sm:$0xff]
  %v2341 = vld [vmem:[%s4 + $0x20] sm:$0xff]
  %v2342 = vld [vmem:[%s4 + $0x28] sm:$0xff]
  %v2343 = vld [vmem:[%s4 + $0x30] sm:$0xff]
  %v2344 = vld [vmem:[%s4 + $0x38] sm:$0xff]
  %v2345 = vld [vmem:[%s4 + $0x40] sm:$0xff]
  %v2346 = vld [vmem:[%s4 + $0x48] sm:$0xff]
  %v2347 = vld [vmem:[%s4 + $0x50] sm:$0xff]
  %v2348 = vld [vmem:[%s4 + $0x58] sm:$0xff]
  %v2349 = vld [vmem:[%s4 + $0x60] sm:$0xff]
  %v2350 = vld [vmem:[%s4 + $0x68] sm:$0xff]
  %v2351 = vld [vmem:[%s4 + $0x70] sm:$0xff]
  %v2352 = vld [vmem:[%s4 + $0x78] sm:$0xff]
  %v2353 = vld [vmem:[%s4 + $0x80] sm:$0xff]
  %v2354 = vld [vmem:[%s4 + $0x88] sm:$0xff]
  %v2355 = vld [vmem:[%s4 + $0x90] sm:$0xff]
  %v2356 = vld [vmem:[%s4 + $0x98] sm:$0xff]
  %v2357 = vld [vmem:[%s4 + $0xa0] sm:$0xf]
  %v2358 = vld [vmem:[%s4 + $0xa8] sm:$0xf]
  %s2359 = scalar_lea.vmem %s4, 176
  %v2360 = vld [vmem:[%s2359] sm:$0xff]
  %v2361 = vld [vmem:[%s2359 + $0x8] sm:$0xff]
  %v2362 = vld [vmem:[%s2359 + $0x10] sm:$0xff]
  %v2363 = vld [vmem:[%s2359 + $0x18] sm:$0xff]
  %v2364 = vld [vmem:[%s2359 + $0x20] sm:$0xff]
  %v2365 = vld [vmem:[%s2359 + $0x28] sm:$0xff]
  %v2366 = vld [vmem:[%s2359 + $0x30] sm:$0xff]
  %v2367 = vld [vmem:[%s2359 + $0x38] sm:$0xff]
  %v2368 = vld [vmem:[%s2359 + $0x40] sm:$0xff]
  %v2369 = vld [vmem:[%s2359 + $0x48] sm:$0xff]
  %v2370 = vld [vmem:[%s2359 + $0x50] sm:$0xff]
  %v2371 = vld [vmem:[%s2359 + $0x58] sm:$0xff]
  %v2372 = vld [vmem:[%s2359 + $0x60] sm:$0xff]
  %v2373 = vld [vmem:[%s2359 + $0x68] sm:$0xff]
  %v2374 = vld [vmem:[%s2359 + $0x70] sm:$0xff]
  %v2375 = vld [vmem:[%s2359 + $0x78] sm:$0xff]
  %v2376 = vld [vmem:[%s2359 + $0x80] sm:$0xff]
  %v2377 = vld [vmem:[%s2359 + $0x88] sm:$0xff]
  %v2378 = vld [vmem:[%s2359 + $0x90] sm:$0xff]
  %v2379 = vld [vmem:[%s2359 + $0x98] sm:$0xff]
  %v2380 = vld [vmem:[%s2359 + $0xa0] sm:$0xf]
  %v2381 = vld [vmem:[%s2359 + $0xa8] sm:$0xf]
  %vm2382 = vcmask 687104
  %v2384 = vsel %vm2382, %v2324, 0
  %v2387 = vsel %vm2382, %v2325, 0
  %v2390 = vsel %vm2382, %v2326, 0
  %v2393 = vsel %vm2382, %v2327, 0
  %v2396 = vsel %vm2382, %v2328, 0
  %v2399 = vsel %vm2382, %v2329, 0
  %v2402 = vsel %vm2382, %v2330, 0
  %v2405 = vsel %vm2382, %v2331, 0
  %v2408 = vsel %vm2382, %v2332, 0
  %v2411 = vsel %vm2382, %v2333, 0
  %vm2413 = vcmask 1043456
  %v2415 = vsel %vm2413, %v2380, 0
  %v2418 = vsel %vm2413, %v2381, 0
  %2420 = vmatpush.msra.mxu0 0.0
  %2421 = vmatpush.msra.mxu0 0.0
  %2422 = vmatpush.msra.mxu0 0.0
  %2423 = vmatpush.msra.mxu0 0.0
  %2424 = vmatpush.msra.mxu0 0.0
  %2425 = vmatpush.msra.mxu0 %v2415
  %2426 = vmatpush.msra.mxu0 %v2378
  %2427 = vmatpush.msra.mxu0 %v2376
  %2428 = vmatpush.msra.mxu0 %v2374
  %2429 = vmatpush.msra.mxu0 %v2372
  %2430 = vmatpush.msra.mxu0 %v2370
  %2431 = vmatpush.msra.mxu0 %v2368
  %2432 = vmatpush.msra.mxu0 %v2366
  %2433 = vmatpush.msra.mxu0 %v2364
  %2434 = vmatpush.msra.mxu0 %v2362
  %2435 = vmatpush.msra.mxu0 %v2360
  %2436 = vmatmul.f32.gmra.mxu0 %v2384
  %v2437 = vpop.f32.mrf.mxu0
  %v2438 = vadd.f32 0.0, %v2437
  %2439 = vmatmul.f32.gmra.mxu0 %v2387
  %v2440 = vpop.f32.mrf.mxu0
  %v2441 = vadd.f32 0.0, %v2440
  %2442 = vmatmul.f32.gmra.mxu0 %v2390
  %v2443 = vpop.f32.mrf.mxu0
  %v2444 = vadd.f32 0.0, %v2443
  %2445 = vmatmul.f32.gmra.mxu0 %v2393
  %v2446 = vpop.f32.mrf.mxu0
  %v2447 = vadd.f32 0.0, %v2446
  %2448 = vmatmul.f32.gmra.mxu0 %v2396
  %v2449 = vpop.f32.mrf.mxu0
  %v2450 = vadd.f32 0.0, %v2449
  %2451 = vmatmul.f32.gmra.mxu0 %v2399
  %v2452 = vpop.f32.mrf.mxu0
  %v2453 = vadd.f32 0.0, %v2452
  %2454 = vmatmul.f32.gmra.mxu0 %v2402
  %v2455 = vpop.f32.mrf.mxu0
  %v2456 = vadd.f32 0.0, %v2455
  %2457 = vmatmul.f32.gmra.mxu0 %v2405
  %v2458 = vpop.f32.mrf.mxu0
  %v2459 = vadd.f32 0.0, %v2458
  %2460 = vmatmul.f32.gmra.mxu0 %v2408
  %v2461 = vpop.f32.mrf.mxu0
  %v2462 = vadd.f32 0.0, %v2461
  %2463 = vmatmul.f32.gmra.mxu0 %v2411
  %v2464 = vpop.f32.mrf.mxu0
  %v2465 = vadd.f32 0.0, %v2464
  %2466 = vdwg.mxu0
  %2467 = vmatpush.msra.mxu0 0.0
  %2468 = vmatpush.msra.mxu0 0.0
  %2469 = vmatpush.msra.mxu0 0.0
  %2470 = vmatpush.msra.mxu0 0.0
  %2471 = vmatpush.msra.mxu0 0.0
  %2472 = vmatpush.msra.mxu0 %v2418
  %2473 = vmatpush.msra.mxu0 %v2379
  %2474 = vmatpush.msra.mxu0 %v2377
  %2475 = vmatpush.msra.mxu0 %v2375
  %2476 = vmatpush.msra.mxu0 %v2373
  %2477 = vmatpush.msra.mxu0 %v2371
  %2478 = vmatpush.msra.mxu0 %v2369
  %2479 = vmatpush.msra.mxu0 %v2367
  %2480 = vmatpush.msra.mxu0 %v2365
  %2481 = vmatpush.msra.mxu0 %v2363
  %2482 = vmatpush.msra.mxu0 %v2361
  %2483 = vmatmul.f32.gmra.mxu0 %v2384
  %v2484 = vpop.f32.mrf.mxu0
  %v2485 = vadd.f32 0.0, %v2484
  %2486 = vmatmul.f32.gmra.mxu0 %v2387
  %v2487 = vpop.f32.mrf.mxu0
  %v2488 = vadd.f32 0.0, %v2487
  %2489 = vmatmul.f32.gmra.mxu0 %v2390
  %v2490 = vpop.f32.mrf.mxu0
  %v2491 = vadd.f32 0.0, %v2490
  %2492 = vmatmul.f32.gmra.mxu0 %v2393
  %v2493 = vpop.f32.mrf.mxu0
  %v2494 = vadd.f32 0.0, %v2493
  %2495 = vmatmul.f32.gmra.mxu0 %v2396
  %v2496 = vpop.f32.mrf.mxu0
  %v2497 = vadd.f32 0.0, %v2496
  %2498 = vmatmul.f32.gmra.mxu0 %v2399
  %v2499 = vpop.f32.mrf.mxu0
  %v2500 = vadd.f32 0.0, %v2499
  %2501 = vmatmul.f32.gmra.mxu0 %v2402
  %v2502 = vpop.f32.mrf.mxu0
  %v2503 = vadd.f32 0.0, %v2502
  %2504 = vmatmul.f32.gmra.mxu0 %v2405
  %v2505 = vpop.f32.mrf.mxu0
  %v2506 = vadd.f32 0.0, %v2505
  %2507 = vmatmul.f32.gmra.mxu0 %v2408
  %v2508 = vpop.f32.mrf.mxu0
  %v2509 = vadd.f32 0.0, %v2508
  %2510 = vmatmul.f32.gmra.mxu0 %v2411
  %v2511 = vpop.f32.mrf.mxu0
  %v2512 = vadd.f32 0.0, %v2511
  %2513 = vdwg.mxu0
  %v2515 = vsel %vm2382, %v2323, 0
  %v2518 = vsel %vm2413, %v2357, 0
  %v2521 = vsel %vm2413, %v2358, 0
  %2523 = vmatpush.msra.mxu0 0.0
  %2524 = vmatpush.msra.mxu0 0.0
  %2525 = vmatpush.msra.mxu0 0.0
  %2526 = vmatpush.msra.mxu0 0.0
  %2527 = vmatpush.msra.mxu0 0.0
  %2528 = vmatpush.msra.mxu0 %v2518
  %2529 = vmatpush.msra.mxu0 %v2355
  %2530 = vmatpush.msra.mxu0 %v2353
  %2531 = vmatpush.msra.mxu0 %v2351
  %2532 = vmatpush.msra.mxu0 %v2349
  %2533 = vmatpush.msra.mxu0 %v2347
  %2534 = vmatpush.msra.mxu0 %v2345
  %2535 = vmatpush.msra.mxu0 %v2343
  %2536 = vmatpush.msra.mxu0 %v2341
  %2537 = vmatpush.msra.mxu0 %v2339
  %2538 = vmatpush.msra.mxu0 %v2337
  %2539 = vmatmul.f32.gmra.mxu0 %v2515
  %v2540 = vpop.f32.mrf.mxu0
  %v2541 = vadd.f32 %v2438, %v2540
  %2542 = vmatmul.f32.gmra.mxu0 %v2384
  %v2543 = vpop.f32.mrf.mxu0
  %v2544 = vadd.f32 %v2441, %v2543
  %2545 = vmatmul.f32.gmra.mxu0 %v2387
  %v2546 = vpop.f32.mrf.mxu0
  %v2547 = vadd.f32 %v2444, %v2546
  %2548 = vmatmul.f32.gmra.mxu0 %v2390
  %v2549 = vpop.f32.mrf.mxu0
  %v2550 = vadd.f32 %v2447, %v2549
  %2551 = vmatmul.f32.gmra.mxu0 %v2393
  %v2552 = vpop.f32.mrf.mxu0
  %v2553 = vadd.f32 %v2450, %v2552
  %2554 = vmatmul.f32.gmra.mxu0 %v2396
  %v2555 = vpop.f32.mrf.mxu0
  %v2556 = vadd.f32 %v2453, %v2555
  %2557 = vmatmul.f32.gmra.mxu0 %v2399
  %v2558 = vpop.f32.mrf.mxu0
  %v2559 = vadd.f32 %v2456, %v2558
  %2560 = vmatmul.f32.gmra.mxu0 %v2402
  %v2561 = vpop.f32.mrf.mxu0
  %v2562 = vadd.f32 %v2459, %v2561
  %2563 = vmatmul.f32.gmra.mxu0 %v2405
  %v2564 = vpop.f32.mrf.mxu0
  %v2565 = vadd.f32 %v2462, %v2564
  %2566 = vmatmul.f32.gmra.mxu0 %v2408
  %v2567 = vpop.f32.mrf.mxu0
  %v2568 = vadd.f32 %v2465, %v2567
  %2569 = vdwg.mxu0
  %2570 = vmatpush.msra.mxu0 0.0
  %2571 = vmatpush.msra.mxu0 0.0
  %2572 = vmatpush.msra.mxu0 0.0
  %2573 = vmatpush.msra.mxu0 0.0
  %2574 = vmatpush.msra.mxu0 0.0
  %2575 = vmatpush.msra.mxu0 %v2521
  %2576 = vmatpush.msra.mxu0 %v2356
  %2577 = vmatpush.msra.mxu0 %v2354
  %2578 = vmatpush.msra.mxu0 %v2352
  %2579 = vmatpush.msra.mxu0 %v2350
  %2580 = vmatpush.msra.mxu0 %v2348
  %2581 = vmatpush.msra.mxu0 %v2346
  %2582 = vmatpush.msra.mxu0 %v2344
  %2583 = vmatpush.msra.mxu0 %v2342
  %2584 = vmatpush.msra.mxu0 %v2340
  %2585 = vmatpush.msra.mxu0 %v2338
  %2586 = vmatmul.f32.gmra.mxu0 %v2515
  %v2587 = vpop.f32.mrf.mxu0
  %v2588 = vadd.f32 %v2485, %v2587
  %2589 = vmatmul.f32.gmra.mxu0 %v2384
  %v2590 = vpop.f32.mrf.mxu0
  %v2591 = vadd.f32 %v2488, %v2590
  %2592 = vmatmul.f32.gmra.mxu0 %v2387
  %v2593 = vpop.f32.mrf.mxu0
  %v2594 = vadd.f32 %v2491, %v2593
  %2595 = vmatmul.f32.gmra.mxu0 %v2390
  %v2596 = vpop.f32.mrf.mxu0
  %v2597 = vadd.f32 %v2494, %v2596
  %2598 = vmatmul.f32.gmra.mxu0 %v2393
  %v2599 = vpop.f32.mrf.mxu0
  %v2600 = vadd.f32 %v2497, %v2599
  %2601 = vmatmul.f32.gmra.mxu0 %v2396
  %v2602 = vpop.f32.mrf.mxu0
  %v2603 = vadd.f32 %v2500, %v2602
  %2604 = vmatmul.f32.gmra.mxu0 %v2399
  %v2605 = vpop.f32.mrf.mxu0
  %v2606 = vadd.f32 %v2503, %v2605
  %2607 = vmatmul.f32.gmra.mxu0 %v2402
  %v2608 = vpop.f32.mrf.mxu0
  %v2609 = vadd.f32 %v2506, %v2608
  %2610 = vmatmul.f32.gmra.mxu0 %v2405
  %v2611 = vpop.f32.mrf.mxu0
  %v2612 = vadd.f32 %v2509, %v2611
  %2613 = vmatmul.f32.gmra.mxu0 %v2408
  %v2614 = vpop.f32.mrf.mxu0
  %v2615 = vadd.f32 %v2512, %v2614
  %2616 = vdwg.mxu0
  %s2617 = scalar_lea.vmem %s4, 352
  %v2618 = vld [vmem:[%s2617] sm:$0xff]
  %v2619 = vld [vmem:[%s2617 + $0x8] sm:$0xff]
  %v2620 = vld [vmem:[%s2617 + $0x10] sm:$0xff]
  %v2621 = vld [vmem:[%s2617 + $0x18] sm:$0xff]
  %v2622 = vld [vmem:[%s2617 + $0x20] sm:$0xff]
  %v2623 = vld [vmem:[%s2617 + $0x28] sm:$0xff]
  %v2624 = vld [vmem:[%s2617 + $0x30] sm:$0xff]
  %v2625 = vld [vmem:[%s2617 + $0x38] sm:$0xff]
  %v2626 = vld [vmem:[%s2617 + $0x40] sm:$0xff]
  %v2627 = vld [vmem:[%s2617 + $0x48] sm:$0xff]
  %v2628 = vld [vmem:[%s2617 + $0x50] sm:$0xff]
  %v2629 = vld [vmem:[%s2617 + $0x58] sm:$0xff]
  %v2630 = vld [vmem:[%s2617 + $0x60] sm:$0xff]
  %v2631 = vld [vmem:[%s2617 + $0x68] sm:$0xff]
  %v2632 = vld [vmem:[%s2617 + $0x70] sm:$0xff]
  %v2633 = vld [vmem:[%s2617 + $0x78] sm:$0xff]
  %v2634 = vld [vmem:[%s2617 + $0x80] sm:$0xff]
  %v2635 = vld [vmem:[%s2617 + $0x88] sm:$0xff]
  %v2636 = vld [vmem:[%s2617 + $0x90] sm:$0xff]
  %v2637 = vld [vmem:[%s2617 + $0x98] sm:$0xff]
  %v2638 = vld [vmem:[%s2617 + $0xa0] sm:$0xf]
  %v2639 = vld [vmem:[%s2617 + $0xa8] sm:$0xf]
  %s2640 = scalar_lea.vmem %s4, 528
  %v2641 = vld [vmem:[%s2640] sm:$0xff]
  %v2642 = vld [vmem:[%s2640 + $0x8] sm:$0xff]
  %v2643 = vld [vmem:[%s2640 + $0x10] sm:$0xff]
  %v2644 = vld [vmem:[%s2640 + $0x18] sm:$0xff]
  %v2645 = vld [vmem:[%s2640 + $0x20] sm:$0xff]
  %v2646 = vld [vmem:[%s2640 + $0x28] sm:$0xff]
  %v2647 = vld [vmem:[%s2640 + $0x30] sm:$0xff]
  %v2648 = vld [vmem:[%s2640 + $0x38] sm:$0xff]
  %v2649 = vld [vmem:[%s2640 + $0x40] sm:$0xff]
  %v2650 = vld [vmem:[%s2640 + $0x48] sm:$0xff]
  %v2651 = vld [vmem:[%s2640 + $0x50] sm:$0xff]
  %v2652 = vld [vmem:[%s2640 + $0x58] sm:$0xff]
  %v2653 = vld [vmem:[%s2640 + $0x60] sm:$0xff]
  %v2654 = vld [vmem:[%s2640 + $0x68] sm:$0xff]
  %v2655 = vld [vmem:[%s2640 + $0x70] sm:$0xff]
  %v2656 = vld [vmem:[%s2640 + $0x78] sm:$0xff]
  %v2657 = vld [vmem:[%s2640 + $0x80] sm:$0xff]
  %v2658 = vld [vmem:[%s2640 + $0x88] sm:$0xff]
  %v2659 = vld [vmem:[%s2640 + $0x90] sm:$0xff]
  %v2660 = vld [vmem:[%s2640 + $0x98] sm:$0xff]
  %v2661 = vld [vmem:[%s2640 + $0xa0] sm:$0xf]
  %v2662 = vld [vmem:[%s2640 + $0xa8] sm:$0xf]
  %v2664 = vsel %vm2382, %v2334, 0
  %v2667 = vsel %vm2382, %v2335, 0
  %v2670 = vsel %vm2413, %v2661, 0
  %v2673 = vsel %vm2413, %v2662, 0
  %2675 = vmatpush.msra.mxu0 0.0
  %2676 = vmatpush.msra.mxu0 0.0
  %2677 = vmatpush.msra.mxu0 0.0
  %2678 = vmatpush.msra.mxu0 0.0
  %2679 = vmatpush.msra.mxu0 0.0
  %2680 = vmatpush.msra.mxu0 %v2670
  %2681 = vmatpush.msra.mxu0 %v2659
  %2682 = vmatpush.msra.mxu0 %v2657
  %2683 = vmatpush.msra.mxu0 %v2655
  %2684 = vmatpush.msra.mxu0 %v2653
  %2685 = vmatpush.msra.mxu0 %v2651
  %2686 = vmatpush.msra.mxu0 %v2649
  %2687 = vmatpush.msra.mxu0 %v2647
  %2688 = vmatpush.msra.mxu0 %v2645
  %2689 = vmatpush.msra.mxu0 %v2643
  %2690 = vmatpush.msra.mxu0 %v2641
  %2691 = vmatmul.f32.gmra.mxu0 %v2390
  %v2692 = vpop.f32.mrf.mxu0
  %v2693 = vadd.f32 0.0, %v2692
  %2694 = vmatmul.f32.gmra.mxu0 %v2393
  %v2695 = vpop.f32.mrf.mxu0
  %v2696 = vadd.f32 0.0, %v2695
  %2697 = vmatmul.f32.gmra.mxu0 %v2396
  %v2698 = vpop.f32.mrf.mxu0
  %v2699 = vadd.f32 0.0, %v2698
  %2700 = vmatmul.f32.gmra.mxu0 %v2399
  %v2701 = vpop.f32.mrf.mxu0
  %v2702 = vadd.f32 0.0, %v2701
  %2703 = vmatmul.f32.gmra.mxu0 %v2402
  %v2704 = vpop.f32.mrf.mxu0
  %v2705 = vadd.f32 0.0, %v2704
  %2706 = vmatmul.f32.gmra.mxu0 %v2405
  %v2707 = vpop.f32.mrf.mxu0
  %v2708 = vadd.f32 0.0, %v2707
  %2709 = vmatmul.f32.gmra.mxu0 %v2408
  %v2710 = vpop.f32.mrf.mxu0
  %v2711 = vadd.f32 0.0, %v2710
  %2712 = vmatmul.f32.gmra.mxu0 %v2411
  %v2713 = vpop.f32.mrf.mxu0
  %v2714 = vadd.f32 0.0, %v2713
  %2715 = vmatmul.f32.gmra.mxu0 %v2664
  %v2716 = vpop.f32.mrf.mxu0
  %v2717 = vadd.f32 0.0, %v2716
  %2718 = vmatmul.f32.gmra.mxu0 %v2667
  %v2719 = vpop.f32.mrf.mxu0
  %v2720 = vadd.f32 0.0, %v2719
  %2721 = vdwg.mxu0
  %2722 = vmatpush.msra.mxu0 0.0
  %2723 = vmatpush.msra.mxu0 0.0
  %2724 = vmatpush.msra.mxu0 0.0
  %2725 = vmatpush.msra.mxu0 0.0
  %2726 = vmatpush.msra.mxu0 0.0
  %2727 = vmatpush.msra.mxu0 %v2673
  %2728 = vmatpush.msra.mxu0 %v2660
  %2729 = vmatpush.msra.mxu0 %v2658
  %2730 = vmatpush.msra.mxu0 %v2656
  %2731 = vmatpush.msra.mxu0 %v2654
  %2732 = vmatpush.msra.mxu0 %v2652
  %2733 = vmatpush.msra.mxu0 %v2650
  %2734 = vmatpush.msra.mxu0 %v2648
  %2735 = vmatpush.msra.mxu0 %v2646
  %2736 = vmatpush.msra.mxu0 %v2644
  %2737 = vmatpush.msra.mxu0 %v2642
  %2738 = vmatmul.f32.gmra.mxu0 %v2390
  %v2739 = vpop.f32.mrf.mxu0
  %v2740 = vadd.f32 0.0, %v2739
  %2741 = vmatmul.f32.gmra.mxu0 %v2393
  %v2742 = vpop.f32.mrf.mxu0
  %v2743 = vadd.f32 0.0, %v2742
  %2744 = vmatmul.f32.gmra.mxu0 %v2396
  %v2745 = vpop.f32.mrf.mxu0
  %v2746 = vadd.f32 0.0, %v2745
  %2747 = vmatmul.f32.gmra.mxu0 %v2399
  %v2748 = vpop.f32.mrf.mxu0
  %v2749 = vadd.f32 0.0, %v2748
  %2750 = vmatmul.f32.gmra.mxu0 %v2402
  %v2751 = vpop.f32.mrf.mxu0
  %v2752 = vadd.f32 0.0, %v2751
  %2753 = vmatmul.f32.gmra.mxu0 %v2405
  %v2754 = vpop.f32.mrf.mxu0
  %v2755 = vadd.f32 0.0, %v2754
  %2756 = vmatmul.f32.gmra.mxu0 %v2408
  %v2757 = vpop.f32.mrf.mxu0
  %v2758 = vadd.f32 0.0, %v2757
  %2759 = vmatmul.f32.gmra.mxu0 %v2411
  %v2760 = vpop.f32.mrf.mxu0
  %v2761 = vadd.f32 0.0, %v2760
  %2762 = vmatmul.f32.gmra.mxu0 %v2664
  %v2763 = vpop.f32.mrf.mxu0
  %v2764 = vadd.f32 0.0, %v2763
  %2765 = vmatmul.f32.gmra.mxu0 %v2667
  %v2766 = vpop.f32.mrf.mxu0
  %v2767 = vadd.f32 0.0, %v2766
  %2768 = vdwg.mxu0
  %v2770 = vsel %vm2413, %v2638, 0
  %v2773 = vsel %vm2413, %v2639, 0
  %2775 = vmatpush.msra.mxu0 0.0
  %2776 = vmatpush.msra.mxu0 0.0
  %2777 = vmatpush.msra.mxu0 0.0
  %2778 = vmatpush.msra.mxu0 0.0
  %2779 = vmatpush.msra.mxu0 0.0
  %2780 = vmatpush.msra.mxu0 %v2770
  %2781 = vmatpush.msra.mxu0 %v2636
  %2782 = vmatpush.msra.mxu0 %v2634
  %2783 = vmatpush.msra.mxu0 %v2632
  %2784 = vmatpush.msra.mxu0 %v2630
  %2785 = vmatpush.msra.mxu0 %v2628
  %2786 = vmatpush.msra.mxu0 %v2626
  %2787 = vmatpush.msra.mxu0 %v2624
  %2788 = vmatpush.msra.mxu0 %v2622
  %2789 = vmatpush.msra.mxu0 %v2620
  %2790 = vmatpush.msra.mxu0 %v2618
  %2791 = vmatmul.f32.gmra.mxu0 %v2387
  %v2792 = vpop.f32.mrf.mxu0
  %v2793 = vadd.f32 %v2693, %v2792
  %2794 = vmatmul.f32.gmra.mxu0 %v2390
  %v2795 = vpop.f32.mrf.mxu0
  %v2796 = vadd.f32 %v2696, %v2795
  %2797 = vmatmul.f32.gmra.mxu0 %v2393
  %v2798 = vpop.f32.mrf.mxu0
  %v2799 = vadd.f32 %v2699, %v2798
  %2800 = vmatmul.f32.gmra.mxu0 %v2396
  %v2801 = vpop.f32.mrf.mxu0
  %v2802 = vadd.f32 %v2702, %v2801
  %2803 = vmatmul.f32.gmra.mxu0 %v2399
  %v2804 = vpop.f32.mrf.mxu0
  %v2805 = vadd.f32 %v2705, %v2804
  %2806 = vmatmul.f32.gmra.mxu0 %v2402
  %v2807 = vpop.f32.mrf.mxu0
  %v2808 = vadd.f32 %v2708, %v2807
  %2809 = vmatmul.f32.gmra.mxu0 %v2405
  %v2810 = vpop.f32.mrf.mxu0
  %v2811 = vadd.f32 %v2711, %v2810
  %2812 = vmatmul.f32.gmra.mxu0 %v2408
  %v2813 = vpop.f32.mrf.mxu0
  %v2814 = vadd.f32 %v2714, %v2813
  %2815 = vmatmul.f32.gmra.mxu0 %v2411
  %v2816 = vpop.f32.mrf.mxu0
  %v2817 = vadd.f32 %v2717, %v2816
  %2818 = vmatmul.f32.gmra.mxu0 %v2664
  %v2819 = vpop.f32.mrf.mxu0
  %v2820 = vadd.f32 %v2720, %v2819
  %2821 = vdwg.mxu0
  %2822 = vmatpush.msra.mxu0 0.0
  %2823 = vmatpush.msra.mxu0 0.0
  %2824 = vmatpush.msra.mxu0 0.0
  %2825 = vmatpush.msra.mxu0 0.0
  %2826 = vmatpush.msra.mxu0 0.0
  %2827 = vmatpush.msra.mxu0 %v2773
  %2828 = vmatpush.msra.mxu0 %v2637
  %2829 = vmatpush.msra.mxu0 %v2635
  %2830 = vmatpush.msra.mxu0 %v2633
  %2831 = vmatpush.msra.mxu0 %v2631
  %2832 = vmatpush.msra.mxu0 %v2629
  %2833 = vmatpush.msra.mxu0 %v2627
  %2834 = vmatpush.msra.mxu0 %v2625
  %2835 = vmatpush.msra.mxu0 %v2623
  %2836 = vmatpush.msra.mxu0 %v2621
  %2837 = vmatpush.msra.mxu0 %v2619
  %2838 = vmatmul.f32.gmra.mxu0 %v2387
  %v2839 = vpop.f32.mrf.mxu0
  %v2840 = vadd.f32 %v2740, %v2839
  %2841 = vmatmul.f32.gmra.mxu0 %v2390
  %v2842 = vpop.f32.mrf.mxu0
  %v2843 = vadd.f32 %v2743, %v2842
  %2844 = vmatmul.f32.gmra.mxu0 %v2393
  %v2845 = vpop.f32.mrf.mxu0
  %v2846 = vadd.f32 %v2746, %v2845
  %2847 = vmatmul.f32.gmra.mxu0 %v2396
  %v2848 = vpop.f32.mrf.mxu0
  %v2849 = vadd.f32 %v2749, %v2848
  %2850 = vmatmul.f32.gmra.mxu0 %v2399
  %v2851 = vpop.f32.mrf.mxu0
  %v2852 = vadd.f32 %v2752, %v2851
  %2853 = vmatmul.f32.gmra.mxu0 %v2402
  %v2854 = vpop.f32.mrf.mxu0
  %v2855 = vadd.f32 %v2755, %v2854
  %2856 = vmatmul.f32.gmra.mxu0 %v2405
  %v2857 = vpop.f32.mrf.mxu0
  %v2858 = vadd.f32 %v2758, %v2857
  %2859 = vmatmul.f32.gmra.mxu0 %v2408
  %v2860 = vpop.f32.mrf.mxu0
  %v2861 = vadd.f32 %v2761, %v2860
  %2862 = vmatmul.f32.gmra.mxu0 %v2411
  %v2863 = vpop.f32.mrf.mxu0
  %v2864 = vadd.f32 %v2764, %v2863
  %2865 = vmatmul.f32.gmra.mxu0 %v2664
  %v2866 = vpop.f32.mrf.mxu0
  %v2867 = vadd.f32 %v2767, %v2866
  %2868 = vdwg.mxu0
  %v2869 = vadd.f32 %v2541, %v2793
  %v2870 = vadd.f32 %v2588, %v2840
  %v2871 = vadd.f32 %v2544, %v2796
  %v2872 = vadd.f32 %v2591, %v2843
  %v2873 = vadd.f32 %v2547, %v2799
  %v2874 = vadd.f32 %v2594, %v2846
  %v2875 = vadd.f32 %v2550, %v2802
  %v2876 = vadd.f32 %v2597, %v2849
  %v2877 = vadd.f32 %v2553, %v2805
  %v2878 = vadd.f32 %v2600, %v2852
  %v2879 = vadd.f32 %v2556, %v2808
  %v2880 = vadd.f32 %v2603, %v2855
  %v2881 = vadd.f32 %v2559, %v2811
  %v2882 = vadd.f32 %v2606, %v2858
  %v2883 = vadd.f32 %v2562, %v2814
  %v2884 = vadd.f32 %v2609, %v2861
  %v2885 = vadd.f32 %v2565, %v2817
  %v2886 = vadd.f32 %v2612, %v2864
  %v2887 = vadd.f32 %v2568, %v2820
  %v2888 = vadd.f32 %v2615, %v2867
  %s2889 = scalar_lea.vmem %s4, 704
  %v2890 = vld [vmem:[%s2889] sm:$0xff]
  %v2891 = vld [vmem:[%s2889 + $0x8] sm:$0xff]
  %v2892 = vld [vmem:[%s2889 + $0x10] sm:$0xff]
  %v2893 = vld [vmem:[%s2889 + $0x18] sm:$0xff]
  %v2894 = vld [vmem:[%s2889 + $0x20] sm:$0xff]
  %v2895 = vld [vmem:[%s2889 + $0x28] sm:$0xff]
  %v2896 = vld [vmem:[%s2889 + $0x30] sm:$0xff]
  %v2897 = vld [vmem:[%s2889 + $0x38] sm:$0xff]
  %v2898 = vld [vmem:[%s2889 + $0x40] sm:$0xff]
  %v2899 = vld [vmem:[%s2889 + $0x48] sm:$0xff]
  %v2900 = vld [vmem:[%s2889 + $0x50] sm:$0xff]
  %v2901 = vld [vmem:[%s2889 + $0x58] sm:$0xff]
  %v2902 = vld [vmem:[%s2889 + $0x60] sm:$0xff]
  %v2903 = vld [vmem:[%s2889 + $0x68] sm:$0xff]
  %v2904 = vld [vmem:[%s2889 + $0x70] sm:$0xff]
  %v2905 = vld [vmem:[%s2889 + $0x78] sm:$0xff]
  %v2906 = vld [vmem:[%s2889 + $0x80] sm:$0xff]
  %v2907 = vld [vmem:[%s2889 + $0x88] sm:$0xff]
  %v2908 = vld [vmem:[%s2889 + $0x90] sm:$0xff]
  %v2909 = vld [vmem:[%s2889 + $0x98] sm:$0xff]
  %v2910 = vld [vmem:[%s2889 + $0xa0] sm:$0xf]
  %v2911 = vld [vmem:[%s2889 + $0xa8] sm:$0xf]
  %v2913 = vsel %vm2382, %v2336, 0
  %v2916 = vsel %vm2413, %v2910, 0
  %v2919 = vsel %vm2413, %v2911, 0
  %2921 = vmatpush.msra.mxu0 0.0
  %2922 = vmatpush.msra.mxu0 0.0
  %2923 = vmatpush.msra.mxu0 0.0
  %2924 = vmatpush.msra.mxu0 0.0
  %2925 = vmatpush.msra.mxu0 0.0
  %2926 = vmatpush.msra.mxu0 %v2916
  %2927 = vmatpush.msra.mxu0 %v2908
  %2928 = vmatpush.msra.mxu0 %v2906
  %2929 = vmatpush.msra.mxu0 %v2904
  %2930 = vmatpush.msra.mxu0 %v2902
  %2931 = vmatpush.msra.mxu0 %v2900
  %2932 = vmatpush.msra.mxu0 %v2898
  %2933 = vmatpush.msra.mxu0 %v2896
  %2934 = vmatpush.msra.mxu0 %v2894
  %2935 = vmatpush.msra.mxu0 %v2892
  %2936 = vmatpush.msra.mxu0 %v2890
  %2937 = vmatmul.f32.gmra.mxu0 %v2393
  %v2938 = vpop.f32.mrf.mxu0
  %v2939 = vadd.f32 0.0, %v2938
  %2940 = vmatmul.f32.gmra.mxu0 %v2396
  %v2941 = vpop.f32.mrf.mxu0
  %v2942 = vadd.f32 0.0, %v2941
  %2943 = vmatmul.f32.gmra.mxu0 %v2399
  %v2944 = vpop.f32.mrf.mxu0
  %v2945 = vadd.f32 0.0, %v2944
  %2946 = vmatmul.f32.gmra.mxu0 %v2402
  %v2947 = vpop.f32.mrf.mxu0
  %v2948 = vadd.f32 0.0, %v2947
  %2949 = vmatmul.f32.gmra.mxu0 %v2405
  %v2950 = vpop.f32.mrf.mxu0
  %v2951 = vadd.f32 0.0, %v2950
  %2952 = vmatmul.f32.gmra.mxu0 %v2408
  %v2953 = vpop.f32.mrf.mxu0
  %v2954 = vadd.f32 0.0, %v2953
  %2955 = vmatmul.f32.gmra.mxu0 %v2411
  %v2956 = vpop.f32.mrf.mxu0
  %v2957 = vadd.f32 0.0, %v2956
  %2958 = vmatmul.f32.gmra.mxu0 %v2664
  %v2959 = vpop.f32.mrf.mxu0
  %v2960 = vadd.f32 0.0, %v2959
  %2961 = vmatmul.f32.gmra.mxu0 %v2667
  %v2962 = vpop.f32.mrf.mxu0
  %v2963 = vadd.f32 0.0, %v2962
  %2964 = vmatmul.f32.gmra.mxu0 %v2913
  %v2965 = vpop.f32.mrf.mxu0
  %v2966 = vadd.f32 0.0, %v2965
  %2967 = vdwg.mxu0
  %2968 = vmatpush.msra.mxu0 0.0
  %2969 = vmatpush.msra.mxu0 0.0
  %2970 = vmatpush.msra.mxu0 0.0
  %2971 = vmatpush.msra.mxu0 0.0
  %2972 = vmatpush.msra.mxu0 0.0
  %2973 = vmatpush.msra.mxu0 %v2919
  %2974 = vmatpush.msra.mxu0 %v2909
  %2975 = vmatpush.msra.mxu0 %v2907
  %2976 = vmatpush.msra.mxu0 %v2905
  %2977 = vmatpush.msra.mxu0 %v2903
  %2978 = vmatpush.msra.mxu0 %v2901
  %2979 = vmatpush.msra.mxu0 %v2899
  %2980 = vmatpush.msra.mxu0 %v2897
  %2981 = vmatpush.msra.mxu0 %v2895
  %2982 = vmatpush.msra.mxu0 %v2893
  %2983 = vmatpush.msra.mxu0 %v2891
  %2984 = vmatmul.f32.gmra.mxu0 %v2393
  %v2985 = vpop.f32.mrf.mxu0
  %v2986 = vadd.f32 0.0, %v2985
  %2987 = vmatmul.f32.gmra.mxu0 %v2396
  %v2988 = vpop.f32.mrf.mxu0
  %v2989 = vadd.f32 0.0, %v2988
  %2990 = vmatmul.f32.gmra.mxu0 %v2399
  %v2991 = vpop.f32.mrf.mxu0
  %v2992 = vadd.f32 0.0, %v2991
  %2993 = vmatmul.f32.gmra.mxu0 %v2402
  %v2994 = vpop.f32.mrf.mxu0
  %v2995 = vadd.f32 0.0, %v2994
  %2996 = vmatmul.f32.gmra.mxu0 %v2405
  %v2997 = vpop.f32.mrf.mxu0
  %v2998 = vadd.f32 0.0, %v2997
  %2999 = vmatmul.f32.gmra.mxu0 %v2408
  %v3000 = vpop.f32.mrf.mxu0
  %v3001 = vadd.f32 0.0, %v3000
  %3002 = vmatmul.f32.gmra.mxu0 %v2411
  %v3003 = vpop.f32.mrf.mxu0
  %v3004 = vadd.f32 0.0, %v3003
  %3005 = vmatmul.f32.gmra.mxu0 %v2664
  %v3006 = vpop.f32.mrf.mxu0
  %v3007 = vadd.f32 0.0, %v3006
  %3008 = vmatmul.f32.gmra.mxu0 %v2667
  %v3009 = vpop.f32.mrf.mxu0
  %v3010 = vadd.f32 0.0, %v3009
  %3011 = vmatmul.f32.gmra.mxu0 %v2913
  %v3012 = vpop.f32.mrf.mxu0
  %v3013 = vadd.f32 0.0, %v3012
  %3014 = vdwg.mxu0
  %v3015 = vadd.f32 %v2869, %v2939
  %v3016 = vadd.f32 %v2870, %v2986
  %v3017 = vadd.f32 %v2871, %v2942
  %v3018 = vadd.f32 %v2872, %v2989
  %v3019 = vadd.f32 %v2873, %v2945
  %v3020 = vadd.f32 %v2874, %v2992
  %v3021 = vadd.f32 %v2875, %v2948
  %v3022 = vadd.f32 %v2876, %v2995
  %v3023 = vadd.f32 %v2877, %v2951
  %v3024 = vadd.f32 %v2878, %v2998
  %v3025 = vadd.f32 %v2879, %v2954
  %v3026 = vadd.f32 %v2880, %v3001
  %v3027 = vadd.f32 %v2881, %v2957
  %v3028 = vadd.f32 %v2882, %v3004
  %v3029 = vadd.f32 %v2883, %v2960
  %v3030 = vadd.f32 %v2884, %v3007
  %v3031 = vadd.f32 %v2885, %v2963
  %v3032 = vadd.f32 %v2886, %v3010
  %v3033 = vadd.f32 %v2887, %v2966
  %v3034 = vadd.f32 %v2888, %v3013
  %v3035 = vld [vmem:[%s5] sm:$0x3]
  %v3037 = vperm.slane %v3035, 0
  %v3038 = vperm.slane %v3035, 1
  %v3041 = vadd.f32 %v3015, %v3037
  %v3042 = vadd.f32 %v3016, %v3038
  %v3043 = vadd.f32 %v3017, %v3037
  %v3044 = vadd.f32 %v3018, %v3038
  %v3045 = vadd.f32 %v3019, %v3037
  %v3046 = vadd.f32 %v3020, %v3038
  %v3047 = vadd.f32 %v3021, %v3037
  %v3048 = vadd.f32 %v3022, %v3038
  %v3049 = vadd.f32 %v3023, %v3037
  %v3050 = vadd.f32 %v3024, %v3038
  %v3051 = vadd.f32 %v3025, %v3037
  %v3052 = vadd.f32 %v3026, %v3038
  %v3053 = vadd.f32 %v3027, %v3037
  %v3054 = vadd.f32 %v3028, %v3038
  %v3055 = vadd.f32 %v3029, %v3037
  %v3056 = vadd.f32 %v3030, %v3038
  %v3057 = vadd.f32 %v3031, %v3037
  %v3058 = vadd.f32 %v3032, %v3038
  %v3059 = vadd.f32 %v3033, %v3037
  %v3060 = vadd.f32 %v3034, %v3038
  %v3061 = vmax.f32 %v3041, 0.0
  %v3062 = vmax.f32 %v3042, 0.0
  %v3063 = vmax.f32 %v3043, 0.0
  %v3064 = vmax.f32 %v3044, 0.0
  %v3065 = vmax.f32 %v3045, 0.0
  %v3066 = vmax.f32 %v3046, 0.0
  %v3067 = vmax.f32 %v3047, 0.0
  %v3068 = vmax.f32 %v3048, 0.0
  %v3069 = vmax.f32 %v3049, 0.0
  %v3070 = vmax.f32 %v3050, 0.0
  %v3071 = vmax.f32 %v3051, 0.0
  %v3072 = vmax.f32 %v3052, 0.0
  %v3073 = vmax.f32 %v3053, 0.0
  %v3074 = vmax.f32 %v3054, 0.0
  %v3075 = vmax.f32 %v3055, 0.0
  %v3076 = vmax.f32 %v3056, 0.0
  %v3077 = vmax.f32 %v3057, 0.0
  %v3078 = vmax.f32 %v3058, 0.0
  %v3079 = vmax.f32 %v3059, 0.0
  %v3080 = vmax.f32 %v3060, 0.0
  %v3081 = vmax.f32 %v3061, %v3063
  %v3082 = vmax.f32 %v3062, %v3064
  %v3083 = vmax.f32 %v3065, %v3067
  %v3084 = vmax.f32 %v3066, %v3068
  %v3085 = vmax.f32 %v3069, %v3071
  %v3086 = vmax.f32 %v3070, %v3072
  %v3087 = vmax.f32 %v3073, %v3075
  %v3088 = vmax.f32 %v3074, %v3076
  %v3089 = vmax.f32 %v3077, %v3079
  %v3090 = vmax.f32 %v3078, %v3080
  %v3091 = vld [vmem:[%s6] sm:$0xff]
  %v3092 = vld [vmem:[%s6 + $0x8] sm:$0xff]
  %v3093 = vld [vmem:[%s6 + $0x10] sm:$0xff]
  %v3094 = vld [vmem:[%s6 + $0x18] sm:$0xff]
  %v3095 = vld [vmem:[%s6 + $0x20] sm:$0xff]
  %v3096 = vld [vmem:[%s6 + $0x28] sm:$0xff]
  %v3097 = vld [vmem:[%s6 + $0x30] sm:$0xff]
  %v3098 = vld [vmem:[%s6 + $0x38] sm:$0xff]
  %v3099 = vld [vmem:[%s6 + $0x40] sm:$0xff]
  %v3100 = vld [vmem:[%s6 + $0x48] sm:$0xff]
  %v3101 = vld [vmem:[%s6 + $0x50] sm:$0xff]
  %v3102 = vld [vmem:[%s6 + $0x58] sm:$0xff]
  %v3103 = vld [vmem:[%s6 + $0x60] sm:$0xff]
  %v3104 = vld [vmem:[%s6 + $0x68] sm:$0xff]
  %v3105 = vld [vmem:[%s6 + $0x70] sm:$0xff]
  %v3106 = vld [vmem:[%s6 + $0x78] sm:$0xff]
  %v3107 = vld [vmem:[%s6 + $0x80] sm:$0xff]
  %v3108 = vld [vmem:[%s6 + $0x88] sm:$0xff]
  %v3109 = vld [vmem:[%s6 + $0x90] sm:$0xff]
  %v3110 = vld [vmem:[%s6 + $0x98] sm:$0xff]
  %vm3111 = vcmask 261120
  %v3113 = vsel %vm3111, %v3082, 0
  %v3116 = vsel %vm3111, %v3084, 0
  %v3119 = vsel %vm3111, %v3086, 0
  %v3122 = vsel %vm3111, %v3088, 0
  %v3125 = vsel %vm3111, %v3090, 0
  %3127 = vmatpush.msra.mxu0 %v3106
  %3128 = vmatpush.msra.mxu0 %v3105
  %3129 = vmatpush.msra.mxu0 %v3104
  %3130 = vmatpush.msra.mxu0 %v3103
  %3131 = vmatpush.msra.mxu0 %v3102
  %3132 = vmatpush.msra.mxu0 %v3101
  %3133 = vmatpush.msra.mxu0 %v3100
  %3134 = vmatpush.msra.mxu0 %v3099
  %3135 = vmatpush.msra.mxu0 %v3098
  %3136 = vmatpush.msra.mxu0 %v3097
  %3137 = vmatpush.msra.mxu0 %v3096
  %3138 = vmatpush.msra.mxu0 %v3095
  %3139 = vmatpush.msra.mxu0 %v3094
  %3140 = vmatpush.msra.mxu0 %v3093
  %3141 = vmatpush.msra.mxu0 %v3092
  %3142 = vmatpush.msra.mxu0 %v3091
  %3143 = vmatmul.f32.gmra.mxu0 %v3081
  %v3144 = vpop.f32.mrf.mxu0
  %v3145 = vadd.f32 0.0, %v3144
  %3146 = vmatmul.f32.gmra.mxu0 %v3083
  %v3147 = vpop.f32.mrf.mxu0
  %v3148 = vadd.f32 0.0, %v3147
  %3149 = vmatmul.f32.gmra.mxu0 %v3085
  %v3150 = vpop.f32.mrf.mxu0
  %v3151 = vadd.f32 0.0, %v3150
  %3152 = vmatmul.f32.gmra.mxu0 %v3087
  %v3153 = vpop.f32.mrf.mxu0
  %v3154 = vadd.f32 0.0, %v3153
  %3155 = vmatmul.f32.gmra.mxu0 %v3089
  %v3156 = vpop.f32.mrf.mxu0
  %v3157 = vadd.f32 0.0, %v3156
  %3158 = vdwg.mxu0
  %3159 = vmatpush.msra.mxu0 0.0
  %3160 = vmatpush.msra.mxu0 0.0
  %3161 = vmatpush.msra.mxu0 0.0
  %3162 = vmatpush.msra.mxu0 0.0
  %3163 = vmatpush.msra.mxu0 0.0
  %3164 = vmatpush.msra.mxu0 0.0
  %3165 = vmatpush.msra.mxu0 0.0
  %3166 = vmatpush.msra.mxu0 0.0
  %3167 = vmatpush.msra.mxu0 0.0
  %3168 = vmatpush.msra.mxu0 0.0
  %3169 = vmatpush.msra.mxu0 0.0
  %3170 = vmatpush.msra.mxu0 0.0
  %3171 = vmatpush.msra.mxu0 %v3110
  %3172 = vmatpush.msra.mxu0 %v3109
  %3173 = vmatpush.msra.mxu0 %v3108
  %3174 = vmatpush.msra.mxu0 %v3107
  %3175 = vmatmul.f32.gmra.mxu0 %v3113
  %v3176 = vpop.f32.mrf.mxu0
  %v3177 = vadd.f32 %v3145, %v3176
  %3178 = vmatmul.f32.gmra.mxu0 %v3116
  %v3179 = vpop.f32.mrf.mxu0
  %v3180 = vadd.f32 %v3148, %v3179
  %3181 = vmatmul.f32.gmra.mxu0 %v3119
  %v3182 = vpop.f32.mrf.mxu0
  %v3183 = vadd.f32 %v3151, %v3182
  %3184 = vmatmul.f32.gmra.mxu0 %v3122
  %v3185 = vpop.f32.mrf.mxu0
  %v3186 = vadd.f32 %v3154, %v3185
  %3187 = vmatmul.f32.gmra.mxu0 %v3125
  %v3188 = vpop.f32.mrf.mxu0
  %v3189 = vadd.f32 %v3157, %v3188
  %3190 = vdwg.mxu0
  %s3191 = scalar_lea.vmem %s6, 160
  %v3192 = vld [vmem:[%s3191] sm:$0xff]
  %v3193 = vld [vmem:[%s3191 + $0x8] sm:$0xff]
  %v3194 = vld [vmem:[%s3191 + $0x10] sm:$0xff]
  %v3195 = vld [vmem:[%s3191 + $0x18] sm:$0xff]
  %v3196 = vld [vmem:[%s3191 + $0x20] sm:$0xff]
  %v3197 = vld [vmem:[%s3191 + $0x28] sm:$0xff]
  %v3198 = vld [vmem:[%s3191 + $0x30] sm:$0xff]
  %v3199 = vld [vmem:[%s3191 + $0x38] sm:$0xff]
  %v3200 = vld [vmem:[%s3191 + $0x40] sm:$0xff]
  %v3201 = vld [vmem:[%s3191 + $0x48] sm:$0xff]
  %v3202 = vld [vmem:[%s3191 + $0x50] sm:$0xff]
  %v3203 = vld [vmem:[%s3191 + $0x58] sm:$0xff]
  %v3204 = vld [vmem:[%s3191 + $0x60] sm:$0xff]
  %v3205 = vld [vmem:[%s3191 + $0x68] sm:$0xff]
  %v3206 = vld [vmem:[%s3191 + $0x70] sm:$0xff]
  %v3207 = vld [vmem:[%s3191 + $0x78] sm:$0xff]
  %v3208 = vld [vmem:[%s3191 + $0x80] sm:$0xff]
  %v3209 = vld [vmem:[%s3191 + $0x88] sm:$0xff]
  %v3210 = vld [vmem:[%s3191 + $0x90] sm:$0xff]
  %v3211 = vld [vmem:[%s3191 + $0x98] sm:$0xff]
  %3212 = vmatpush.msra.mxu0 %v3207
  %3213 = vmatpush.msra.mxu0 %v3206
  %3214 = vmatpush.msra.mxu0 %v3205
  %3215 = vmatpush.msra.mxu0 %v3204
  %3216 = vmatpush.msra.mxu0 %v3203
  %3217 = vmatpush.msra.mxu0 %v3202
  %3218 = vmatpush.msra.mxu0 %v3201
  %3219 = vmatpush.msra.mxu0 %v3200
  %3220 = vmatpush.msra.mxu0 %v3199
  %3221 = vmatpush.msra.mxu0 %v3198
  %3222 = vmatpush.msra.mxu0 %v3197
  %3223 = vmatpush.msra.mxu0 %v3196
  %3224 = vmatpush.msra.mxu0 %v3195
  %3225 = vmatpush.msra.mxu0 %v3194
  %3226 = vmatpush.msra.mxu0 %v3193
  %3227 = vmatpush.msra.mxu0 %v3192
  %3228 = vmatmul.f32.gmra.mxu0 %v3081
  %v3229 = vpop.f32.mrf.mxu0
  %v3230 = vadd.f32 0.0, %v3229
  %3231 = vmatmul.f32.gmra.mxu0 %v3083
  %v3232 = vpop.f32.mrf.mxu0
  %v3233 = vadd.f32 0.0, %v3232
  %3234 = vmatmul.f32.gmra.mxu0 %v3085
  %v3235 = vpop.f32.mrf.mxu0
  %v3236 = vadd.f32 0.0, %v3235
  %3237 = vmatmul.f32.gmra.mxu0 %v3087
  %v3238 = vpop.f32.mrf.mxu0
  %v3239 = vadd.f32 0.0, %v3238
  %3240 = vmatmul.f32.gmra.mxu0 %v3089
  %v3241 = vpop.f32.mrf.mxu0
  %v3242 = vadd.f32 0.0, %v3241
  %3243 = vdwg.mxu0
  %3244 = vmatpush.msra.mxu0 0.0
  %3245 = vmatpush.msra.mxu0 0.0
  %3246 = vmatpush.msra.mxu0 0.0
  %3247 = vmatpush.msra.mxu0 0.0
  %3248 = vmatpush.msra.mxu0 0.0
  %3249 = vmatpush.msra.mxu0 0.0
  %3250 = vmatpush.msra.mxu0 0.0
  %3251 = vmatpush.msra.mxu0 0.0
  %3252 = vmatpush.msra.mxu0 0.0
  %3253 = vmatpush.msra.mxu0 0.0
  %3254 = vmatpush.msra.mxu0 0.0
  %3255 = vmatpush.msra.mxu0 0.0
  %3256 = vmatpush.msra.mxu0 %v3211
  %3257 = vmatpush.msra.mxu0 %v3210
  %3258 = vmatpush.msra.mxu0 %v3209
  %3259 = vmatpush.msra.mxu0 %v3208
  %3260 = vmatmul.f32.gmra.mxu0 %v3113
  %v3261 = vpop.f32.mrf.mxu0
  %v3262 = vadd.f32 %v3230, %v3261
  %3263 = vmatmul.f32.gmra.mxu0 %v3116
  %v3264 = vpop.f32.mrf.mxu0
  %v3265 = vadd.f32 %v3233, %v3264
  %3266 = vmatmul.f32.gmra.mxu0 %v3119
  %v3267 = vpop.f32.mrf.mxu0
  %v3268 = vadd.f32 %v3236, %v3267
  %3269 = vmatmul.f32.gmra.mxu0 %v3122
  %v3270 = vpop.f32.mrf.mxu0
  %v3271 = vadd.f32 %v3239, %v3270
  %3272 = vmatmul.f32.gmra.mxu0 %v3125
  %v3273 = vpop.f32.mrf.mxu0
  %v3274 = vadd.f32 %v3242, %v3273
  %3275 = vdwg.mxu0
  %v3276 = vmax.f32 %v3177, %v3262
  %v3277 = vmax.f32 %v3180, %v3265
  %v3278 = vmax.f32 %v3183, %v3268
  %v3279 = vmax.f32 %v3186, %v3271
  %v3280 = vmax.f32 %v3189, %v3274
  %v3281 = vld [vmem:[%s7] sm:$0xff]
  %v3282 = vld [vmem:[%s7 + $0x8] sm:$0xff]
  %v3283 = vld [vmem:[%s7 + $0x10] sm:$0xff]
  %v3284 = vld [vmem:[%s7 + $0x18] sm:$0xff]
  %v3285 = vld [vmem:[%s7 + $0x20] sm:$0xff]
  %v3286 = vld [vmem:[%s7 + $0x28] sm:$0xff]
  %v3287 = vld [vmem:[%s7 + $0x30] sm:$0xff]
  %v3288 = vld [vmem:[%s7 + $0x38] sm:$0xff]
  %v3289 = vld [vmem:[%s7 + $0x40] sm:$0xff]
  %v3290 = vld [vmem:[%s7 + $0x48] sm:$0xff]
  %s3291 = scalar_lea.vmem %s7, 80
  %v3292 = vld [vmem:[%s3291] sm:$0xff]
  %v3293 = vld [vmem:[%s3291 + $0x8] sm:$0xff]
  %v3294 = vld [vmem:[%s3291 + $0x10] sm:$0xff]
  %v3295 = vld [vmem:[%s3291 + $0x18] sm:$0xff]
  %v3296 = vld [vmem:[%s3291 + $0x20] sm:$0xff]
  %v3297 = vld [vmem:[%s3291 + $0x28] sm:$0xff]
  %v3298 = vld [vmem:[%s3291 + $0x30] sm:$0xff]
  %v3299 = vld [vmem:[%s3291 + $0x38] sm:$0xff]
  %v3300 = vld [vmem:[%s3291 + $0x40] sm:$0xff]
  %v3301 = vld [vmem:[%s3291 + $0x48] sm:$0xff]
  %vm3302 = vcmask 654336
  %v3304 = vsel %vm3302, %v3277, 0
  %3306 = vmatpush.msra.mxu0 0.0
  %3307 = vmatpush.msra.mxu0 0.0
  %3308 = vmatpush.msra.mxu0 0.0
  %3309 = vmatpush.msra.mxu0 0.0
  %3310 = vmatpush.msra.mxu0 0.0
  %3311 = vmatpush.msra.mxu0 0.0
  %3312 = vmatpush.msra.mxu0 %v3301
  %3313 = vmatpush.msra.mxu0 %v3300
  %3314 = vmatpush.msra.mxu0 %v3299
  %3315 = vmatpush.msra.mxu0 %v3298
  %3316 = vmatpush.msra.mxu0 %v3297
  %3317 = vmatpush.msra.mxu0 %v3296
  %3318 = vmatpush.msra.mxu0 %v3295
  %3319 = vmatpush.msra.mxu0 %v3294
  %3320 = vmatpush.msra.mxu0 %v3293
  %3321 = vmatpush.msra.mxu0 %v3292
  %3322 = vmatmul.f32.gmra.mxu0 %v3304
  %v3323 = vpop.f32.mrf.mxu0
  %v3324 = vadd.f32 0.0, %v3323
  %3325 = vdwg.mxu0
  %v3327 = vsel %vm3302, %v3276, 0
  %3329 = vmatpush.msra.mxu0 0.0
  %3330 = vmatpush.msra.mxu0 0.0
  %3331 = vmatpush.msra.mxu0 0.0
  %3332 = vmatpush.msra.mxu0 0.0
  %3333 = vmatpush.msra.mxu0 0.0
  %3334 = vmatpush.msra.mxu0 0.0
  %3335 = vmatpush.msra.mxu0 %v3290
  %3336 = vmatpush.msra.mxu0 %v3289
  %3337 = vmatpush.msra.mxu0 %v3288
  %3338 = vmatpush.msra.mxu0 %v3287
  %3339 = vmatpush.msra.mxu0 %v3286
  %3340 = vmatpush.msra.mxu0 %v3285
  %3341 = vmatpush.msra.mxu0 %v3284
  %3342 = vmatpush.msra.mxu0 %v3283
  %3343 = vmatpush.msra.mxu0 %v3282
  %3344 = vmatpush.msra.mxu0 %v3281
  %3345 = vmatmul.f32.gmra.mxu0 %v3327
  %v3346 = vpop.f32.mrf.mxu0
  %v3347 = vadd.f32 %v3324, %v3346
  %3348 = vdwg.mxu0
  %s3349 = scalar_lea.vmem %s7, 160
  %v3350 = vld [vmem:[%s3349] sm:$0xff]
  %v3351 = vld [vmem:[%s3349 + $0x8] sm:$0xff]
  %v3352 = vld [vmem:[%s3349 + $0x10] sm:$0xff]
  %v3353 = vld [vmem:[%s3349 + $0x18] sm:$0xff]
  %v3354 = vld [vmem:[%s3349 + $0x20] sm:$0xff]
  %v3355 = vld [vmem:[%s3349 + $0x28] sm:$0xff]
  %v3356 = vld [vmem:[%s3349 + $0x30] sm:$0xff]
  %v3357 = vld [vmem:[%s3349 + $0x38] sm:$0xff]
  %v3358 = vld [vmem:[%s3349 + $0x40] sm:$0xff]
  %v3359 = vld [vmem:[%s3349 + $0x48] sm:$0xff]
  %v3361 = vsel %vm3302, %v3278, 0
  %3363 = vmatpush.msra.mxu0 0.0
  %3364 = vmatpush.msra.mxu0 0.0
  %3365 = vmatpush.msra.mxu0 0.0
  %3366 = vmatpush.msra.mxu0 0.0
  %3367 = vmatpush.msra.mxu0 0.0
  %3368 = vmatpush.msra.mxu0 0.0
  %3369 = vmatpush.msra.mxu0 %v3359
  %3370 = vmatpush.msra.mxu0 %v3358
  %3371 = vmatpush.msra.mxu0 %v3357
  %3372 = vmatpush.msra.mxu0 %v3356
  %3373 = vmatpush.msra.mxu0 %v3355
  %3374 = vmatpush.msra.mxu0 %v3354
  %3375 = vmatpush.msra.mxu0 %v3353
  %3376 = vmatpush.msra.mxu0 %v3352
  %3377 = vmatpush.msra.mxu0 %v3351
  %3378 = vmatpush.msra.mxu0 %v3350
  %3379 = vmatmul.f32.gmra.mxu0 %v3361
  %v3380 = vpop.f32.mrf.mxu0
  %v3381 = vadd.f32 0.0, %v3380
  %3382 = vdwg.mxu0
  %v3383 = vadd.f32 %v3347, %v3381
  %s3384 = scalar_lea.vmem %s7, 240
  %v3385 = vld [vmem:[%s3384] sm:$0xff]
  %v3386 = vld [vmem:[%s3384 + $0x8] sm:$0xff]
  %v3387 = vld [vmem:[%s3384 + $0x10] sm:$0xff]
  %v3388 = vld [vmem:[%s3384 + $0x18] sm:$0xff]
  %v3389 = vld [vmem:[%s3384 + $0x20] sm:$0xff]
  %v3390 = vld [vmem:[%s3384 + $0x28] sm:$0xff]
  %v3391 = vld [vmem:[%s3384 + $0x30] sm:$0xff]
  %v3392 = vld [vmem:[%s3384 + $0x38] sm:$0xff]
  %v3393 = vld [vmem:[%s3384 + $0x40] sm:$0xff]
  %v3394 = vld [vmem:[%s3384 + $0x48] sm:$0xff]
  %v3396 = vsel %vm3302, %v3279, 0
  %3398 = vmatpush.msra.mxu0 0.0
  %3399 = vmatpush.msra.mxu0 0.0
  %3400 = vmatpush.msra.mxu0 0.0
  %3401 = vmatpush.msra.mxu0 0.0
  %3402 = vmatpush.msra.mxu0 0.0
  %3403 = vmatpush.msra.mxu0 0.0
  %3404 = vmatpush.msra.mxu0 %v3394
  %3405 = vmatpush.msra.mxu0 %v3393
  %3406 = vmatpush.msra.mxu0 %v3392
  %3407 = vmatpush.msra.mxu0 %v3391
  %3408 = vmatpush.msra.mxu0 %v3390
  %3409 = vmatpush.msra.mxu0 %v3389
  %3410 = vmatpush.msra.mxu0 %v3388
  %3411 = vmatpush.msra.mxu0 %v3387
  %3412 = vmatpush.msra.mxu0 %v3386
  %3413 = vmatpush.msra.mxu0 %v3385
  %3414 = vmatmul.f32.gmra.mxu0 %v3396
  %v3415 = vpop.f32.mrf.mxu0
  %v3416 = vadd.f32 0.0, %v3415
  %3417 = vdwg.mxu0
  %v3418 = vadd.f32 %v3383, %v3416
  %s3419 = scalar_lea.vmem %s7, 320
  %v3420 = vld [vmem:[%s3419] sm:$0xff]
  %v3421 = vld [vmem:[%s3419 + $0x8] sm:$0xff]
  %v3422 = vld [vmem:[%s3419 + $0x10] sm:$0xff]
  %v3423 = vld [vmem:[%s3419 + $0x18] sm:$0xff]
  %v3424 = vld [vmem:[%s3419 + $0x20] sm:$0xff]
  %v3425 = vld [vmem:[%s3419 + $0x28] sm:$0xff]
  %v3426 = vld [vmem:[%s3419 + $0x30] sm:$0xff]
  %v3427 = vld [vmem:[%s3419 + $0x38] sm:$0xff]
  %v3428 = vld [vmem:[%s3419 + $0x40] sm:$0xff]
  %v3429 = vld [vmem:[%s3419 + $0x48] sm:$0xff]
  %v3431 = vsel %vm3302, %v3280, 0
  %3433 = vmatpush.msra.mxu0 0.0
  %3434 = vmatpush.msra.mxu0 0.0
  %3435 = vmatpush.msra.mxu0 0.0
  %3436 = vmatpush.msra.mxu0 0.0
  %3437 = vmatpush.msra.mxu0 0.0
  %3438 = vmatpush.msra.mxu0 0.0
  %3439 = vmatpush.msra.mxu0 %v3429
  %3440 = vmatpush.msra.mxu0 %v3428
  %3441 = vmatpush.msra.mxu0 %v3427
  %3442 = vmatpush.msra.mxu0 %v3426
  %3443 = vmatpush.msra.mxu0 %v3425
  %3444 = vmatpush.msra.mxu0 %v3424
  %3445 = vmatpush.msra.mxu0 %v3423
  %3446 = vmatpush.msra.mxu0 %v3422
  %3447 = vmatpush.msra.mxu0 %v3421
  %3448 = vmatpush.msra.mxu0 %v3420
  %3449 = vmatmul.f32.gmra.mxu0 %v3431
  %v3450 = vpop.f32.mrf.mxu0
  %v3451 = vadd.f32 0.0, %v3450
  %3452 = vdwg.mxu0
  %v3453 = vadd.f32 %v3418, %v3451
  %v3454 = vld [vmem:[%s8] sm:$0x1]
  %v3456 = vperm.slane %v3454, 0
  %v3458 = vadd.f32 %v3453, %v3456
  %v3459 = vmax.f32 %v3458, 0.0
  %v3460 = vld [vmem:[%s9] sm:$0xff]
  %v3461 = vld [vmem:[%s9 + $0x8] sm:$0xff]
  %v3462 = vld [vmem:[%s9 + $0x10] sm:$0xff]
  %v3463 = vld [vmem:[%s9 + $0x18] sm:$0xff]
  %v3464 = vld [vmem:[%s9 + $0x20] sm:$0xff]
  %v3465 = vld [vmem:[%s9 + $0x28] sm:$0xff]
  %v3466 = vld [vmem:[%s9 + $0x30] sm:$0xff]
  %v3467 = vld [vmem:[%s9 + $0x38] sm:$0xff]
  %v3468 = vld [vmem:[%s9 + $0x40] sm:$0xff]
  %v3469 = vld [vmem:[%s9 + $0x48] sm:$0xff]
  %v3470 = vld [vmem:[%s9 + $0x50] sm:$0xff]
  %v3471 = vld [vmem:[%s9 + $0x58] sm:$0xff]
  %v3472 = vld [vmem:[%s9 + $0x60] sm:$0xff]
  %v3473 = vld [vmem:[%s9 + $0x68] sm:$0xff]
  %v3474 = vld [vmem:[%s9 + $0x70] sm:$0xff]
  %v3475 = vld [vmem:[%s10] sm:$0x1]
  %v3477 = vperm.slane %v3475, 0
  %vm3479 = vcmask 982016
  %v3481 = vsel %vm3479, %v3459, 0
  %3483 = vmatpush.msra.mxu0 0.0
  %3484 = vmatpush.msra.mxu0 %v3474
  %3485 = vmatpush.msra.mxu0 %v3473
  %3486 = vmatpush.msra.mxu0 %v3472
  %3487 = vmatpush.msra.mxu0 %v3471
  %3488 = vmatpush.msra.mxu0 %v3470
  %3489 = vmatpush.msra.mxu0 %v3469
  %3490 = vmatpush.msra.mxu0 %v3468
  %3491 = vmatpush.msra.mxu0 %v3467
  %3492 = vmatpush.msra.mxu0 %v3466
  %3493 = vmatpush.msra.mxu0 %v3465
  %3494 = vmatpush.msra.mxu0 %v3464
  %3495 = vmatpush.msra.mxu0 %v3463
  %3496 = vmatpush.msra.mxu0 %v3462
  %3497 = vmatpush.msra.mxu0 %v3461
  %3498 = vmatpush.msra.mxu0 %v3460
  %3499 = vmatmul.f32.gmra.mxu0 %v3481
  %v3500 = vpop.f32.mrf.mxu0
  %v3501 = vadd.f32 %v3477, %v3500
  %3502 = vdwg.mxu0
  %v3503 = vmax.f32 %v3501, 0.0
  %v3504 = vld [vmem:[%s11] sm:$0xff]
  %v3505 = vld [vmem:[%s11 + $0x8] sm:$0xff]
  %v3506 = vld [vmem:[%s11 + $0x10] sm:$0xff]
  %v3507 = vld [vmem:[%s11 + $0x18] sm:$0xff]
  %v3508 = vld [vmem:[%s11 + $0x20] sm:$0xff]
  %v3509 = vld [vmem:[%s11 + $0x28] sm:$0xff]
  %v3510 = vld [vmem:[%s11 + $0x30] sm:$0xff]
  %v3511 = vld [vmem:[%s11 + $0x38] sm:$0xff]
  %v3512 = vld [vmem:[%s11 + $0x40] sm:$0xff]
  %v3513 = vld [vmem:[%s11 + $0x48] sm:$0xff]
  %v3514 = vld [vmem:[%s11 + $0x50] sm:$0xf]
  %v3515 = vld [vmem:[%s12] sm:$0x1]
  %v3517 = vperm.slane %v3515, 0
  %v3520 = vsel %vm2382, %v3503, 0
  %v3523 = vsel %vm2413, %v3514, 0
  %3525 = vmatpush.msra.mxu0 0.0
  %3526 = vmatpush.msra.mxu0 0.0
  %3527 = vmatpush.msra.mxu0 0.0
  %3528 = vmatpush.msra.mxu0 0.0
  %3529 = vmatpush.msra.mxu0 0.0
  %3530 = vmatpush.msra.mxu0 %v3523
  %3531 = vmatpush.msra.mxu0 %v3513
  %3532 = vmatpush.msra.mxu0 %v3512
  %3533 = vmatpush.msra.mxu0 %v3511
  %3534 = vmatpush.msra.mxu0 %v3510
  %3535 = vmatpush.msra.mxu0 %v3509
  %3536 = vmatpush.msra.mxu0 %v3508
  %3537 = vmatpush.msra.mxu0 %v3507
  %3538 = vmatpush.msra.mxu0 %v3506
  %3539 = vmatpush.msra.mxu0 %v3505
  %3540 = vmatpush.msra.mxu0 %v3504
  %3541 = vmatmul.f32.gmra.mxu0 %v3520
  %v3542 = vpop.f32.mrf.mxu0
  %v3543 = vadd.f32 %v3517, %v3542
  %3544 = vdwg.mxu0
  %3545 = vst [vmem:[%s13] sm:$0xff] %v3543
  // Predicated region
  $region54: #{net_forward.1} parent=0 // pred_check
    _
  $region55: #{net_forward.1} parent=0 // pred_check_branch
    %3547 = sbr.rel (0) target = $region57
  $region56: #{net_forward.1} parent=0 // pred_region
    _
  $region57: #{net_forward.1} parent=0 // pred_fallthru
    _
  // Predicated region
  $region58: #{net_forward.1} parent=0 // pred_check
    _
  $region59: #{net_forward.1} parent=0 // pred_check_branch
    %3549 = sbr.rel (0) target = $region61
  $region60: #{net_forward.1} parent=0 // pred_region
    _
  $region61: #{net_forward.1} parent=0 // pred_fallthru
    _

</llo_original>
